<compile_context>
chip_gen: v5e
topology: v5e:2x2
jax: 0.10.0
libtpu: 0.0.40
codegen_flags: <defaults>
</compile_context>

<pallas_src>
import jax
import jax.numpy as jnp
from jax import lax
from jax.experimental import pallas as pl
from jax.experimental.pallas import tpu as pltpu


# ----------------------------- wrapper + kernel ----------------------------------


def simple_lstm_classifier_sparse_attention(x, params, *, block_b=16,
                                            matmul_dtype=jnp.float32):
    B, T, D = x.shape
    H = params["Wc"].shape[0]
    KC = params["Wfc_all"].shape[0]
    num_keys = params["num_keys"]
    C = KC // num_keys

    # --- batch blocking: Bb samples per grid step, Bb a multiple of 8 -------------
    Bb = max(8, ((int(block_b) + 7) // 8) * 8)
    G = -(-B // Bb)                       # number of grid steps
    B_pad = G * Bb
    if B_pad != B:
        x = jnp.concatenate([x, jnp.zeros((B_pad - B, T, D), x.dtype)], axis=0)

    # time-major row order inside each batch block: row = g*(T*Bb) + t*Bb + b
    x_tm = (x.reshape(G, Bb, T, D).transpose(0, 2, 1, 3)
             .reshape(G * T * Bb, D).astype(matmul_dtype))

    # --- lane-dense classifier: pad stacked heads to a multiple of 128 ------------
    KCp = ((KC + 127) // 128) * 128
    Wfc = params["Wfc_all"].T             # (H, KC)
    bfc = params["bfc_all"]
    if KCp != KC:
        Wfc = jnp.pad(Wfc, ((0, 0), (0, KCp - KC)))
        bfc = jnp.pad(bfc, (0, KCp - KC))

    md = matmul_dtype
    f32_ = jnp.float32
    inputs = (
        x_tm,
        params["Wc"].T.astype(md), params["bc"][None, :].astype(f32_),
        params["Wres"].T.astype(md), params["bres"][None, :].astype(f32_),
        params["Wih0"].T.astype(md), params["Whh0"].T.astype(md),
        (params["bih0"] + params["bhh0"])[None, :].astype(f32_),
        params["Wih1"].T.astype(md), params["Whh1"].T.astype(md),
        (params["bih1"] + params["bhh1"])[None, :].astype(f32_),
        Wfc.astype(md), bfc[None, :].astype(f32_),
    )

    # ----------------------------- kernel body ------------------------------------
    def kernel(x_ref, wc_ref, bc_ref, wres_ref, bres_ref,
               wih0_ref, whh0_ref, b0_ref,
               wih1_ref, whh1_ref, b1_ref,
               wfc_ref, bfc_ref, o_ref):
        f32 = jnp.float32
        cdt = wc_ref.dtype                       # MXU operand dtype (f32 or bf16)

        x_blk = x_ref[...]                       # (T*Bb, D), time-major rows

        # ---- compression_fc + ReLU: batch*time folded into the matmul M dim ----
        xh = jnp.maximum(
            jnp.dot(x_blk, wc_ref[...], preferred_element_type=f32) + bc_ref[...],
            0.0)                                  # (T*Bb, H), f32

        # ---- LSTM layer-0 input projection for all (t, b) at once ----
        gx0 = (jnp.dot(xh.astype(cdt), wih0_ref[...], preferred_element_type=f32)
               + b0_ref[...])                     # (T*Bb, 4H)
        gx0 = gx0.reshape(T, Bb, 4 * H)           # leading split; tile-aligned (Bb % 8 == 0)

        whh0 = whh0_ref[...]
        wih1 = wih1_ref[...]
        whh1 = whh1_ref[...]
        b1 = b1_ref[...]

        # NOTE: with H=32 the four gate slices are 32-lane sub-slices of one vreg; fine
        # unless profiling shows VALU/select pressure (then split per-gate weights).
        def cell(g, c):                           # PyTorch gate order (i, f, g, o)
            i_g = jax.nn.sigmoid(g[:, 0:H])
            f_g = jax.nn.sigmoid(g[:, H:2 * H])
            g_g = jnp.tanh(g[:, 2 * H:3 * H])
            o_g = jax.nn.sigmoid(g[:, 3 * H:4 * H])
            c = f_g * c + i_g * g_g
            return o_g * jnp.tanh(c), c

        h0 = jnp.zeros((Bb, H), f32); c0 = jnp.zeros((Bb, H), f32)
        h1 = jnp.zeros((Bb, H), f32); c1 = jnp.zeros((Bb, H), f32)
        outs = []
        # Fully unrolled (T small & static); both layers share the loop body so the
        # scheduler can overlap layer-1 step t with layer-0 step t+1.
        for t in range(T):
            h0, c0 = cell(gx0[t] + jnp.dot(h0.astype(cdt), whh0,
                                           preferred_element_type=f32), c0)
            g1 = (jnp.dot(h0.astype(cdt), wih1, preferred_element_type=f32) + b1
                  + jnp.dot(h1.astype(cdt), whh1, preferred_element_type=f32))
            h1, c1 = cell(g1, c1)
            outs.append(h1)
        lstm_out = jnp.stack(outs, axis=0)        # (T, Bb, H), values only (no scratch)

        # ---- sparsemax self-attention, vectorized over the whole batch block ----
        # logits[t, b, s] = <lstm_out[t, b, :], lstm_out[s, b, :]>, built with
        # broadcasts + lane reductions (per-sample matrices are tiny TxT; avoids
        # batched dot_general / in-kernel transposes in the time-major layout).
        K = T
        col_idx = lax.broadcasted_iota(jnp.int32, (T, Bb, K), 2)
        logits = jnp.zeros((T, Bb, K), f32)
        for s in range(K):
            col = jnp.sum(lstm_out * lstm_out[s][None, :, :], axis=-1, keepdims=True)
            logits = logits + jnp.where(col_idx == s, col, 0.0)

        # Descending sort + cumsum emulated with iterative max-selection (lax.sort has
        # no Mosaic lowering); one (T, Bb, K) lane-reduction per step covers the block.
        remaining = logits
        cum = jnp.zeros((T, Bb, 1), f32)
        rho = jnp.zeros((T, Bb, 1), f32)
        cum_at_rho = jnp.zeros((T, Bb, 1), f32)
        for j in range(1, K + 1):
            m = jnp.max(remaining, axis=-1, keepdims=True)   # j-th largest per row
            cum = cum + m                                     # running cumsum of sorted values
            cond = (m - (cum - 1.0) / f32(j)) > 0.0           # sparsemax support test
            rho = rho + cond.astype(f32)
            cum_at_rho = jnp.where(cond, cum, cum_at_rho)
            if j < K:
                is_max = remaining == m
                # Remove only the FIRST occurrence of the max (stable-sort tie-break;
                # numerically equivalent for the cumsum). Sentinel -1e30 is safe for
                # these dot-product logits.
                first = jnp.min(jnp.where(is_max, col_idx, K), axis=-1, keepdims=True)
                remaining = jnp.where(col_idx == first, f32(-1e30), remaining)

        # Reference module computes tau = (cumsum@rho - 1 - 1)/rho (subtracts 1 twice);
        # reproduced exactly -- intentionally NOT textbook sparsemax.
        tau = (cum_at_rho - 2.0) / rho
        w = jnp.maximum(logits - tau, 0.0)
        # F.normalize(p=1, dim=2)
        w = w / jnp.maximum(jnp.sum(w, axis=-1, keepdims=True), f32(1e-12))

        # context[t, b, :] = sum_s w[t, b, s] * lstm_out[s, b, :]
        context = jnp.zeros((T, Bb, H), f32)
        for s in range(K):
            context = context + w[:, :, s:s + 1] * lstm_out[s][None, :, :]
        context = context.reshape(T * Bb, H)      # leading collapse; tile-aligned

        # residual_fc on the compressed input, then all classifier heads at once
        context = context + (jnp.dot(xh.astype(cdt), wres_ref[...],
                                     preferred_element_type=f32) + bres_ref[...])
        o_ref[...] = (jnp.dot(context.astype(cdt), wfc_ref[...],
                              preferred_element_type=f32) + bfc_ref[...])

    # ----------------------------- pallas_call ------------------------------------
    def rep(a):  # weight replicated across the batch grid (full-array block)
        return pl.BlockSpec(a.shape, lambda g: (0, 0))

    in_specs = ([pl.BlockSpec((T * Bb, D), lambda g: (g, 0))]
                + [rep(a) for a in inputs[1:]])

    out = pl.pallas_call(
        kernel,
        out_shape=jax.ShapeDtypeStruct((G * T * Bb, KCp), jnp.float32),
        grid_spec=pltpu.PrefetchScalarGridSpec(
            num_scalar_prefetch=0,
            grid=(G,),
            in_specs=in_specs,
            out_specs=pl.BlockSpec((T * Bb, KCp), lambda g: (g, 0)),
        ),
        compiler_params=pltpu.CompilerParams(dimension_semantics=("parallel",)),
    )(*inputs)

    # undo time-major block layout, drop batch pad and lane pad
    out = (out.reshape(G, T, Bb, KCp).transpose(0, 2, 1, 3)
              .reshape(B_pad, T, KCp)[:B, :, :KC])
    # (B, T, num_keys*C) -> (num_keys, B, T, C)  == torch.cat of unsqueezed heads
    return jnp.transpose(out.reshape(B, T, num_keys, C), (2, 0, 1, 3))


# ----------------------------- parameters & pure-JAX reference --------------------


def init_params(key, input_dim, hidden_dim, num_classes, num_keys):
    H = hidden_dim
    ks = jax.random.split(key, 12 + 2 * num_keys)

    def u(k, shape, fan_in):
        bound = 1.0 / jnp.sqrt(jnp.float32(fan_in))
        return jax.random.uniform(k, shape, jnp.float32, -bound, bound)

    p = {
        "Wc": u(ks[0], (H, input_dim), input_dim), "bc": u(ks[1], (H,), input_dim),
        "Wres": u(ks[2], (H, H), H), "bres": u(ks[3], (H,), H),
        "Wih0": u(ks[4], (4 * H, H), H), "Whh0": u(ks[5], (4 * H, H), H),
        "bih0": u(ks[6], (4 * H,), H), "bhh0": u(ks[7], (4 * H,), H),
        "Wih1": u(ks[8], (4 * H, H), H), "Whh1": u(ks[9], (4 * H, H), H),
        "bih1": u(ks[10], (4 * H,), H), "bhh1": u(ks[11], (4 * H,), H),
    }
    Wfcs = [u(ks[12 + i], (num_classes, H), H) for i in range(num_keys)]
    bfcs = [u(ks[12 + num_keys + i], (num_classes,), H) for i in range(num_keys)]
    p["Wfc_all"] = jnp.concatenate(Wfcs, axis=0)     # (num_keys*C, H)
    p["bfc_all"] = jnp.concatenate(bfcs, axis=0)     # (num_keys*C,)
    p["num_keys"] = num_keys
    return p


def _sparsemax_ref(z):
    K = z.shape[-1]
    s = jnp.flip(jnp.sort(z, axis=-1), axis=-1)
    cum = jnp.cumsum(s, axis=-1) - 1.0
    rng = jnp.arange(1, K + 1, dtype=z.dtype)
    valid = (s - cum / rng) > 0
    rho = jnp.sum(valid, axis=-1, keepdims=True)
    cum_rho = jnp.take_along_axis(cum, rho - 1, axis=-1)
    tau = (cum_rho - 1.0) / rho.astype(z.dtype)
    return jnp.maximum(z - tau, 0.0)


def forward_ref(x, p):
    H = p["Wc"].shape[0]
    xh = jax.nn.relu(x @ p["Wc"].T + p["bc"])

    def lstm_layer(inp, Wih, Whh, bih, bhh):
        B, T, _ = inp.shape
        h = jnp.zeros((B, H), jnp.float32)
        c = jnp.zeros((B, H), jnp.float32)
        outs = []
        for t in range(T):
            g = inp[:, t] @ Wih.T + bih + h @ Whh.T + bhh
            i, f, gg, o = jnp.split(g, 4, axis=-1)
            i, f, o = jax.nn.sigmoid(i), jax.nn.sigmoid(f), jax.nn.sigmoid(o)
            gg = jnp.tanh(gg)
            c = f * c + i * gg
            h = o * jnp.tanh(c)
            outs.append(h)
        return jnp.stack(outs, axis=1)

    l0 = lstm_layer(xh, p["Wih0"], p["Whh0"], p["bih0"], p["bhh0"])
    lstm_out = lstm_layer(l0, p["Wih1"], p["Whh1"], p["bih1"], p["bhh1"])
    logits = jnp.einsum("btd,bsd->bts", lstm_out, lstm_out)
    w = _sparsemax_ref(logits)
    w = w / jnp.maximum(jnp.sum(jnp.abs(w), axis=2, keepdims=True), 1e-12)
    context = jnp.einsum("bts,bsd->btd", w, lstm_out)
    context = context + xh @ p["Wres"].T + p["bres"]
    num_keys = p["num_keys"]
    C = p["Wfc_all"].shape[0] // num_keys
    outs = [context @ p["Wfc_all"][k * C:(k + 1) * C].T + p["bfc_all"][k * C:(k + 1) * C]
            for k in range(num_keys)]
    return jnp.stack(outs, axis=0)


# ----------------------------- main ------------------------------------------------


if __name__ == "__main__":
    B, T = 20, 8
    input_dim, hidden_dim, num_classes, num_keys = 16, 32, 16, 6

    key = jax.random.PRNGKey(0)
    kx, kp = jax.random.split(key)
    x = jax.random.normal(kx, (B, T, input_dim), jnp.float32)
    params = init_params(kp, input_dim, hidden_dim, num_classes, num_keys)

    # block_b=8 -> Bb=8, grid=(3,), exercises batch blocking, padding and the
    # parallel batch axis.  (matmul_dtype=jnp.bfloat16 is a drop-in on v6e/v7x.)
    out = simple_lstm_classifier_sparse_attention(x, params, block_b=8)
    out = jax.block_until_ready(out)

    ref = forward_ref(x, params)
    assert out.shape == (num_keys, B, T, num_classes), out.shape
    err = float(jnp.max(jnp.abs(out - ref)))
    assert jnp.allclose(out, ref, atol=2e-3, rtol=2e-3), err

    print("KERNEL_OK")
</pallas_src>

<mosaic_0001>
module attributes {stable_mosaic.version = 11 : i64} {
  func.func @kernel(%arg0: i32, %arg1: memref<64x16xf32, #tpu.memory_space<vmem>>, %arg2: memref<16x32xf32, #tpu.memory_space<vmem>>, %arg3: memref<1x32xf32, #tpu.memory_space<vmem>>, %arg4: memref<32x32xf32, #tpu.memory_space<vmem>>, %arg5: memref<1x32xf32, #tpu.memory_space<vmem>>, %arg6: memref<32x128xf32, #tpu.memory_space<vmem>>, %arg7: memref<32x128xf32, #tpu.memory_space<vmem>>, %arg8: memref<1x128xf32, #tpu.memory_space<vmem>>, %arg9: memref<32x128xf32, #tpu.memory_space<vmem>>, %arg10: memref<32x128xf32, #tpu.memory_space<vmem>>, %arg11: memref<1x128xf32, #tpu.memory_space<vmem>>, %arg12: memref<32x128xf32, #tpu.memory_space<vmem>>, %arg13: memref<1x128xf32, #tpu.memory_space<vmem>>, %arg14: memref<64x128xf32, #tpu.memory_space<vmem>>) attributes {dimension_semantics = [#tpu.dimension_semantics<parallel>], iteration_bounds = array<i64: 3>, scalar_prefetch = 0 : i64, scratch_operands = 0 : i64, tpu.core_type = #tpu.core_type<tc>, window_params = [{transform_indices = @transform_0, window_bounds = array<i64: 64, 16>}, {pipeline_mode = #tpu.pipeline_mode<synchronous>, transform_indices = @transform_1, window_bounds = array<i64: 16, 32>}, {pipeline_mode = #tpu.pipeline_mode<synchronous>, transform_indices = @transform_2, window_bounds = array<i64: 1, 32>}, {pipeline_mode = #tpu.pipeline_mode<synchronous>, transform_indices = @transform_3, window_bounds = array<i64: 32, 32>}, {pipeline_mode = #tpu.pipeline_mode<synchronous>, transform_indices = @transform_4, window_bounds = array<i64: 1, 32>}, {pipeline_mode = #tpu.pipeline_mode<synchronous>, transform_indices = @transform_5, window_bounds = array<i64: 32, 128>}, {pipeline_mode = #tpu.pipeline_mode<synchronous>, transform_indices = @transform_6, window_bounds = array<i64: 32, 128>}, {pipeline_mode = #tpu.pipeline_mode<synchronous>, transform_indices = @transform_7, window_bounds = array<i64: 1, 128>}, {pipeline_mode = #tpu.pipeline_mode<synchronous>, transform_indices = @transform_8, window_bounds = array<i64: 32, 128>}, {pipeline_mode = #tpu.pipeline_mode<synchronous>, transform_indices = @transform_9, window_bounds = array<i64: 32, 128>}, {pipeline_mode = #tpu.pipeline_mode<synchronous>, transform_indices = @transform_10, window_bounds = array<i64: 1, 128>}, {pipeline_mode = #tpu.pipeline_mode<synchronous>, transform_indices = @transform_11, window_bounds = array<i64: 32, 128>}, {pipeline_mode = #tpu.pipeline_mode<synchronous>, transform_indices = @transform_12, window_bounds = array<i64: 1, 128>}, {transform_indices = @transform_13, window_bounds = array<i64: 64, 128>}]} {
    %c0 = arith.constant 0 : index
    %c0_0 = arith.constant 0 : index
    %0 = vector.load %arg1[%c0, %c0_0] : memref<64x16xf32, #tpu.memory_space<vmem>>, vector<64x16xf32>
    %c0_1 = arith.constant 0 : index
    %c0_2 = arith.constant 0 : index
    %1 = vector.load %arg2[%c0_1, %c0_2] : memref<16x32xf32, #tpu.memory_space<vmem>>, vector<16x32xf32>
    %cst = arith.constant dense<0.000000e+00> : vector<64x32xf32>
    %2 = tpu.matmul %0, %1, %cst {dimension_numbers = #tpu.dot_dimension_numbers<[1], [0], [0], [1], [0, 0, 1, 1], [], []>} : vector<64x16xf32>, vector<16x32xf32>, vector<64x32xf32> -> vector<64x32xf32>
    %c0_3 = arith.constant 0 : index
    %c0_4 = arith.constant 0 : index
    %3 = vector.load %arg3[%c0_3, %c0_4] : memref<1x32xf32, #tpu.memory_space<vmem>>, vector<1x32xf32>
    %4 = vector.broadcast %3 : vector<1x32xf32> to vector<64x32xf32>
    %5 = arith.addf %2, %4 : vector<64x32xf32>
    %cst_5 = arith.constant 0.000000e+00 : f32
    %6 = vector.broadcast %cst_5 : f32 to vector<64x32xf32>
    %7 = arith.maximumf %5, %6 : vector<64x32xf32>
    %c0_6 = arith.constant 0 : index
    %c0_7 = arith.constant 0 : index
    %8 = vector.load %arg6[%c0_6, %c0_7] : memref<32x128xf32, #tpu.memory_space<vmem>>, vector<32x128xf32>
    %cst_8 = arith.constant dense<0.000000e+00> : vector<64x128xf32>
    %9 = tpu.matmul %7, %8, %cst_8 {dimension_numbers = #tpu.dot_dimension_numbers<[1], [0], [0], [1], [0, 0, 1, 1], [], []>} : vector<64x32xf32>, vector<32x128xf32>, vector<64x128xf32> -> vector<64x128xf32>
    %c0_9 = arith.constant 0 : index
    %c0_10 = arith.constant 0 : index
    %10 = vector.load %arg8[%c0_9, %c0_10] : memref<1x128xf32, #tpu.memory_space<vmem>>, vector<1x128xf32>
    %11 = vector.broadcast %10 : vector<1x128xf32> to vector<64x128xf32>
    %12 = arith.addf %9, %11 : vector<64x128xf32>
    %13 = vector.shape_cast %12 : vector<64x128xf32> to vector<8x8x128xf32>
    %c0_11 = arith.constant 0 : index
    %c0_12 = arith.constant 0 : index
    %14 = vector.load %arg7[%c0_11, %c0_12] : memref<32x128xf32, #tpu.memory_space<vmem>>, vector<32x128xf32>
    %c0_13 = arith.constant 0 : index
    %c0_14 = arith.constant 0 : index
    %15 = vector.load %arg9[%c0_13, %c0_14] : memref<32x128xf32, #tpu.memory_space<vmem>>, vector<32x128xf32>
    %c0_15 = arith.constant 0 : index
    %c0_16 = arith.constant 0 : index
    %16 = vector.load %arg10[%c0_15, %c0_16] : memref<32x128xf32, #tpu.memory_space<vmem>>, vector<32x128xf32>
    %c0_17 = arith.constant 0 : index
    %c0_18 = arith.constant 0 : index
    %17 = vector.load %arg11[%c0_17, %c0_18] : memref<1x128xf32, #tpu.memory_space<vmem>>, vector<1x128xf32>
    %cst_19 = arith.constant 0.000000e+00 : f32
    %18 = vector.broadcast %cst_19 : f32 to vector<8x32xf32>
    %cst_20 = arith.constant 0.000000e+00 : f32
    %19 = vector.broadcast %cst_20 : f32 to vector<8x32xf32>
    %cst_21 = arith.constant 0.000000e+00 : f32
    %20 = vector.broadcast %cst_21 : f32 to vector<8x32xf32>
    %cst_22 = arith.constant 0.000000e+00 : f32
    %21 = vector.broadcast %cst_22 : f32 to vector<8x32xf32>
    %22 = vector.extract_strided_slice %13 {offsets = [0, 0, 0], sizes = [1, 8, 128], strides = [1, 1, 1]} : vector<8x8x128xf32> to vector<1x8x128xf32>
    %23 = vector.shape_cast %22 : vector<1x8x128xf32> to vector<8x128xf32>
    %cst_23 = arith.constant dense<0.000000e+00> : vector<8x128xf32>
    %24 = tpu.matmul %18, %14, %cst_23 {dimension_numbers = #tpu.dot_dimension_numbers<[1], [0], [0], [1], [0, 0, 1, 1], [], []>} : vector<8x32xf32>, vector<32x128xf32>, vector<8x128xf32> -> vector<8x128xf32>
    %25 = arith.addf %23, %24 : vector<8x128xf32>
    %26 = vector.extract_strided_slice %25 {offsets = [0, 0], sizes = [8, 32], strides = [1, 1]} : vector<8x128xf32> to vector<8x32xf32>
    %27 = arith.negf %26 : vector<8x32xf32>
    %28 = math.exp %27 : vector<8x32xf32>
    %cst_24 = arith.constant 1.000000e+00 : f32
    %29 = vector.broadcast %cst_24 : f32 to vector<8x32xf32>
    %30 = arith.addf %29, %28 : vector<8x32xf32>
    %31 = arith.divf %29, %30 : vector<8x32xf32>
    %32 = vector.extract_strided_slice %25 {offsets = [0, 32], sizes = [8, 32], strides = [1, 1]} : vector<8x128xf32> to vector<8x32xf32>
    %33 = arith.negf %32 : vector<8x32xf32>
    %34 = math.exp %33 : vector<8x32xf32>
    %cst_25 = arith.constant 1.000000e+00 : f32
    %35 = vector.broadcast %cst_25 : f32 to vector<8x32xf32>
    %36 = arith.addf %35, %34 : vector<8x32xf32>
    %37 = arith.divf %35, %36 : vector<8x32xf32>
    %38 = vector.extract_strided_slice %25 {offsets = [0, 64], sizes = [8, 32], strides = [1, 1]} : vector<8x128xf32> to vector<8x32xf32>
    %39 = math.tanh %38 : vector<8x32xf32>
    %40 = vector.extract_strided_slice %25 {offsets = [0, 96], sizes = [8, 32], strides = [1, 1]} : vector<8x128xf32> to vector<8x32xf32>
    %41 = arith.negf %40 : vector<8x32xf32>
    %42 = math.exp %41 : vector<8x32xf32>
    %cst_26 = arith.constant 1.000000e+00 : f32
    %43 = vector.broadcast %cst_26 : f32 to vector<8x32xf32>
    %44 = arith.addf %43, %42 : vector<8x32xf32>
    %45 = arith.divf %43, %44 : vector<8x32xf32>
    %46 = arith.mulf %37, %19 : vector<8x32xf32>
    %47 = arith.mulf %31, %39 : vector<8x32xf32>
    %48 = arith.addf %46, %47 : vector<8x32xf32>
    %49 = math.tanh %48 : vector<8x32xf32>
    %50 = arith.mulf %45, %49 : vector<8x32xf32>
    %cst_27 = arith.constant dense<0.000000e+00> : vector<8x128xf32>
    %51 = tpu.matmul %50, %15, %cst_27 {dimension_numbers = #tpu.dot_dimension_numbers<[1], [0], [0], [1], [0, 0, 1, 1], [], []>} : vector<8x32xf32>, vector<32x128xf32>, vector<8x128xf32> -> vector<8x128xf32>
    %52 = vector.broadcast %17 : vector<1x128xf32> to vector<8x128xf32>
    %53 = arith.addf %51, %52 : vector<8x128xf32>
    %cst_28 = arith.constant dense<0.000000e+00> : vector<8x128xf32>
    %54 = tpu.matmul %20, %16, %cst_28 {dimension_numbers = #tpu.dot_dimension_numbers<[1], [0], [0], [1], [0, 0, 1, 1], [], []>} : vector<8x32xf32>, vector<32x128xf32>, vector<8x128xf32> -> vector<8x128xf32>
    %55 = arith.addf %53, %54 : vector<8x128xf32>
    %56 = vector.extract_strided_slice %55 {offsets = [0, 0], sizes = [8, 32], strides = [1, 1]} : vector<8x128xf32> to vector<8x32xf32>
    %57 = arith.negf %56 : vector<8x32xf32>
    %58 = math.exp %57 : vector<8x32xf32>
    %cst_29 = arith.constant 1.000000e+00 : f32
    %59 = vector.broadcast %cst_29 : f32 to vector<8x32xf32>
    %60 = arith.addf %59, %58 : vector<8x32xf32>
    %61 = arith.divf %59, %60 : vector<8x32xf32>
    %62 = vector.extract_strided_slice %55 {offsets = [0, 32], sizes = [8, 32], strides = [1, 1]} : vector<8x128xf32> to vector<8x32xf32>
    %63 = arith.negf %62 : vector<8x32xf32>
    %64 = math.exp %63 : vector<8x32xf32>
    %cst_30 = arith.constant 1.000000e+00 : f32
    %65 = vector.broadcast %cst_30 : f32 to vector<8x32xf32>
    %66 = arith.addf %65, %64 : vector<8x32xf32>
    %67 = arith.divf %65, %66 : vector<8x32xf32>
    %68 = vector.extract_strided_slice %55 {offsets = [0, 64], sizes = [8, 32], strides = [1, 1]} : vector<8x128xf32> to vector<8x32xf32>
    %69 = math.tanh %68 : vector<8x32xf32>
    %70 = vector.extract_strided_slice %55 {offsets = [0, 96], sizes = [8, 32], strides = [1, 1]} : vector<8x128xf32> to vector<8x32xf32>
    %71 = arith.negf %70 : vector<8x32xf32>
    %72 = math.exp %71 : vector<8x32xf32>
    %cst_31 = arith.constant 1.000000e+00 : f32
    %73 = vector.broadcast %cst_31 : f32 to vector<8x32xf32>
    %74 = arith.addf %73, %72 : vector<8x32xf32>
    %75 = arith.divf %73, %74 : vector<8x32xf32>
    %76 = arith.mulf %67, %21 : vector<8x32xf32>
    %77 = arith.mulf %61, %69 : vector<8x32xf32>
    %78 = arith.addf %76, %77 : vector<8x32xf32>
    %79 = math.tanh %78 : vector<8x32xf32>
    %80 = arith.mulf %75, %79 : vector<8x32xf32>
    %81 = vector.extract_strided_slice %13 {offsets = [1, 0, 0], sizes = [1, 8, 128], strides = [1, 1, 1]} : vector<8x8x128xf32> to vector<1x8x128xf32>
    %82 = vector.shape_cast %81 : vector<1x8x128xf32> to vector<8x128xf32>
    %cst_32 = arith.constant dense<0.000000e+00> : vector<8x128xf32>
    %83 = tpu.matmul %50, %14, %cst_32 {dimension_numbers = #tpu.dot_dimension_numbers<[1], [0], [0], [1], [0, 0, 1, 1], [], []>} : vector<8x32xf32>, vector<32x128xf32>, vector<8x128xf32> -> vector<8x128xf32>
    %84 = arith.addf %82, %83 : vector<8x128xf32>
    %85 = vector.extract_strided_slice %84 {offsets = [0, 0], sizes = [8, 32], strides = [1, 1]} : vector<8x128xf32> to vector<8x32xf32>
    %86 = arith.negf %85 : vector<8x32xf32>
    %87 = math.exp %86 : vector<8x32xf32>
    %cst_33 = arith.constant 1.000000e+00 : f32
    %88 = vector.broadcast %cst_33 : f32 to vector<8x32xf32>
    %89 = arith.addf %88, %87 : vector<8x32xf32>
    %90 = arith.divf %88, %89 : vector<8x32xf32>
    %91 = vector.extract_strided_slice %84 {offsets = [0, 32], sizes = [8, 32], strides = [1, 1]} : vector<8x128xf32> to vector<8x32xf32>
    %92 = arith.negf %91 : vector<8x32xf32>
    %93 = math.exp %92 : vector<8x32xf32>
    %cst_34 = arith.constant 1.000000e+00 : f32
    %94 = vector.broadcast %cst_34 : f32 to vector<8x32xf32>
    %95 = arith.addf %94, %93 : vector<8x32xf32>
    %96 = arith.divf %94, %95 : vector<8x32xf32>
    %97 = vector.extract_strided_slice %84 {offsets = [0, 64], sizes = [8, 32], strides = [1, 1]} : vector<8x128xf32> to vector<8x32xf32>
    %98 = math.tanh %97 : vector<8x32xf32>
    %99 = vector.extract_strided_slice %84 {offsets = [0, 96], sizes = [8, 32], strides = [1, 1]} : vector<8x128xf32> to vector<8x32xf32>
    %100 = arith.negf %99 : vector<8x32xf32>
    %101 = math.exp %100 : vector<8x32xf32>
    %cst_35 = arith.constant 1.000000e+00 : f32
    %102 = vector.broadcast %cst_35 : f32 to vector<8x32xf32>
    %103 = arith.addf %102, %101 : vector<8x32xf32>
    %104 = arith.divf %102, %103 : vector<8x32xf32>
    %105 = arith.mulf %96, %48 : vector<8x32xf32>
    %106 = arith.mulf %90, %98 : vector<8x32xf32>
    %107 = arith.addf %105, %106 : vector<8x32xf32>
    %108 = math.tanh %107 : vector<8x32xf32>
    %109 = arith.mulf %104, %108 : vector<8x32xf32>
    %cst_36 = arith.constant dense<0.000000e+00> : vector<8x128xf32>
    %110 = tpu.matmul %109, %15, %cst_36 {dimension_numbers = #tpu.dot_dimension_numbers<[1], [0], [0], [1], [0, 0, 1, 1], [], []>} : vector<8x32xf32>, vector<32x128xf32>, vector<8x128xf32> -> vector<8x128xf32>
    %111 = vector.broadcast %17 : vector<1x128xf32> to vector<8x128xf32>
    %112 = arith.addf %110, %111 : vector<8x128xf32>
    %cst_37 = arith.constant dense<0.000000e+00> : vector<8x128xf32>
    %113 = tpu.matmul %80, %16, %cst_37 {dimension_numbers = #tpu.dot_dimension_numbers<[1], [0], [0], [1], [0, 0, 1, 1], [], []>} : vector<8x32xf32>, vector<32x128xf32>, vector<8x128xf32> -> vector<8x128xf32>
    %114 = arith.addf %112, %113 : vector<8x128xf32>
    %115 = vector.extract_strided_slice %114 {offsets = [0, 0], sizes = [8, 32], strides = [1, 1]} : vector<8x128xf32> to vector<8x32xf32>
    %116 = arith.negf %115 : vector<8x32xf32>
    %117 = math.exp %116 : vector<8x32xf32>
    %cst_38 = arith.constant 1.000000e+00 : f32
    %118 = vector.broadcast %cst_38 : f32 to vector<8x32xf32>
    %119 = arith.addf %118, %117 : vector<8x32xf32>
    %120 = arith.divf %118, %119 : vector<8x32xf32>
    %121 = vector.extract_strided_slice %114 {offsets = [0, 32], sizes = [8, 32], strides = [1, 1]} : vector<8x128xf32> to vector<8x32xf32>
    %122 = arith.negf %121 : vector<8x32xf32>
    %123 = math.exp %122 : vector<8x32xf32>
    %cst_39 = arith.constant 1.000000e+00 : f32
    %124 = vector.broadcast %cst_39 : f32 to vector<8x32xf32>
    %125 = arith.addf %124, %123 : vector<8x32xf32>
    %126 = arith.divf %124, %125 : vector<8x32xf32>
    %127 = vector.extract_strided_slice %114 {offsets = [0, 64], sizes = [8, 32], strides = [1, 1]} : vector<8x128xf32> to vector<8x32xf32>
    %128 = math.tanh %127 : vector<8x32xf32>
    %129 = vector.extract_strided_slice %114 {offsets = [0, 96], sizes = [8, 32], strides = [1, 1]} : vector<8x128xf32> to vector<8x32xf32>
    %130 = arith.negf %129 : vector<8x32xf32>
    %131 = math.exp %130 : vector<8x32xf32>
    %cst_40 = arith.constant 1.000000e+00 : f32
    %132 = vector.broadcast %cst_40 : f32 to vector<8x32xf32>
    %133 = arith.addf %132, %131 : vector<8x32xf32>
    %134 = arith.divf %132, %133 : vector<8x32xf32>
    %135 = arith.mulf %126, %78 : vector<8x32xf32>
    %136 = arith.mulf %120, %128 : vector<8x32xf32>
    %137 = arith.addf %135, %136 : vector<8x32xf32>
    %138 = math.tanh %137 : vector<8x32xf32>
    %139 = arith.mulf %134, %138 : vector<8x32xf32>
    %140 = vector.extract_strided_slice %13 {offsets = [2, 0, 0], sizes = [1, 8, 128], strides = [1, 1, 1]} : vector<8x8x128xf32> to vector<1x8x128xf32>
    %141 = vector.shape_cast %140 : vector<1x8x128xf32> to vector<8x128xf32>
    %cst_41 = arith.constant dense<0.000000e+00> : vector<8x128xf32>
    %142 = tpu.matmul %109, %14, %cst_41 {dimension_numbers = #tpu.dot_dimension_numbers<[1], [0], [0], [1], [0, 0, 1, 1], [], []>} : vector<8x32xf32>, vector<32x128xf32>, vector<8x128xf32> -> vector<8x128xf32>
    %143 = arith.addf %141, %142 : vector<8x128xf32>
    %144 = vector.extract_strided_slice %143 {offsets = [0, 0], sizes = [8, 32], strides = [1, 1]} : vector<8x128xf32> to vector<8x32xf32>
    %145 = arith.negf %144 : vector<8x32xf32>
    %146 = math.exp %145 : vector<8x32xf32>
    %cst_42 = arith.constant 1.000000e+00 : f32
    %147 = vector.broadcast %cst_42 : f32 to vector<8x32xf32>
    %148 = arith.addf %147, %146 : vector<8x32xf32>
    %149 = arith.divf %147, %148 : vector<8x32xf32>
    %150 = vector.extract_strided_slice %143 {offsets = [0, 32], sizes = [8, 32], strides = [1, 1]} : vector<8x128xf32> to vector<8x32xf32>
    %151 = arith.negf %150 : vector<8x32xf32>
    %152 = math.exp %151 : vector<8x32xf32>
    %cst_43 = arith.constant 1.000000e+00 : f32
    %153 = vector.broadcast %cst_43 : f32 to vector<8x32xf32>
    %154 = arith.addf %153, %152 : vector<8x32xf32>
    %155 = arith.divf %153, %154 : vector<8x32xf32>
    %156 = vector.extract_strided_slice %143 {offsets = [0, 64], sizes = [8, 32], strides = [1, 1]} : vector<8x128xf32> to vector<8x32xf32>
    %157 = math.tanh %156 : vector<8x32xf32>
    %158 = vector.extract_strided_slice %143 {offsets = [0, 96], sizes = [8, 32], strides = [1, 1]} : vector<8x128xf32> to vector<8x32xf32>
    %159 = arith.negf %158 : vector<8x32xf32>
    %160 = math.exp %159 : vector<8x32xf32>
    %cst_44 = arith.constant 1.000000e+00 : f32
    %161 = vector.broadcast %cst_44 : f32 to vector<8x32xf32>
    %162 = arith.addf %161, %160 : vector<8x32xf32>
    %163 = arith.divf %161, %162 : vector<8x32xf32>
    %164 = arith.mulf %155, %107 : vector<8x32xf32>
    %165 = arith.mulf %149, %157 : vector<8x32xf32>
    %166 = arith.addf %164, %165 : vector<8x32xf32>
    %167 = math.tanh %166 : vector<8x32xf32>
    %168 = arith.mulf %163, %167 : vector<8x32xf32>
    %cst_45 = arith.constant dense<0.000000e+00> : vector<8x128xf32>
    %169 = tpu.matmul %168, %15, %cst_45 {dimension_numbers = #tpu.dot_dimension_numbers<[1], [0], [0], [1], [0, 0, 1, 1], [], []>} : vector<8x32xf32>, vector<32x128xf32>, vector<8x128xf32> -> vector<8x128xf32>
    %170 = vector.broadcast %17 : vector<1x128xf32> to vector<8x128xf32>
    %171 = arith.addf %169, %170 : vector<8x128xf32>
    %cst_46 = arith.constant dense<0.000000e+00> : vector<8x128xf32>
    %172 = tpu.matmul %139, %16, %cst_46 {dimension_numbers = #tpu.dot_dimension_numbers<[1], [0], [0], [1], [0, 0, 1, 1], [], []>} : vector<8x32xf32>, vector<32x128xf32>, vector<8x128xf32> -> vector<8x128xf32>
    %173 = arith.addf %171, %172 : vector<8x128xf32>
    %174 = vector.extract_strided_slice %173 {offsets = [0, 0], sizes = [8, 32], strides = [1, 1]} : vector<8x128xf32> to vector<8x32xf32>
    %175 = arith.negf %174 : vector<8x32xf32>
    %176 = math.exp %175 : vector<8x32xf32>
    %cst_47 = arith.constant 1.000000e+00 : f32
    %177 = vector.broadcast %cst_47 : f32 to vector<8x32xf32>
    %178 = arith.addf %177, %176 : vector<8x32xf32>
    %179 = arith.divf %177, %178 : vector<8x32xf32>
    %180 = vector.extract_strided_slice %173 {offsets = [0, 32], sizes = [8, 32], strides = [1, 1]} : vector<8x128xf32> to vector<8x32xf32>
    %181 = arith.negf %180 : vector<8x32xf32>
    %182 = math.exp %181 : vector<8x32xf32>
    %cst_48 = arith.constant 1.000000e+00 : f32
    %183 = vector.broadcast %cst_48 : f32 to vector<8x32xf32>
    %184 = arith.addf %183, %182 : vector<8x32xf32>
    %185 = arith.divf %183, %184 : vector<8x32xf32>
    %186 = vector.extract_strided_slice %173 {offsets = [0, 64], sizes = [8, 32], strides = [1, 1]} : vector<8x128xf32> to vector<8x32xf32>
    %187 = math.tanh %186 : vector<8x32xf32>
    %188 = vector.extract_strided_slice %173 {offsets = [0, 96], sizes = [8, 32], strides = [1, 1]} : vector<8x128xf32> to vector<8x32xf32>
    %189 = arith.negf %188 : vector<8x32xf32>
    %190 = math.exp %189 : vector<8x32xf32>
    %cst_49 = arith.constant 1.000000e+00 : f32
    %191 = vector.broadcast %cst_49 : f32 to vector<8x32xf32>
    %192 = arith.addf %191, %190 : vector<8x32xf32>
    %193 = arith.divf %191, %192 : vector<8x32xf32>
    %194 = arith.mulf %185, %137 : vector<8x32xf32>
    %195 = arith.mulf %179, %187 : vector<8x32xf32>
    %196 = arith.addf %194, %195 : vector<8x32xf32>
    %197 = math.tanh %196 : vector<8x32xf32>
    %198 = arith.mulf %193, %197 : vector<8x32xf32>
    %199 = vector.extract_strided_slice %13 {offsets = [3, 0, 0], sizes = [1, 8, 128], strides = [1, 1, 1]} : vector<8x8x128xf32> to vector<1x8x128xf32>
    %200 = vector.shape_cast %199 : vector<1x8x128xf32> to vector<8x128xf32>
    %cst_50 = arith.constant dense<0.000000e+00> : vector<8x128xf32>
    %201 = tpu.matmul %168, %14, %cst_50 {dimension_numbers = #tpu.dot_dimension_numbers<[1], [0], [0], [1], [0, 0, 1, 1], [], []>} : vector<8x32xf32>, vector<32x128xf32>, vector<8x128xf32> -> vector<8x128xf32>
    %202 = arith.addf %200, %201 : vector<8x128xf32>
    %203 = vector.extract_strided_slice %202 {offsets = [0, 0], sizes = [8, 32], strides = [1, 1]} : vector<8x128xf32> to vector<8x32xf32>
    %204 = arith.negf %203 : vector<8x32xf32>
    %205 = math.exp %204 : vector<8x32xf32>
    %cst_51 = arith.constant 1.000000e+00 : f32
    %206 = vector.broadcast %cst_51 : f32 to vector<8x32xf32>
    %207 = arith.addf %206, %205 : vector<8x32xf32>
    %208 = arith.divf %206, %207 : vector<8x32xf32>
    %209 = vector.extract_strided_slice %202 {offsets = [0, 32], sizes = [8, 32], strides = [1, 1]} : vector<8x128xf32> to vector<8x32xf32>
    %210 = arith.negf %209 : vector<8x32xf32>
    %211 = math.exp %210 : vector<8x32xf32>
    %cst_52 = arith.constant 1.000000e+00 : f32
    %212 = vector.broadcast %cst_52 : f32 to vector<8x32xf32>
    %213 = arith.addf %212, %211 : vector<8x32xf32>
    %214 = arith.divf %212, %213 : vector<8x32xf32>
    %215 = vector.extract_strided_slice %202 {offsets = [0, 64], sizes = [8, 32], strides = [1, 1]} : vector<8x128xf32> to vector<8x32xf32>
    %216 = math.tanh %215 : vector<8x32xf32>
    %217 = vector.extract_strided_slice %202 {offsets = [0, 96], sizes = [8, 32], strides = [1, 1]} : vector<8x128xf32> to vector<8x32xf32>
    %218 = arith.negf %217 : vector<8x32xf32>
    %219 = math.exp %218 : vector<8x32xf32>
    %cst_53 = arith.constant 1.000000e+00 : f32
    %220 = vector.broadcast %cst_53 : f32 to vector<8x32xf32>
    %221 = arith.addf %220, %219 : vector<8x32xf32>
    %222 = arith.divf %220, %221 : vector<8x32xf32>
    %223 = arith.mulf %214, %166 : vector<8x32xf32>
    %224 = arith.mulf %208, %216 : vector<8x32xf32>
    %225 = arith.addf %223, %224 : vector<8x32xf32>
    %226 = math.tanh %225 : vector<8x32xf32>
    %227 = arith.mulf %222, %226 : vector<8x32xf32>
    %cst_54 = arith.constant dense<0.000000e+00> : vector<8x128xf32>
    %228 = tpu.matmul %227, %15, %cst_54 {dimension_numbers = #tpu.dot_dimension_numbers<[1], [0], [0], [1], [0, 0, 1, 1], [], []>} : vector<8x32xf32>, vector<32x128xf32>, vector<8x128xf32> -> vector<8x128xf32>
    %229 = vector.broadcast %17 : vector<1x128xf32> to vector<8x128xf32>
    %230 = arith.addf %228, %229 : vector<8x128xf32>
    %cst_55 = arith.constant dense<0.000000e+00> : vector<8x128xf32>
    %231 = tpu.matmul %198, %16, %cst_55 {dimension_numbers = #tpu.dot_dimension_numbers<[1], [0], [0], [1], [0, 0, 1, 1], [], []>} : vector<8x32xf32>, vector<32x128xf32>, vector<8x128xf32> -> vector<8x128xf32>
    %232 = arith.addf %230, %231 : vector<8x128xf32>
    %233 = vector.extract_strided_slice %232 {offsets = [0, 0], sizes = [8, 32], strides = [1, 1]} : vector<8x128xf32> to vector<8x32xf32>
    %234 = arith.negf %233 : vector<8x32xf32>
    %235 = math.exp %234 : vector<8x32xf32>
    %cst_56 = arith.constant 1.000000e+00 : f32
    %236 = vector.broadcast %cst_56 : f32 to vector<8x32xf32>
    %237 = arith.addf %236, %235 : vector<8x32xf32>
    %238 = arith.divf %236, %237 : vector<8x32xf32>
    %239 = vector.extract_strided_slice %232 {offsets = [0, 32], sizes = [8, 32], strides = [1, 1]} : vector<8x128xf32> to vector<8x32xf32>
    %240 = arith.negf %239 : vector<8x32xf32>
    %241 = math.exp %240 : vector<8x32xf32>
    %cst_57 = arith.constant 1.000000e+00 : f32
    %242 = vector.broadcast %cst_57 : f32 to vector<8x32xf32>
    %243 = arith.addf %242, %241 : vector<8x32xf32>
    %244 = arith.divf %242, %243 : vector<8x32xf32>
    %245 = vector.extract_strided_slice %232 {offsets = [0, 64], sizes = [8, 32], strides = [1, 1]} : vector<8x128xf32> to vector<8x32xf32>
    %246 = math.tanh %245 : vector<8x32xf32>
    %247 = vector.extract_strided_slice %232 {offsets = [0, 96], sizes = [8, 32], strides = [1, 1]} : vector<8x128xf32> to vector<8x32xf32>
    %248 = arith.negf %247 : vector<8x32xf32>
    %249 = math.exp %248 : vector<8x32xf32>
    %cst_58 = arith.constant 1.000000e+00 : f32
    %250 = vector.broadcast %cst_58 : f32 to vector<8x32xf32>
    %251 = arith.addf %250, %249 : vector<8x32xf32>
    %252 = arith.divf %250, %251 : vector<8x32xf32>
    %253 = arith.mulf %244, %196 : vector<8x32xf32>
    %254 = arith.mulf %238, %246 : vector<8x32xf32>
    %255 = arith.addf %253, %254 : vector<8x32xf32>
    %256 = math.tanh %255 : vector<8x32xf32>
    %257 = arith.mulf %252, %256 : vector<8x32xf32>
    %258 = vector.extract_strided_slice %13 {offsets = [4, 0, 0], sizes = [1, 8, 128], strides = [1, 1, 1]} : vector<8x8x128xf32> to vector<1x8x128xf32>
    %259 = vector.shape_cast %258 : vector<1x8x128xf32> to vector<8x128xf32>
    %cst_59 = arith.constant dense<0.000000e+00> : vector<8x128xf32>
    %260 = tpu.matmul %227, %14, %cst_59 {dimension_numbers = #tpu.dot_dimension_numbers<[1], [0], [0], [1], [0, 0, 1, 1], [], []>} : vector<8x32xf32>, vector<32x128xf32>, vector<8x128xf32> -> vector<8x128xf32>
    %261 = arith.addf %259, %260 : vector<8x128xf32>
    %262 = vector.extract_strided_slice %261 {offsets = [0, 0], sizes = [8, 32], strides = [1, 1]} : vector<8x128xf32> to vector<8x32xf32>
    %263 = arith.negf %262 : vector<8x32xf32>
    %264 = math.exp %263 : vector<8x32xf32>
    %cst_60 = arith.constant 1.000000e+00 : f32
    %265 = vector.broadcast %cst_60 : f32 to vector<8x32xf32>
    %266 = arith.addf %265, %264 : vector<8x32xf32>
    %267 = arith.divf %265, %266 : vector<8x32xf32>
    %268 = vector.extract_strided_slice %261 {offsets = [0, 32], sizes = [8, 32], strides = [1, 1]} : vector<8x128xf32> to vector<8x32xf32>
    %269 = arith.negf %268 : vector<8x32xf32>
    %270 = math.exp %269 : vector<8x32xf32>
    %cst_61 = arith.constant 1.000000e+00 : f32
    %271 = vector.broadcast %cst_61 : f32 to vector<8x32xf32>
    %272 = arith.addf %271, %270 : vector<8x32xf32>
    %273 = arith.divf %271, %272 : vector<8x32xf32>
    %274 = vector.extract_strided_slice %261 {offsets = [0, 64], sizes = [8, 32], strides = [1, 1]} : vector<8x128xf32> to vector<8x32xf32>
    %275 = math.tanh %274 : vector<8x32xf32>
    %276 = vector.extract_strided_slice %261 {offsets = [0, 96], sizes = [8, 32], strides = [1, 1]} : vector<8x128xf32> to vector<8x32xf32>
    %277 = arith.negf %276 : vector<8x32xf32>
    %278 = math.exp %277 : vector<8x32xf32>
    %cst_62 = arith.constant 1.000000e+00 : f32
    %279 = vector.broadcast %cst_62 : f32 to vector<8x32xf32>
    %280 = arith.addf %279, %278 : vector<8x32xf32>
    %281 = arith.divf %279, %280 : vector<8x32xf32>
    %282 = arith.mulf %273, %225 : vector<8x32xf32>
    %283 = arith.mulf %267, %275 : vector<8x32xf32>
    %284 = arith.addf %282, %283 : vector<8x32xf32>
    %285 = math.tanh %284 : vector<8x32xf32>
    %286 = arith.mulf %281, %285 : vector<8x32xf32>
    %cst_63 = arith.constant dense<0.000000e+00> : vector<8x128xf32>
    %287 = tpu.matmul %286, %15, %cst_63 {dimension_numbers = #tpu.dot_dimension_numbers<[1], [0], [0], [1], [0, 0, 1, 1], [], []>} : vector<8x32xf32>, vector<32x128xf32>, vector<8x128xf32> -> vector<8x128xf32>
    %288 = vector.broadcast %17 : vector<1x128xf32> to vector<8x128xf32>
    %289 = arith.addf %287, %288 : vector<8x128xf32>
    %cst_64 = arith.constant dense<0.000000e+00> : vector<8x128xf32>
    %290 = tpu.matmul %257, %16, %cst_64 {dimension_numbers = #tpu.dot_dimension_numbers<[1], [0], [0], [1], [0, 0, 1, 1], [], []>} : vector<8x32xf32>, vector<32x128xf32>, vector<8x128xf32> -> vector<8x128xf32>
    %291 = arith.addf %289, %290 : vector<8x128xf32>
    %292 = vector.extract_strided_slice %291 {offsets = [0, 0], sizes = [8, 32], strides = [1, 1]} : vector<8x128xf32> to vector<8x32xf32>
    %293 = arith.negf %292 : vector<8x32xf32>
    %294 = math.exp %293 : vector<8x32xf32>
    %cst_65 = arith.constant 1.000000e+00 : f32
    %295 = vector.broadcast %cst_65 : f32 to vector<8x32xf32>
    %296 = arith.addf %295, %294 : vector<8x32xf32>
    %297 = arith.divf %295, %296 : vector<8x32xf32>
    %298 = vector.extract_strided_slice %291 {offsets = [0, 32], sizes = [8, 32], strides = [1, 1]} : vector<8x128xf32> to vector<8x32xf32>
    %299 = arith.negf %298 : vector<8x32xf32>
    %300 = math.exp %299 : vector<8x32xf32>
    %cst_66 = arith.constant 1.000000e+00 : f32
    %301 = vector.broadcast %cst_66 : f32 to vector<8x32xf32>
    %302 = arith.addf %301, %300 : vector<8x32xf32>
    %303 = arith.divf %301, %302 : vector<8x32xf32>
    %304 = vector.extract_strided_slice %291 {offsets = [0, 64], sizes = [8, 32], strides = [1, 1]} : vector<8x128xf32> to vector<8x32xf32>
    %305 = math.tanh %304 : vector<8x32xf32>
    %306 = vector.extract_strided_slice %291 {offsets = [0, 96], sizes = [8, 32], strides = [1, 1]} : vector<8x128xf32> to vector<8x32xf32>
    %307 = arith.negf %306 : vector<8x32xf32>
    %308 = math.exp %307 : vector<8x32xf32>
    %cst_67 = arith.constant 1.000000e+00 : f32
    %309 = vector.broadcast %cst_67 : f32 to vector<8x32xf32>
    %310 = arith.addf %309, %308 : vector<8x32xf32>
    %311 = arith.divf %309, %310 : vector<8x32xf32>
    %312 = arith.mulf %303, %255 : vector<8x32xf32>
    %313 = arith.mulf %297, %305 : vector<8x32xf32>
    %314 = arith.addf %312, %313 : vector<8x32xf32>
    %315 = math.tanh %314 : vector<8x32xf32>
    %316 = arith.mulf %311, %315 : vector<8x32xf32>
    %317 = vector.extract_strided_slice %13 {offsets = [5, 0, 0], sizes = [1, 8, 128], strides = [1, 1, 1]} : vector<8x8x128xf32> to vector<1x8x128xf32>
    %318 = vector.shape_cast %317 : vector<1x8x128xf32> to vector<8x128xf32>
    %cst_68 = arith.constant dense<0.000000e+00> : vector<8x128xf32>
    %319 = tpu.matmul %286, %14, %cst_68 {dimension_numbers = #tpu.dot_dimension_numbers<[1], [0], [0], [1], [0, 0, 1, 1], [], []>} : vector<8x32xf32>, vector<32x128xf32>, vector<8x128xf32> -> vector<8x128xf32>
    %320 = arith.addf %318, %319 : vector<8x128xf32>
    %321 = vector.extract_strided_slice %320 {offsets = [0, 0], sizes = [8, 32], strides = [1, 1]} : vector<8x128xf32> to vector<8x32xf32>
    %322 = arith.negf %321 : vector<8x32xf32>
    %323 = math.exp %322 : vector<8x32xf32>
    %cst_69 = arith.constant 1.000000e+00 : f32
    %324 = vector.broadcast %cst_69 : f32 to vector<8x32xf32>
    %325 = arith.addf %324, %323 : vector<8x32xf32>
    %326 = arith.divf %324, %325 : vector<8x32xf32>
    %327 = vector.extract_strided_slice %320 {offsets = [0, 32], sizes = [8, 32], strides = [1, 1]} : vector<8x128xf32> to vector<8x32xf32>
    %328 = arith.negf %327 : vector<8x32xf32>
    %329 = math.exp %328 : vector<8x32xf32>
    %cst_70 = arith.constant 1.000000e+00 : f32
    %330 = vector.broadcast %cst_70 : f32 to vector<8x32xf32>
    %331 = arith.addf %330, %329 : vector<8x32xf32>
    %332 = arith.divf %330, %331 : vector<8x32xf32>
    %333 = vector.extract_strided_slice %320 {offsets = [0, 64], sizes = [8, 32], strides = [1, 1]} : vector<8x128xf32> to vector<8x32xf32>
    %334 = math.tanh %333 : vector<8x32xf32>
    %335 = vector.extract_strided_slice %320 {offsets = [0, 96], sizes = [8, 32], strides = [1, 1]} : vector<8x128xf32> to vector<8x32xf32>
    %336 = arith.negf %335 : vector<8x32xf32>
    %337 = math.exp %336 : vector<8x32xf32>
    %cst_71 = arith.constant 1.000000e+00 : f32
    %338 = vector.broadcast %cst_71 : f32 to vector<8x32xf32>
    %339 = arith.addf %338, %337 : vector<8x32xf32>
    %340 = arith.divf %338, %339 : vector<8x32xf32>
    %341 = arith.mulf %332, %284 : vector<8x32xf32>
    %342 = arith.mulf %326, %334 : vector<8x32xf32>
    %343 = arith.addf %341, %342 : vector<8x32xf32>
    %344 = math.tanh %343 : vector<8x32xf32>
    %345 = arith.mulf %340, %344 : vector<8x32xf32>
    %cst_72 = arith.constant dense<0.000000e+00> : vector<8x128xf32>
    %346 = tpu.matmul %345, %15, %cst_72 {dimension_numbers = #tpu.dot_dimension_numbers<[1], [0], [0], [1], [0, 0, 1, 1], [], []>} : vector<8x32xf32>, vector<32x128xf32>, vector<8x128xf32> -> vector<8x128xf32>
    %347 = vector.broadcast %17 : vector<1x128xf32> to vector<8x128xf32>
    %348 = arith.addf %346, %347 : vector<8x128xf32>
    %cst_73 = arith.constant dense<0.000000e+00> : vector<8x128xf32>
    %349 = tpu.matmul %316, %16, %cst_73 {dimension_numbers = #tpu.dot_dimension_numbers<[1], [0], [0], [1], [0, 0, 1, 1], [], []>} : vector<8x32xf32>, vector<32x128xf32>, vector<8x128xf32> -> vector<8x128xf32>
    %350 = arith.addf %348, %349 : vector<8x128xf32>
    %351 = vector.extract_strided_slice %350 {offsets = [0, 0], sizes = [8, 32], strides = [1, 1]} : vector<8x128xf32> to vector<8x32xf32>
    %352 = arith.negf %351 : vector<8x32xf32>
    %353 = math.exp %352 : vector<8x32xf32>
    %cst_74 = arith.constant 1.000000e+00 : f32
    %354 = vector.broadcast %cst_74 : f32 to vector<8x32xf32>
    %355 = arith.addf %354, %353 : vector<8x32xf32>
    %356 = arith.divf %354, %355 : vector<8x32xf32>
    %357 = vector.extract_strided_slice %350 {offsets = [0, 32], sizes = [8, 32], strides = [1, 1]} : vector<8x128xf32> to vector<8x32xf32>
    %358 = arith.negf %357 : vector<8x32xf32>
    %359 = math.exp %358 : vector<8x32xf32>
    %cst_75 = arith.constant 1.000000e+00 : f32
    %360 = vector.broadcast %cst_75 : f32 to vector<8x32xf32>
    %361 = arith.addf %360, %359 : vector<8x32xf32>
    %362 = arith.divf %360, %361 : vector<8x32xf32>
    %363 = vector.extract_strided_slice %350 {offsets = [0, 64], sizes = [8, 32], strides = [1, 1]} : vector<8x128xf32> to vector<8x32xf32>
    %364 = math.tanh %363 : vector<8x32xf32>
    %365 = vector.extract_strided_slice %350 {offsets = [0, 96], sizes = [8, 32], strides = [1, 1]} : vector<8x128xf32> to vector<8x32xf32>
    %366 = arith.negf %365 : vector<8x32xf32>
    %367 = math.exp %366 : vector<8x32xf32>
    %cst_76 = arith.constant 1.000000e+00 : f32
    %368 = vector.broadcast %cst_76 : f32 to vector<8x32xf32>
    %369 = arith.addf %368, %367 : vector<8x32xf32>
    %370 = arith.divf %368, %369 : vector<8x32xf32>
    %371 = arith.mulf %362, %314 : vector<8x32xf32>
    %372 = arith.mulf %356, %364 : vector<8x32xf32>
    %373 = arith.addf %371, %372 : vector<8x32xf32>
    %374 = math.tanh %373 : vector<8x32xf32>
    %375 = arith.mulf %370, %374 : vector<8x32xf32>
    %376 = vector.extract_strided_slice %13 {offsets = [6, 0, 0], sizes = [1, 8, 128], strides = [1, 1, 1]} : vector<8x8x128xf32> to vector<1x8x128xf32>
    %377 = vector.shape_cast %376 : vector<1x8x128xf32> to vector<8x128xf32>
    %cst_77 = arith.constant dense<0.000000e+00> : vector<8x128xf32>
    %378 = tpu.matmul %345, %14, %cst_77 {dimension_numbers = #tpu.dot_dimension_numbers<[1], [0], [0], [1], [0, 0, 1, 1], [], []>} : vector<8x32xf32>, vector<32x128xf32>, vector<8x128xf32> -> vector<8x128xf32>
    %379 = arith.addf %377, %378 : vector<8x128xf32>
    %380 = vector.extract_strided_slice %379 {offsets = [0, 0], sizes = [8, 32], strides = [1, 1]} : vector<8x128xf32> to vector<8x32xf32>
    %381 = arith.negf %380 : vector<8x32xf32>
    %382 = math.exp %381 : vector<8x32xf32>
    %cst_78 = arith.constant 1.000000e+00 : f32
    %383 = vector.broadcast %cst_78 : f32 to vector<8x32xf32>
    %384 = arith.addf %383, %382 : vector<8x32xf32>
    %385 = arith.divf %383, %384 : vector<8x32xf32>
    %386 = vector.extract_strided_slice %379 {offsets = [0, 32], sizes = [8, 32], strides = [1, 1]} : vector<8x128xf32> to vector<8x32xf32>
    %387 = arith.negf %386 : vector<8x32xf32>
    %388 = math.exp %387 : vector<8x32xf32>
    %cst_79 = arith.constant 1.000000e+00 : f32
    %389 = vector.broadcast %cst_79 : f32 to vector<8x32xf32>
    %390 = arith.addf %389, %388 : vector<8x32xf32>
    %391 = arith.divf %389, %390 : vector<8x32xf32>
    %392 = vector.extract_strided_slice %379 {offsets = [0, 64], sizes = [8, 32], strides = [1, 1]} : vector<8x128xf32> to vector<8x32xf32>
    %393 = math.tanh %392 : vector<8x32xf32>
    %394 = vector.extract_strided_slice %379 {offsets = [0, 96], sizes = [8, 32], strides = [1, 1]} : vector<8x128xf32> to vector<8x32xf32>
    %395 = arith.negf %394 : vector<8x32xf32>
    %396 = math.exp %395 : vector<8x32xf32>
    %cst_80 = arith.constant 1.000000e+00 : f32
    %397 = vector.broadcast %cst_80 : f32 to vector<8x32xf32>
    %398 = arith.addf %397, %396 : vector<8x32xf32>
    %399 = arith.divf %397, %398 : vector<8x32xf32>
    %400 = arith.mulf %391, %343 : vector<8x32xf32>
    %401 = arith.mulf %385, %393 : vector<8x32xf32>
    %402 = arith.addf %400, %401 : vector<8x32xf32>
    %403 = math.tanh %402 : vector<8x32xf32>
    %404 = arith.mulf %399, %403 : vector<8x32xf32>
    %cst_81 = arith.constant dense<0.000000e+00> : vector<8x128xf32>
    %405 = tpu.matmul %404, %15, %cst_81 {dimension_numbers = #tpu.dot_dimension_numbers<[1], [0], [0], [1], [0, 0, 1, 1], [], []>} : vector<8x32xf32>, vector<32x128xf32>, vector<8x128xf32> -> vector<8x128xf32>
    %406 = vector.broadcast %17 : vector<1x128xf32> to vector<8x128xf32>
    %407 = arith.addf %405, %406 : vector<8x128xf32>
    %cst_82 = arith.constant dense<0.000000e+00> : vector<8x128xf32>
    %408 = tpu.matmul %375, %16, %cst_82 {dimension_numbers = #tpu.dot_dimension_numbers<[1], [0], [0], [1], [0, 0, 1, 1], [], []>} : vector<8x32xf32>, vector<32x128xf32>, vector<8x128xf32> -> vector<8x128xf32>
    %409 = arith.addf %407, %408 : vector<8x128xf32>
    %410 = vector.extract_strided_slice %409 {offsets = [0, 0], sizes = [8, 32], strides = [1, 1]} : vector<8x128xf32> to vector<8x32xf32>
    %411 = arith.negf %410 : vector<8x32xf32>
    %412 = math.exp %411 : vector<8x32xf32>
    %cst_83 = arith.constant 1.000000e+00 : f32
    %413 = vector.broadcast %cst_83 : f32 to vector<8x32xf32>
    %414 = arith.addf %413, %412 : vector<8x32xf32>
    %415 = arith.divf %413, %414 : vector<8x32xf32>
    %416 = vector.extract_strided_slice %409 {offsets = [0, 32], sizes = [8, 32], strides = [1, 1]} : vector<8x128xf32> to vector<8x32xf32>
    %417 = arith.negf %416 : vector<8x32xf32>
    %418 = math.exp %417 : vector<8x32xf32>
    %cst_84 = arith.constant 1.000000e+00 : f32
    %419 = vector.broadcast %cst_84 : f32 to vector<8x32xf32>
    %420 = arith.addf %419, %418 : vector<8x32xf32>
    %421 = arith.divf %419, %420 : vector<8x32xf32>
    %422 = vector.extract_strided_slice %409 {offsets = [0, 64], sizes = [8, 32], strides = [1, 1]} : vector<8x128xf32> to vector<8x32xf32>
    %423 = math.tanh %422 : vector<8x32xf32>
    %424 = vector.extract_strided_slice %409 {offsets = [0, 96], sizes = [8, 32], strides = [1, 1]} : vector<8x128xf32> to vector<8x32xf32>
    %425 = arith.negf %424 : vector<8x32xf32>
    %426 = math.exp %425 : vector<8x32xf32>
    %cst_85 = arith.constant 1.000000e+00 : f32
    %427 = vector.broadcast %cst_85 : f32 to vector<8x32xf32>
    %428 = arith.addf %427, %426 : vector<8x32xf32>
    %429 = arith.divf %427, %428 : vector<8x32xf32>
    %430 = arith.mulf %421, %373 : vector<8x32xf32>
    %431 = arith.mulf %415, %423 : vector<8x32xf32>
    %432 = arith.addf %430, %431 : vector<8x32xf32>
    %433 = math.tanh %432 : vector<8x32xf32>
    %434 = arith.mulf %429, %433 : vector<8x32xf32>
    %435 = vector.extract_strided_slice %13 {offsets = [7, 0, 0], sizes = [1, 8, 128], strides = [1, 1, 1]} : vector<8x8x128xf32> to vector<1x8x128xf32>
    %436 = vector.shape_cast %435 : vector<1x8x128xf32> to vector<8x128xf32>
    %cst_86 = arith.constant dense<0.000000e+00> : vector<8x128xf32>
    %437 = tpu.matmul %404, %14, %cst_86 {dimension_numbers = #tpu.dot_dimension_numbers<[1], [0], [0], [1], [0, 0, 1, 1], [], []>} : vector<8x32xf32>, vector<32x128xf32>, vector<8x128xf32> -> vector<8x128xf32>
    %438 = arith.addf %436, %437 : vector<8x128xf32>
    %439 = vector.extract_strided_slice %438 {offsets = [0, 0], sizes = [8, 32], strides = [1, 1]} : vector<8x128xf32> to vector<8x32xf32>
    %440 = arith.negf %439 : vector<8x32xf32>
    %441 = math.exp %440 : vector<8x32xf32>
    %cst_87 = arith.constant 1.000000e+00 : f32
    %442 = vector.broadcast %cst_87 : f32 to vector<8x32xf32>
    %443 = arith.addf %442, %441 : vector<8x32xf32>
    %444 = arith.divf %442, %443 : vector<8x32xf32>
    %445 = vector.extract_strided_slice %438 {offsets = [0, 32], sizes = [8, 32], strides = [1, 1]} : vector<8x128xf32> to vector<8x32xf32>
    %446 = arith.negf %445 : vector<8x32xf32>
    %447 = math.exp %446 : vector<8x32xf32>
    %cst_88 = arith.constant 1.000000e+00 : f32
    %448 = vector.broadcast %cst_88 : f32 to vector<8x32xf32>
    %449 = arith.addf %448, %447 : vector<8x32xf32>
    %450 = arith.divf %448, %449 : vector<8x32xf32>
    %451 = vector.extract_strided_slice %438 {offsets = [0, 64], sizes = [8, 32], strides = [1, 1]} : vector<8x128xf32> to vector<8x32xf32>
    %452 = math.tanh %451 : vector<8x32xf32>
    %453 = vector.extract_strided_slice %438 {offsets = [0, 96], sizes = [8, 32], strides = [1, 1]} : vector<8x128xf32> to vector<8x32xf32>
    %454 = arith.negf %453 : vector<8x32xf32>
    %455 = math.exp %454 : vector<8x32xf32>
    %cst_89 = arith.constant 1.000000e+00 : f32
    %456 = vector.broadcast %cst_89 : f32 to vector<8x32xf32>
    %457 = arith.addf %456, %455 : vector<8x32xf32>
    %458 = arith.divf %456, %457 : vector<8x32xf32>
    %459 = arith.mulf %450, %402 : vector<8x32xf32>
    %460 = arith.mulf %444, %452 : vector<8x32xf32>
    %461 = arith.addf %459, %460 : vector<8x32xf32>
    %462 = math.tanh %461 : vector<8x32xf32>
    %463 = arith.mulf %458, %462 : vector<8x32xf32>
    %cst_90 = arith.constant dense<0.000000e+00> : vector<8x128xf32>
    %464 = tpu.matmul %463, %15, %cst_90 {dimension_numbers = #tpu.dot_dimension_numbers<[1], [0], [0], [1], [0, 0, 1, 1], [], []>} : vector<8x32xf32>, vector<32x128xf32>, vector<8x128xf32> -> vector<8x128xf32>
    %465 = vector.broadcast %17 : vector<1x128xf32> to vector<8x128xf32>
    %466 = arith.addf %464, %465 : vector<8x128xf32>
    %cst_91 = arith.constant dense<0.000000e+00> : vector<8x128xf32>
    %467 = tpu.matmul %434, %16, %cst_91 {dimension_numbers = #tpu.dot_dimension_numbers<[1], [0], [0], [1], [0, 0, 1, 1], [], []>} : vector<8x32xf32>, vector<32x128xf32>, vector<8x128xf32> -> vector<8x128xf32>
    %468 = arith.addf %466, %467 : vector<8x128xf32>
    %469 = vector.extract_strided_slice %468 {offsets = [0, 0], sizes = [8, 32], strides = [1, 1]} : vector<8x128xf32> to vector<8x32xf32>
    %470 = arith.negf %469 : vector<8x32xf32>
    %471 = math.exp %470 : vector<8x32xf32>
    %cst_92 = arith.constant 1.000000e+00 : f32
    %472 = vector.broadcast %cst_92 : f32 to vector<8x32xf32>
    %473 = arith.addf %472, %471 : vector<8x32xf32>
    %474 = arith.divf %472, %473 : vector<8x32xf32>
    %475 = vector.extract_strided_slice %468 {offsets = [0, 32], sizes = [8, 32], strides = [1, 1]} : vector<8x128xf32> to vector<8x32xf32>
    %476 = arith.negf %475 : vector<8x32xf32>
    %477 = math.exp %476 : vector<8x32xf32>
    %cst_93 = arith.constant 1.000000e+00 : f32
    %478 = vector.broadcast %cst_93 : f32 to vector<8x32xf32>
    %479 = arith.addf %478, %477 : vector<8x32xf32>
    %480 = arith.divf %478, %479 : vector<8x32xf32>
    %481 = vector.extract_strided_slice %468 {offsets = [0, 64], sizes = [8, 32], strides = [1, 1]} : vector<8x128xf32> to vector<8x32xf32>
    %482 = math.tanh %481 : vector<8x32xf32>
    %483 = vector.extract_strided_slice %468 {offsets = [0, 96], sizes = [8, 32], strides = [1, 1]} : vector<8x128xf32> to vector<8x32xf32>
    %484 = arith.negf %483 : vector<8x32xf32>
    %485 = math.exp %484 : vector<8x32xf32>
    %cst_94 = arith.constant 1.000000e+00 : f32
    %486 = vector.broadcast %cst_94 : f32 to vector<8x32xf32>
    %487 = arith.addf %486, %485 : vector<8x32xf32>
    %488 = arith.divf %486, %487 : vector<8x32xf32>
    %489 = arith.mulf %480, %432 : vector<8x32xf32>
    %490 = arith.mulf %474, %482 : vector<8x32xf32>
    %491 = arith.addf %489, %490 : vector<8x32xf32>
    %492 = math.tanh %491 : vector<8x32xf32>
    %493 = arith.mulf %488, %492 : vector<8x32xf32>
    %494 = vector.shape_cast %80 : vector<8x32xf32> to vector<1x8x32xf32>
    %495 = vector.shape_cast %139 : vector<8x32xf32> to vector<1x8x32xf32>
    %496 = vector.shape_cast %198 : vector<8x32xf32> to vector<1x8x32xf32>
    %497 = vector.shape_cast %257 : vector<8x32xf32> to vector<1x8x32xf32>
    %498 = vector.shape_cast %316 : vector<8x32xf32> to vector<1x8x32xf32>
    %499 = vector.shape_cast %375 : vector<8x32xf32> to vector<1x8x32xf32>
    %500 = vector.shape_cast %434 : vector<8x32xf32> to vector<1x8x32xf32>
    %501 = vector.shape_cast %493 : vector<8x32xf32> to vector<1x8x32xf32>
    %502 = tpu.concatenate %494, %495, %496, %497, %498, %499, %500, %501 in 0 : vector<1x8x32xf32>, vector<1x8x32xf32>, vector<1x8x32xf32>, vector<1x8x32xf32>, vector<1x8x32xf32>, vector<1x8x32xf32>, vector<1x8x32xf32>, vector<1x8x32xf32> -> vector<8x8x32xf32>
    %503 = tpu.iota {dimensions = array<i32: 2>} : vector<8x8x8xi32>
    %cst_95 = arith.constant 0.000000e+00 : f32
    %504 = vector.broadcast %cst_95 : f32 to vector<8x8x8xf32>
    %505 = vector.extract_strided_slice %502 {offsets = [0, 0, 0], sizes = [1, 8, 32], strides = [1, 1, 1]} : vector<8x8x32xf32> to vector<1x8x32xf32>
    %506 = vector.shape_cast %505 : vector<1x8x32xf32> to vector<8x32xf32>
    %507 = vector.shape_cast %506 : vector<8x32xf32> to vector<1x8x32xf32>
    %508 = vector.broadcast %507 : vector<1x8x32xf32> to vector<8x8x32xf32>
    %509 = arith.mulf %502, %508 : vector<8x8x32xf32>
    %cst_96 = arith.constant dense<0.000000e+00> : vector<8x8xf32>
    %510 = vector.multi_reduction <add>, %509, %cst_96 [2] : vector<8x8x32xf32> to vector<8x8xf32>
    %511 = vector.shape_cast %510 : vector<8x8xf32> to vector<8x8x1xf32>
    %c0_i32 = arith.constant 0 : i32
    %512 = vector.broadcast %c0_i32 : i32 to vector<8x8x8xi32>
    %513 = arith.cmpi eq, %503, %512 : vector<8x8x8xi32>
    %cst_97 = arith.constant 0.000000e+00 : f32
    %514 = vector.shape_cast %511 : vector<8x8x1xf32> to vector<8x8x1xf32>
    %515 = vector.broadcast %514 : vector<8x8x1xf32> to vector<8x8x8xf32>
    %516 = vector.broadcast %cst_97 : f32 to vector<8x8x8xf32>
    %517 = arith.select %513, %515, %516 : vector<8x8x8xi1>, vector<8x8x8xf32>
    %518 = arith.addf %504, %517 : vector<8x8x8xf32>
    %519 = vector.extract_strided_slice %502 {offsets = [1, 0, 0], sizes = [1, 8, 32], strides = [1, 1, 1]} : vector<8x8x32xf32> to vector<1x8x32xf32>
    %520 = vector.shape_cast %519 : vector<1x8x32xf32> to vector<8x32xf32>
    %521 = vector.shape_cast %520 : vector<8x32xf32> to vector<1x8x32xf32>
    %522 = vector.broadcast %521 : vector<1x8x32xf32> to vector<8x8x32xf32>
    %523 = arith.mulf %502, %522 : vector<8x8x32xf32>
    %cst_98 = arith.constant dense<0.000000e+00> : vector<8x8xf32>
    %524 = vector.multi_reduction <add>, %523, %cst_98 [2] : vector<8x8x32xf32> to vector<8x8xf32>
    %525 = vector.shape_cast %524 : vector<8x8xf32> to vector<8x8x1xf32>
    %c1_i32 = arith.constant 1 : i32
    %526 = vector.broadcast %c1_i32 : i32 to vector<8x8x8xi32>
    %527 = arith.cmpi eq, %503, %526 : vector<8x8x8xi32>
    %cst_99 = arith.constant 0.000000e+00 : f32
    %528 = vector.shape_cast %525 : vector<8x8x1xf32> to vector<8x8x1xf32>
    %529 = vector.broadcast %528 : vector<8x8x1xf32> to vector<8x8x8xf32>
    %530 = vector.broadcast %cst_99 : f32 to vector<8x8x8xf32>
    %531 = arith.select %527, %529, %530 : vector<8x8x8xi1>, vector<8x8x8xf32>
    %532 = arith.addf %518, %531 : vector<8x8x8xf32>
    %533 = vector.extract_strided_slice %502 {offsets = [2, 0, 0], sizes = [1, 8, 32], strides = [1, 1, 1]} : vector<8x8x32xf32> to vector<1x8x32xf32>
    %534 = vector.shape_cast %533 : vector<1x8x32xf32> to vector<8x32xf32>
    %535 = vector.shape_cast %534 : vector<8x32xf32> to vector<1x8x32xf32>
    %536 = vector.broadcast %535 : vector<1x8x32xf32> to vector<8x8x32xf32>
    %537 = arith.mulf %502, %536 : vector<8x8x32xf32>
    %cst_100 = arith.constant dense<0.000000e+00> : vector<8x8xf32>
    %538 = vector.multi_reduction <add>, %537, %cst_100 [2] : vector<8x8x32xf32> to vector<8x8xf32>
    %539 = vector.shape_cast %538 : vector<8x8xf32> to vector<8x8x1xf32>
    %c2_i32 = arith.constant 2 : i32
    %540 = vector.broadcast %c2_i32 : i32 to vector<8x8x8xi32>
    %541 = arith.cmpi eq, %503, %540 : vector<8x8x8xi32>
    %cst_101 = arith.constant 0.000000e+00 : f32
    %542 = vector.shape_cast %539 : vector<8x8x1xf32> to vector<8x8x1xf32>
    %543 = vector.broadcast %542 : vector<8x8x1xf32> to vector<8x8x8xf32>
    %544 = vector.broadcast %cst_101 : f32 to vector<8x8x8xf32>
    %545 = arith.select %541, %543, %544 : vector<8x8x8xi1>, vector<8x8x8xf32>
    %546 = arith.addf %532, %545 : vector<8x8x8xf32>
    %547 = vector.extract_strided_slice %502 {offsets = [3, 0, 0], sizes = [1, 8, 32], strides = [1, 1, 1]} : vector<8x8x32xf32> to vector<1x8x32xf32>
    %548 = vector.shape_cast %547 : vector<1x8x32xf32> to vector<8x32xf32>
    %549 = vector.shape_cast %548 : vector<8x32xf32> to vector<1x8x32xf32>
    %550 = vector.broadcast %549 : vector<1x8x32xf32> to vector<8x8x32xf32>
    %551 = arith.mulf %502, %550 : vector<8x8x32xf32>
    %cst_102 = arith.constant dense<0.000000e+00> : vector<8x8xf32>
    %552 = vector.multi_reduction <add>, %551, %cst_102 [2] : vector<8x8x32xf32> to vector<8x8xf32>
    %553 = vector.shape_cast %552 : vector<8x8xf32> to vector<8x8x1xf32>
    %c3_i32 = arith.constant 3 : i32
    %554 = vector.broadcast %c3_i32 : i32 to vector<8x8x8xi32>
    %555 = arith.cmpi eq, %503, %554 : vector<8x8x8xi32>
    %cst_103 = arith.constant 0.000000e+00 : f32
    %556 = vector.shape_cast %553 : vector<8x8x1xf32> to vector<8x8x1xf32>
    %557 = vector.broadcast %556 : vector<8x8x1xf32> to vector<8x8x8xf32>
    %558 = vector.broadcast %cst_103 : f32 to vector<8x8x8xf32>
    %559 = arith.select %555, %557, %558 : vector<8x8x8xi1>, vector<8x8x8xf32>
    %560 = arith.addf %546, %559 : vector<8x8x8xf32>
    %561 = vector.extract_strided_slice %502 {offsets = [4, 0, 0], sizes = [1, 8, 32], strides = [1, 1, 1]} : vector<8x8x32xf32> to vector<1x8x32xf32>
    %562 = vector.shape_cast %561 : vector<1x8x32xf32> to vector<8x32xf32>
    %563 = vector.shape_cast %562 : vector<8x32xf32> to vector<1x8x32xf32>
    %564 = vector.broadcast %563 : vector<1x8x32xf32> to vector<8x8x32xf32>
    %565 = arith.mulf %502, %564 : vector<8x8x32xf32>
    %cst_104 = arith.constant dense<0.000000e+00> : vector<8x8xf32>
    %566 = vector.multi_reduction <add>, %565, %cst_104 [2] : vector<8x8x32xf32> to vector<8x8xf32>
    %567 = vector.shape_cast %566 : vector<8x8xf32> to vector<8x8x1xf32>
    %c4_i32 = arith.constant 4 : i32
    %568 = vector.broadcast %c4_i32 : i32 to vector<8x8x8xi32>
    %569 = arith.cmpi eq, %503, %568 : vector<8x8x8xi32>
    %cst_105 = arith.constant 0.000000e+00 : f32
    %570 = vector.shape_cast %567 : vector<8x8x1xf32> to vector<8x8x1xf32>
    %571 = vector.broadcast %570 : vector<8x8x1xf32> to vector<8x8x8xf32>
    %572 = vector.broadcast %cst_105 : f32 to vector<8x8x8xf32>
    %573 = arith.select %569, %571, %572 : vector<8x8x8xi1>, vector<8x8x8xf32>
    %574 = arith.addf %560, %573 : vector<8x8x8xf32>
    %575 = vector.extract_strided_slice %502 {offsets = [5, 0, 0], sizes = [1, 8, 32], strides = [1, 1, 1]} : vector<8x8x32xf32> to vector<1x8x32xf32>
    %576 = vector.shape_cast %575 : vector<1x8x32xf32> to vector<8x32xf32>
    %577 = vector.shape_cast %576 : vector<8x32xf32> to vector<1x8x32xf32>
    %578 = vector.broadcast %577 : vector<1x8x32xf32> to vector<8x8x32xf32>
    %579 = arith.mulf %502, %578 : vector<8x8x32xf32>
    %cst_106 = arith.constant dense<0.000000e+00> : vector<8x8xf32>
    %580 = vector.multi_reduction <add>, %579, %cst_106 [2] : vector<8x8x32xf32> to vector<8x8xf32>
    %581 = vector.shape_cast %580 : vector<8x8xf32> to vector<8x8x1xf32>
    %c5_i32 = arith.constant 5 : i32
    %582 = vector.broadcast %c5_i32 : i32 to vector<8x8x8xi32>
    %583 = arith.cmpi eq, %503, %582 : vector<8x8x8xi32>
    %cst_107 = arith.constant 0.000000e+00 : f32
    %584 = vector.shape_cast %581 : vector<8x8x1xf32> to vector<8x8x1xf32>
    %585 = vector.broadcast %584 : vector<8x8x1xf32> to vector<8x8x8xf32>
    %586 = vector.broadcast %cst_107 : f32 to vector<8x8x8xf32>
    %587 = arith.select %583, %585, %586 : vector<8x8x8xi1>, vector<8x8x8xf32>
    %588 = arith.addf %574, %587 : vector<8x8x8xf32>
    %589 = vector.extract_strided_slice %502 {offsets = [6, 0, 0], sizes = [1, 8, 32], strides = [1, 1, 1]} : vector<8x8x32xf32> to vector<1x8x32xf32>
    %590 = vector.shape_cast %589 : vector<1x8x32xf32> to vector<8x32xf32>
    %591 = vector.shape_cast %590 : vector<8x32xf32> to vector<1x8x32xf32>
    %592 = vector.broadcast %591 : vector<1x8x32xf32> to vector<8x8x32xf32>
    %593 = arith.mulf %502, %592 : vector<8x8x32xf32>
    %cst_108 = arith.constant dense<0.000000e+00> : vector<8x8xf32>
    %594 = vector.multi_reduction <add>, %593, %cst_108 [2] : vector<8x8x32xf32> to vector<8x8xf32>
    %595 = vector.shape_cast %594 : vector<8x8xf32> to vector<8x8x1xf32>
    %c6_i32 = arith.constant 6 : i32
    %596 = vector.broadcast %c6_i32 : i32 to vector<8x8x8xi32>
    %597 = arith.cmpi eq, %503, %596 : vector<8x8x8xi32>
    %cst_109 = arith.constant 0.000000e+00 : f32
    %598 = vector.shape_cast %595 : vector<8x8x1xf32> to vector<8x8x1xf32>
    %599 = vector.broadcast %598 : vector<8x8x1xf32> to vector<8x8x8xf32>
    %600 = vector.broadcast %cst_109 : f32 to vector<8x8x8xf32>
    %601 = arith.select %597, %599, %600 : vector<8x8x8xi1>, vector<8x8x8xf32>
    %602 = arith.addf %588, %601 : vector<8x8x8xf32>
    %603 = vector.extract_strided_slice %502 {offsets = [7, 0, 0], sizes = [1, 8, 32], strides = [1, 1, 1]} : vector<8x8x32xf32> to vector<1x8x32xf32>
    %604 = vector.shape_cast %603 : vector<1x8x32xf32> to vector<8x32xf32>
    %605 = vector.shape_cast %604 : vector<8x32xf32> to vector<1x8x32xf32>
    %606 = vector.broadcast %605 : vector<1x8x32xf32> to vector<8x8x32xf32>
    %607 = arith.mulf %502, %606 : vector<8x8x32xf32>
    %cst_110 = arith.constant dense<0.000000e+00> : vector<8x8xf32>
    %608 = vector.multi_reduction <add>, %607, %cst_110 [2] : vector<8x8x32xf32> to vector<8x8xf32>
    %609 = vector.shape_cast %608 : vector<8x8xf32> to vector<8x8x1xf32>
    %c7_i32 = arith.constant 7 : i32
    %610 = vector.broadcast %c7_i32 : i32 to vector<8x8x8xi32>
    %611 = arith.cmpi eq, %503, %610 : vector<8x8x8xi32>
    %cst_111 = arith.constant 0.000000e+00 : f32
    %612 = vector.shape_cast %609 : vector<8x8x1xf32> to vector<8x8x1xf32>
    %613 = vector.broadcast %612 : vector<8x8x1xf32> to vector<8x8x8xf32>
    %614 = vector.broadcast %cst_111 : f32 to vector<8x8x8xf32>
    %615 = arith.select %611, %613, %614 : vector<8x8x8xi1>, vector<8x8x8xf32>
    %616 = arith.addf %602, %615 : vector<8x8x8xf32>
    %cst_112 = arith.constant 0.000000e+00 : f32
    %617 = vector.broadcast %cst_112 : f32 to vector<8x8x1xf32>
    %cst_113 = arith.constant 0.000000e+00 : f32
    %618 = vector.broadcast %cst_113 : f32 to vector<8x8x1xf32>
    %cst_114 = arith.constant 0.000000e+00 : f32
    %619 = vector.broadcast %cst_114 : f32 to vector<8x8x1xf32>
    %cst_115 = arith.constant dense<0xFF800000> : vector<8x8xf32>
    %620 = vector.multi_reduction <maximumf>, %616, %cst_115 [2] : vector<8x8x8xf32> to vector<8x8xf32>
    %621 = vector.shape_cast %620 : vector<8x8xf32> to vector<8x8x1xf32>
    %622 = arith.addf %617, %621 : vector<8x8x1xf32>
    %cst_116 = arith.constant 1.000000e+00 : f32
    %623 = vector.broadcast %cst_116 : f32 to vector<8x8x1xf32>
    %624 = arith.subf %622, %623 : vector<8x8x1xf32>
    %cst_117 = arith.constant 1.000000e+00 : f32
    %625 = vector.broadcast %cst_117 : f32 to vector<8x8x1xf32>
    %626 = arith.divf %624, %625 : vector<8x8x1xf32>
    %627 = arith.subf %621, %626 : vector<8x8x1xf32>
    %cst_118 = arith.constant 0.000000e+00 : f32
    %628 = vector.broadcast %cst_118 : f32 to vector<8x8x1xf32>
    %629 = arith.cmpf ogt, %627, %628 : vector<8x8x1xf32>
    %630 = arith.extui %629 : vector<8x8x1xi1> to vector<8x8x1xi32>
    %631 = arith.sitofp %630 : vector<8x8x1xi32> to vector<8x8x1xf32>
    %632 = arith.addf %618, %631 : vector<8x8x1xf32>
    %633 = arith.select %629, %622, %619 : vector<8x8x1xi1>, vector<8x8x1xf32>
    %634 = vector.broadcast %621 : vector<8x8x1xf32> to vector<8x8x8xf32>
    %635 = arith.cmpf oeq, %616, %634 : vector<8x8x8xf32>
    %c8_i32 = arith.constant 8 : i32
    %636 = vector.broadcast %c8_i32 : i32 to vector<8x8x8xi32>
    %637 = arith.select %635, %503, %636 : vector<8x8x8xi1>, vector<8x8x8xi32>
    %cst_119 = arith.constant dense<2147483647> : vector<8x8xi32>
    %638 = vector.multi_reduction <minsi>, %637, %cst_119 [2] : vector<8x8x8xi32> to vector<8x8xi32>
    %639 = vector.shape_cast %638 : vector<8x8xi32> to vector<8x8x1xi32>
    %640 = vector.broadcast %639 : vector<8x8x1xi32> to vector<8x8x8xi32>
    %641 = arith.cmpi eq, %503, %640 : vector<8x8x8xi32>
    %cst_120 = arith.constant -1.000000e+30 : f32
    %642 = vector.broadcast %cst_120 : f32 to vector<8x8x8xf32>
    %643 = arith.select %641, %642, %616 : vector<8x8x8xi1>, vector<8x8x8xf32>
    %cst_121 = arith.constant dense<0xFF800000> : vector<8x8xf32>
    %644 = vector.multi_reduction <maximumf>, %643, %cst_121 [2] : vector<8x8x8xf32> to vector<8x8xf32>
    %645 = vector.shape_cast %644 : vector<8x8xf32> to vector<8x8x1xf32>
    %646 = arith.addf %622, %645 : vector<8x8x1xf32>
    %cst_122 = arith.constant 1.000000e+00 : f32
    %647 = vector.broadcast %cst_122 : f32 to vector<8x8x1xf32>
    %648 = arith.subf %646, %647 : vector<8x8x1xf32>
    %cst_123 = arith.constant 2.000000e+00 : f32
    %649 = vector.broadcast %cst_123 : f32 to vector<8x8x1xf32>
    %650 = arith.divf %648, %649 : vector<8x8x1xf32>
    %651 = arith.subf %645, %650 : vector<8x8x1xf32>
    %cst_124 = arith.constant 0.000000e+00 : f32
    %652 = vector.broadcast %cst_124 : f32 to vector<8x8x1xf32>
    %653 = arith.cmpf ogt, %651, %652 : vector<8x8x1xf32>
    %654 = arith.extui %653 : vector<8x8x1xi1> to vector<8x8x1xi32>
    %655 = arith.sitofp %654 : vector<8x8x1xi32> to vector<8x8x1xf32>
    %656 = arith.addf %632, %655 : vector<8x8x1xf32>
    %657 = arith.select %653, %646, %633 : vector<8x8x1xi1>, vector<8x8x1xf32>
    %658 = vector.broadcast %645 : vector<8x8x1xf32> to vector<8x8x8xf32>
    %659 = arith.cmpf oeq, %643, %658 : vector<8x8x8xf32>
    %c8_i32_125 = arith.constant 8 : i32
    %660 = vector.broadcast %c8_i32_125 : i32 to vector<8x8x8xi32>
    %661 = arith.select %659, %503, %660 : vector<8x8x8xi1>, vector<8x8x8xi32>
    %cst_126 = arith.constant dense<2147483647> : vector<8x8xi32>
    %662 = vector.multi_reduction <minsi>, %661, %cst_126 [2] : vector<8x8x8xi32> to vector<8x8xi32>
    %663 = vector.shape_cast %662 : vector<8x8xi32> to vector<8x8x1xi32>
    %664 = vector.broadcast %663 : vector<8x8x1xi32> to vector<8x8x8xi32>
    %665 = arith.cmpi eq, %503, %664 : vector<8x8x8xi32>
    %cst_127 = arith.constant -1.000000e+30 : f32
    %666 = vector.broadcast %cst_127 : f32 to vector<8x8x8xf32>
    %667 = arith.select %665, %666, %643 : vector<8x8x8xi1>, vector<8x8x8xf32>
    %cst_128 = arith.constant dense<0xFF800000> : vector<8x8xf32>
    %668 = vector.multi_reduction <maximumf>, %667, %cst_128 [2] : vector<8x8x8xf32> to vector<8x8xf32>
    %669 = vector.shape_cast %668 : vector<8x8xf32> to vector<8x8x1xf32>
    %670 = arith.addf %646, %669 : vector<8x8x1xf32>
    %cst_129 = arith.constant 1.000000e+00 : f32
    %671 = vector.broadcast %cst_129 : f32 to vector<8x8x1xf32>
    %672 = arith.subf %670, %671 : vector<8x8x1xf32>
    %cst_130 = arith.constant 3.000000e+00 : f32
    %673 = vector.broadcast %cst_130 : f32 to vector<8x8x1xf32>
    %674 = arith.divf %672, %673 : vector<8x8x1xf32>
    %675 = arith.subf %669, %674 : vector<8x8x1xf32>
    %cst_131 = arith.constant 0.000000e+00 : f32
    %676 = vector.broadcast %cst_131 : f32 to vector<8x8x1xf32>
    %677 = arith.cmpf ogt, %675, %676 : vector<8x8x1xf32>
    %678 = arith.extui %677 : vector<8x8x1xi1> to vector<8x8x1xi32>
    %679 = arith.sitofp %678 : vector<8x8x1xi32> to vector<8x8x1xf32>
    %680 = arith.addf %656, %679 : vector<8x8x1xf32>
    %681 = arith.select %677, %670, %657 : vector<8x8x1xi1>, vector<8x8x1xf32>
    %682 = vector.broadcast %669 : vector<8x8x1xf32> to vector<8x8x8xf32>
    %683 = arith.cmpf oeq, %667, %682 : vector<8x8x8xf32>
    %c8_i32_132 = arith.constant 8 : i32
    %684 = vector.broadcast %c8_i32_132 : i32 to vector<8x8x8xi32>
    %685 = arith.select %683, %503, %684 : vector<8x8x8xi1>, vector<8x8x8xi32>
    %cst_133 = arith.constant dense<2147483647> : vector<8x8xi32>
    %686 = vector.multi_reduction <minsi>, %685, %cst_133 [2] : vector<8x8x8xi32> to vector<8x8xi32>
    %687 = vector.shape_cast %686 : vector<8x8xi32> to vector<8x8x1xi32>
    %688 = vector.broadcast %687 : vector<8x8x1xi32> to vector<8x8x8xi32>
    %689 = arith.cmpi eq, %503, %688 : vector<8x8x8xi32>
    %cst_134 = arith.constant -1.000000e+30 : f32
    %690 = vector.broadcast %cst_134 : f32 to vector<8x8x8xf32>
    %691 = arith.select %689, %690, %667 : vector<8x8x8xi1>, vector<8x8x8xf32>
    %cst_135 = arith.constant dense<0xFF800000> : vector<8x8xf32>
    %692 = vector.multi_reduction <maximumf>, %691, %cst_135 [2] : vector<8x8x8xf32> to vector<8x8xf32>
    %693 = vector.shape_cast %692 : vector<8x8xf32> to vector<8x8x1xf32>
    %694 = arith.addf %670, %693 : vector<8x8x1xf32>
    %cst_136 = arith.constant 1.000000e+00 : f32
    %695 = vector.broadcast %cst_136 : f32 to vector<8x8x1xf32>
    %696 = arith.subf %694, %695 : vector<8x8x1xf32>
    %cst_137 = arith.constant 4.000000e+00 : f32
    %697 = vector.broadcast %cst_137 : f32 to vector<8x8x1xf32>
    %698 = arith.divf %696, %697 : vector<8x8x1xf32>
    %699 = arith.subf %693, %698 : vector<8x8x1xf32>
    %cst_138 = arith.constant 0.000000e+00 : f32
    %700 = vector.broadcast %cst_138 : f32 to vector<8x8x1xf32>
    %701 = arith.cmpf ogt, %699, %700 : vector<8x8x1xf32>
    %702 = arith.extui %701 : vector<8x8x1xi1> to vector<8x8x1xi32>
    %703 = arith.sitofp %702 : vector<8x8x1xi32> to vector<8x8x1xf32>
    %704 = arith.addf %680, %703 : vector<8x8x1xf32>
    %705 = arith.select %701, %694, %681 : vector<8x8x1xi1>, vector<8x8x1xf32>
    %706 = vector.broadcast %693 : vector<8x8x1xf32> to vector<8x8x8xf32>
    %707 = arith.cmpf oeq, %691, %706 : vector<8x8x8xf32>
    %c8_i32_139 = arith.constant 8 : i32
    %708 = vector.broadcast %c8_i32_139 : i32 to vector<8x8x8xi32>
    %709 = arith.select %707, %503, %708 : vector<8x8x8xi1>, vector<8x8x8xi32>
    %cst_140 = arith.constant dense<2147483647> : vector<8x8xi32>
    %710 = vector.multi_reduction <minsi>, %709, %cst_140 [2] : vector<8x8x8xi32> to vector<8x8xi32>
    %711 = vector.shape_cast %710 : vector<8x8xi32> to vector<8x8x1xi32>
    %712 = vector.broadcast %711 : vector<8x8x1xi32> to vector<8x8x8xi32>
    %713 = arith.cmpi eq, %503, %712 : vector<8x8x8xi32>
    %cst_141 = arith.constant -1.000000e+30 : f32
    %714 = vector.broadcast %cst_141 : f32 to vector<8x8x8xf32>
    %715 = arith.select %713, %714, %691 : vector<8x8x8xi1>, vector<8x8x8xf32>
    %cst_142 = arith.constant dense<0xFF800000> : vector<8x8xf32>
    %716 = vector.multi_reduction <maximumf>, %715, %cst_142 [2] : vector<8x8x8xf32> to vector<8x8xf32>
    %717 = vector.shape_cast %716 : vector<8x8xf32> to vector<8x8x1xf32>
    %718 = arith.addf %694, %717 : vector<8x8x1xf32>
    %cst_143 = arith.constant 1.000000e+00 : f32
    %719 = vector.broadcast %cst_143 : f32 to vector<8x8x1xf32>
    %720 = arith.subf %718, %719 : vector<8x8x1xf32>
    %cst_144 = arith.constant 5.000000e+00 : f32
    %721 = vector.broadcast %cst_144 : f32 to vector<8x8x1xf32>
    %722 = arith.divf %720, %721 : vector<8x8x1xf32>
    %723 = arith.subf %717, %722 : vector<8x8x1xf32>
    %cst_145 = arith.constant 0.000000e+00 : f32
    %724 = vector.broadcast %cst_145 : f32 to vector<8x8x1xf32>
    %725 = arith.cmpf ogt, %723, %724 : vector<8x8x1xf32>
    %726 = arith.extui %725 : vector<8x8x1xi1> to vector<8x8x1xi32>
    %727 = arith.sitofp %726 : vector<8x8x1xi32> to vector<8x8x1xf32>
    %728 = arith.addf %704, %727 : vector<8x8x1xf32>
    %729 = arith.select %725, %718, %705 : vector<8x8x1xi1>, vector<8x8x1xf32>
    %730 = vector.broadcast %717 : vector<8x8x1xf32> to vector<8x8x8xf32>
    %731 = arith.cmpf oeq, %715, %730 : vector<8x8x8xf32>
    %c8_i32_146 = arith.constant 8 : i32
    %732 = vector.broadcast %c8_i32_146 : i32 to vector<8x8x8xi32>
    %733 = arith.select %731, %503, %732 : vector<8x8x8xi1>, vector<8x8x8xi32>
    %cst_147 = arith.constant dense<2147483647> : vector<8x8xi32>
    %734 = vector.multi_reduction <minsi>, %733, %cst_147 [2] : vector<8x8x8xi32> to vector<8x8xi32>
    %735 = vector.shape_cast %734 : vector<8x8xi32> to vector<8x8x1xi32>
    %736 = vector.broadcast %735 : vector<8x8x1xi32> to vector<8x8x8xi32>
    %737 = arith.cmpi eq, %503, %736 : vector<8x8x8xi32>
    %cst_148 = arith.constant -1.000000e+30 : f32
    %738 = vector.broadcast %cst_148 : f32 to vector<8x8x8xf32>
    %739 = arith.select %737, %738, %715 : vector<8x8x8xi1>, vector<8x8x8xf32>
    %cst_149 = arith.constant dense<0xFF800000> : vector<8x8xf32>
    %740 = vector.multi_reduction <maximumf>, %739, %cst_149 [2] : vector<8x8x8xf32> to vector<8x8xf32>
    %741 = vector.shape_cast %740 : vector<8x8xf32> to vector<8x8x1xf32>
    %742 = arith.addf %718, %741 : vector<8x8x1xf32>
    %cst_150 = arith.constant 1.000000e+00 : f32
    %743 = vector.broadcast %cst_150 : f32 to vector<8x8x1xf32>
    %744 = arith.subf %742, %743 : vector<8x8x1xf32>
    %cst_151 = arith.constant 6.000000e+00 : f32
    %745 = vector.broadcast %cst_151 : f32 to vector<8x8x1xf32>
    %746 = arith.divf %744, %745 : vector<8x8x1xf32>
    %747 = arith.subf %741, %746 : vector<8x8x1xf32>
    %cst_152 = arith.constant 0.000000e+00 : f32
    %748 = vector.broadcast %cst_152 : f32 to vector<8x8x1xf32>
    %749 = arith.cmpf ogt, %747, %748 : vector<8x8x1xf32>
    %750 = arith.extui %749 : vector<8x8x1xi1> to vector<8x8x1xi32>
    %751 = arith.sitofp %750 : vector<8x8x1xi32> to vector<8x8x1xf32>
    %752 = arith.addf %728, %751 : vector<8x8x1xf32>
    %753 = arith.select %749, %742, %729 : vector<8x8x1xi1>, vector<8x8x1xf32>
    %754 = vector.broadcast %741 : vector<8x8x1xf32> to vector<8x8x8xf32>
    %755 = arith.cmpf oeq, %739, %754 : vector<8x8x8xf32>
    %c8_i32_153 = arith.constant 8 : i32
    %756 = vector.broadcast %c8_i32_153 : i32 to vector<8x8x8xi32>
    %757 = arith.select %755, %503, %756 : vector<8x8x8xi1>, vector<8x8x8xi32>
    %cst_154 = arith.constant dense<2147483647> : vector<8x8xi32>
    %758 = vector.multi_reduction <minsi>, %757, %cst_154 [2] : vector<8x8x8xi32> to vector<8x8xi32>
    %759 = vector.shape_cast %758 : vector<8x8xi32> to vector<8x8x1xi32>
    %760 = vector.broadcast %759 : vector<8x8x1xi32> to vector<8x8x8xi32>
    %761 = arith.cmpi eq, %503, %760 : vector<8x8x8xi32>
    %cst_155 = arith.constant -1.000000e+30 : f32
    %762 = vector.broadcast %cst_155 : f32 to vector<8x8x8xf32>
    %763 = arith.select %761, %762, %739 : vector<8x8x8xi1>, vector<8x8x8xf32>
    %cst_156 = arith.constant dense<0xFF800000> : vector<8x8xf32>
    %764 = vector.multi_reduction <maximumf>, %763, %cst_156 [2] : vector<8x8x8xf32> to vector<8x8xf32>
    %765 = vector.shape_cast %764 : vector<8x8xf32> to vector<8x8x1xf32>
    %766 = arith.addf %742, %765 : vector<8x8x1xf32>
    %cst_157 = arith.constant 1.000000e+00 : f32
    %767 = vector.broadcast %cst_157 : f32 to vector<8x8x1xf32>
    %768 = arith.subf %766, %767 : vector<8x8x1xf32>
    %cst_158 = arith.constant 7.000000e+00 : f32
    %769 = vector.broadcast %cst_158 : f32 to vector<8x8x1xf32>
    %770 = arith.divf %768, %769 : vector<8x8x1xf32>
    %771 = arith.subf %765, %770 : vector<8x8x1xf32>
    %cst_159 = arith.constant 0.000000e+00 : f32
    %772 = vector.broadcast %cst_159 : f32 to vector<8x8x1xf32>
    %773 = arith.cmpf ogt, %771, %772 : vector<8x8x1xf32>
    %774 = arith.extui %773 : vector<8x8x1xi1> to vector<8x8x1xi32>
    %775 = arith.sitofp %774 : vector<8x8x1xi32> to vector<8x8x1xf32>
    %776 = arith.addf %752, %775 : vector<8x8x1xf32>
    %777 = arith.select %773, %766, %753 : vector<8x8x1xi1>, vector<8x8x1xf32>
    %778 = vector.broadcast %765 : vector<8x8x1xf32> to vector<8x8x8xf32>
    %779 = arith.cmpf oeq, %763, %778 : vector<8x8x8xf32>
    %c8_i32_160 = arith.constant 8 : i32
    %780 = vector.broadcast %c8_i32_160 : i32 to vector<8x8x8xi32>
    %781 = arith.select %779, %503, %780 : vector<8x8x8xi1>, vector<8x8x8xi32>
    %cst_161 = arith.constant dense<2147483647> : vector<8x8xi32>
    %782 = vector.multi_reduction <minsi>, %781, %cst_161 [2] : vector<8x8x8xi32> to vector<8x8xi32>
    %783 = vector.shape_cast %782 : vector<8x8xi32> to vector<8x8x1xi32>
    %784 = vector.broadcast %783 : vector<8x8x1xi32> to vector<8x8x8xi32>
    %785 = arith.cmpi eq, %503, %784 : vector<8x8x8xi32>
    %cst_162 = arith.constant -1.000000e+30 : f32
    %786 = vector.broadcast %cst_162 : f32 to vector<8x8x8xf32>
    %787 = arith.select %785, %786, %763 : vector<8x8x8xi1>, vector<8x8x8xf32>
    %cst_163 = arith.constant dense<0xFF800000> : vector<8x8xf32>
    %788 = vector.multi_reduction <maximumf>, %787, %cst_163 [2] : vector<8x8x8xf32> to vector<8x8xf32>
    %789 = vector.shape_cast %788 : vector<8x8xf32> to vector<8x8x1xf32>
    %790 = arith.addf %766, %789 : vector<8x8x1xf32>
    %cst_164 = arith.constant 1.000000e+00 : f32
    %791 = vector.broadcast %cst_164 : f32 to vector<8x8x1xf32>
    %792 = arith.subf %790, %791 : vector<8x8x1xf32>
    %cst_165 = arith.constant 8.000000e+00 : f32
    %793 = vector.broadcast %cst_165 : f32 to vector<8x8x1xf32>
    %794 = arith.divf %792, %793 : vector<8x8x1xf32>
    %795 = arith.subf %789, %794 : vector<8x8x1xf32>
    %cst_166 = arith.constant 0.000000e+00 : f32
    %796 = vector.broadcast %cst_166 : f32 to vector<8x8x1xf32>
    %797 = arith.cmpf ogt, %795, %796 : vector<8x8x1xf32>
    %798 = arith.extui %797 : vector<8x8x1xi1> to vector<8x8x1xi32>
    %799 = arith.sitofp %798 : vector<8x8x1xi32> to vector<8x8x1xf32>
    %800 = arith.addf %776, %799 : vector<8x8x1xf32>
    %801 = arith.select %797, %790, %777 : vector<8x8x1xi1>, vector<8x8x1xf32>
    %cst_167 = arith.constant 2.000000e+00 : f32
    %802 = vector.broadcast %cst_167 : f32 to vector<8x8x1xf32>
    %803 = arith.subf %801, %802 : vector<8x8x1xf32>
    %804 = arith.divf %803, %800 : vector<8x8x1xf32>
    %805 = vector.broadcast %804 : vector<8x8x1xf32> to vector<8x8x8xf32>
    %806 = arith.subf %616, %805 : vector<8x8x8xf32>
    %cst_168 = arith.constant 0.000000e+00 : f32
    %807 = vector.broadcast %cst_168 : f32 to vector<8x8x8xf32>
    %808 = arith.maximumf %806, %807 : vector<8x8x8xf32>
    %cst_169 = arith.constant dense<0.000000e+00> : vector<8x8xf32>
    %809 = vector.multi_reduction <add>, %808, %cst_169 [2] : vector<8x8x8xf32> to vector<8x8xf32>
    %810 = vector.shape_cast %809 : vector<8x8xf32> to vector<8x8x1xf32>
    %cst_170 = arith.constant 9.99999996E-13 : f32
    %811 = vector.broadcast %cst_170 : f32 to vector<8x8x1xf32>
    %812 = arith.maximumf %810, %811 : vector<8x8x1xf32>
    %813 = vector.broadcast %812 : vector<8x8x1xf32> to vector<8x8x8xf32>
    %814 = arith.divf %808, %813 : vector<8x8x8xf32>
    %cst_171 = arith.constant 0.000000e+00 : f32
    %815 = vector.broadcast %cst_171 : f32 to vector<8x8x32xf32>
    %816 = vector.extract_strided_slice %814 {offsets = [0, 0, 0], sizes = [8, 8, 1], strides = [1, 1, 1]} : vector<8x8x8xf32> to vector<8x8x1xf32>
    %817 = vector.extract_strided_slice %502 {offsets = [0, 0, 0], sizes = [1, 8, 32], strides = [1, 1, 1]} : vector<8x8x32xf32> to vector<1x8x32xf32>
    %818 = vector.shape_cast %817 : vector<1x8x32xf32> to vector<8x32xf32>
    %819 = vector.shape_cast %818 : vector<8x32xf32> to vector<1x8x32xf32>
    %820 = vector.broadcast %816 : vector<8x8x1xf32> to vector<8x8x32xf32>
    %821 = vector.broadcast %819 : vector<1x8x32xf32> to vector<8x8x32xf32>
    %822 = arith.mulf %820, %821 : vector<8x8x32xf32>
    %823 = arith.addf %815, %822 : vector<8x8x32xf32>
    %824 = vector.extract_strided_slice %814 {offsets = [0, 0, 1], sizes = [8, 8, 1], strides = [1, 1, 1]} : vector<8x8x8xf32> to vector<8x8x1xf32>
    %825 = vector.extract_strided_slice %502 {offsets = [1, 0, 0], sizes = [1, 8, 32], strides = [1, 1, 1]} : vector<8x8x32xf32> to vector<1x8x32xf32>
    %826 = vector.shape_cast %825 : vector<1x8x32xf32> to vector<8x32xf32>
    %827 = vector.shape_cast %826 : vector<8x32xf32> to vector<1x8x32xf32>
    %828 = vector.broadcast %824 : vector<8x8x1xf32> to vector<8x8x32xf32>
    %829 = vector.broadcast %827 : vector<1x8x32xf32> to vector<8x8x32xf32>
    %830 = arith.mulf %828, %829 : vector<8x8x32xf32>
    %831 = arith.addf %823, %830 : vector<8x8x32xf32>
    %832 = vector.extract_strided_slice %814 {offsets = [0, 0, 2], sizes = [8, 8, 1], strides = [1, 1, 1]} : vector<8x8x8xf32> to vector<8x8x1xf32>
    %833 = vector.extract_strided_slice %502 {offsets = [2, 0, 0], sizes = [1, 8, 32], strides = [1, 1, 1]} : vector<8x8x32xf32> to vector<1x8x32xf32>
    %834 = vector.shape_cast %833 : vector<1x8x32xf32> to vector<8x32xf32>
    %835 = vector.shape_cast %834 : vector<8x32xf32> to vector<1x8x32xf32>
    %836 = vector.broadcast %832 : vector<8x8x1xf32> to vector<8x8x32xf32>
    %837 = vector.broadcast %835 : vector<1x8x32xf32> to vector<8x8x32xf32>
    %838 = arith.mulf %836, %837 : vector<8x8x32xf32>
    %839 = arith.addf %831, %838 : vector<8x8x32xf32>
    %840 = vector.extract_strided_slice %814 {offsets = [0, 0, 3], sizes = [8, 8, 1], strides = [1, 1, 1]} : vector<8x8x8xf32> to vector<8x8x1xf32>
    %841 = vector.extract_strided_slice %502 {offsets = [3, 0, 0], sizes = [1, 8, 32], strides = [1, 1, 1]} : vector<8x8x32xf32> to vector<1x8x32xf32>
    %842 = vector.shape_cast %841 : vector<1x8x32xf32> to vector<8x32xf32>
    %843 = vector.shape_cast %842 : vector<8x32xf32> to vector<1x8x32xf32>
    %844 = vector.broadcast %840 : vector<8x8x1xf32> to vector<8x8x32xf32>
    %845 = vector.broadcast %843 : vector<1x8x32xf32> to vector<8x8x32xf32>
    %846 = arith.mulf %844, %845 : vector<8x8x32xf32>
    %847 = arith.addf %839, %846 : vector<8x8x32xf32>
    %848 = vector.extract_strided_slice %814 {offsets = [0, 0, 4], sizes = [8, 8, 1], strides = [1, 1, 1]} : vector<8x8x8xf32> to vector<8x8x1xf32>
    %849 = vector.extract_strided_slice %502 {offsets = [4, 0, 0], sizes = [1, 8, 32], strides = [1, 1, 1]} : vector<8x8x32xf32> to vector<1x8x32xf32>
    %850 = vector.shape_cast %849 : vector<1x8x32xf32> to vector<8x32xf32>
    %851 = vector.shape_cast %850 : vector<8x32xf32> to vector<1x8x32xf32>
    %852 = vector.broadcast %848 : vector<8x8x1xf32> to vector<8x8x32xf32>
    %853 = vector.broadcast %851 : vector<1x8x32xf32> to vector<8x8x32xf32>
    %854 = arith.mulf %852, %853 : vector<8x8x32xf32>
    %855 = arith.addf %847, %854 : vector<8x8x32xf32>
    %856 = vector.extract_strided_slice %814 {offsets = [0, 0, 5], sizes = [8, 8, 1], strides = [1, 1, 1]} : vector<8x8x8xf32> to vector<8x8x1xf32>
    %857 = vector.extract_strided_slice %502 {offsets = [5, 0, 0], sizes = [1, 8, 32], strides = [1, 1, 1]} : vector<8x8x32xf32> to vector<1x8x32xf32>
    %858 = vector.shape_cast %857 : vector<1x8x32xf32> to vector<8x32xf32>
    %859 = vector.shape_cast %858 : vector<8x32xf32> to vector<1x8x32xf32>
    %860 = vector.broadcast %856 : vector<8x8x1xf32> to vector<8x8x32xf32>
    %861 = vector.broadcast %859 : vector<1x8x32xf32> to vector<8x8x32xf32>
    %862 = arith.mulf %860, %861 : vector<8x8x32xf32>
    %863 = arith.addf %855, %862 : vector<8x8x32xf32>
    %864 = vector.extract_strided_slice %814 {offsets = [0, 0, 6], sizes = [8, 8, 1], strides = [1, 1, 1]} : vector<8x8x8xf32> to vector<8x8x1xf32>
    %865 = vector.extract_strided_slice %502 {offsets = [6, 0, 0], sizes = [1, 8, 32], strides = [1, 1, 1]} : vector<8x8x32xf32> to vector<1x8x32xf32>
    %866 = vector.shape_cast %865 : vector<1x8x32xf32> to vector<8x32xf32>
    %867 = vector.shape_cast %866 : vector<8x32xf32> to vector<1x8x32xf32>
    %868 = vector.broadcast %864 : vector<8x8x1xf32> to vector<8x8x32xf32>
    %869 = vector.broadcast %867 : vector<1x8x32xf32> to vector<8x8x32xf32>
    %870 = arith.mulf %868, %869 : vector<8x8x32xf32>
    %871 = arith.addf %863, %870 : vector<8x8x32xf32>
    %872 = vector.extract_strided_slice %814 {offsets = [0, 0, 7], sizes = [8, 8, 1], strides = [1, 1, 1]} : vector<8x8x8xf32> to vector<8x8x1xf32>
    %873 = vector.extract_strided_slice %502 {offsets = [7, 0, 0], sizes = [1, 8, 32], strides = [1, 1, 1]} : vector<8x8x32xf32> to vector<1x8x32xf32>
    %874 = vector.shape_cast %873 : vector<1x8x32xf32> to vector<8x32xf32>
    %875 = vector.shape_cast %874 : vector<8x32xf32> to vector<1x8x32xf32>
    %876 = vector.broadcast %872 : vector<8x8x1xf32> to vector<8x8x32xf32>
    %877 = vector.broadcast %875 : vector<1x8x32xf32> to vector<8x8x32xf32>
    %878 = arith.mulf %876, %877 : vector<8x8x32xf32>
    %879 = arith.addf %871, %878 : vector<8x8x32xf32>
    %880 = vector.shape_cast %879 : vector<8x8x32xf32> to vector<64x32xf32>
    %c0_172 = arith.constant 0 : index
    %c0_173 = arith.constant 0 : index
    %881 = vector.load %arg4[%c0_172, %c0_173] : memref<32x32xf32, #tpu.memory_space<vmem>>, vector<32x32xf32>
    %cst_174 = arith.constant dense<0.000000e+00> : vector<64x32xf32>
    %882 = tpu.matmul %7, %881, %cst_174 {dimension_numbers = #tpu.dot_dimension_numbers<[1], [0], [0], [1], [0, 0, 1, 1], [], []>} : vector<64x32xf32>, vector<32x32xf32>, vector<64x32xf32> -> vector<64x32xf32>
    %c0_175 = arith.constant 0 : index
    %c0_176 = arith.constant 0 : index
    %883 = vector.load %arg5[%c0_175, %c0_176] : memref<1x32xf32, #tpu.memory_space<vmem>>, vector<1x32xf32>
    %884 = vector.broadcast %883 : vector<1x32xf32> to vector<64x32xf32>
    %885 = arith.addf %882, %884 : vector<64x32xf32>
    %886 = arith.addf %880, %885 : vector<64x32xf32>
    %c0_177 = arith.constant 0 : index
    %c0_178 = arith.constant 0 : index
    %887 = vector.load %arg12[%c0_177, %c0_178] : memref<32x128xf32, #tpu.memory_space<vmem>>, vector<32x128xf32>
    %cst_179 = arith.constant dense<0.000000e+00> : vector<64x128xf32>
    %888 = tpu.matmul %886, %887, %cst_179 {dimension_numbers = #tpu.dot_dimension_numbers<[1], [0], [0], [1], [0, 0, 1, 1], [], []>} : vector<64x32xf32>, vector<32x128xf32>, vector<64x128xf32> -> vector<64x128xf32>
    %c0_180 = arith.constant 0 : index
    %c0_181 = arith.constant 0 : index
    %889 = vector.load %arg13[%c0_180, %c0_181] : memref<1x128xf32, #tpu.memory_space<vmem>>, vector<1x128xf32>
    %890 = vector.broadcast %889 : vector<1x128xf32> to vector<64x128xf32>
    %891 = arith.addf %888, %890 : vector<64x128xf32>
    %c0_182 = arith.constant 0 : index
    %c0_183 = arith.constant 0 : index
    %892 = vector.load %arg14[%c0_182, %c0_183] : memref<64x128xf32, #tpu.memory_space<vmem>>, vector<64x128xf32>
    tpu.vector_store %arg14[%c0_182, %c0_183], %891 {strides = array<i32>} : memref<64x128xf32, #tpu.memory_space<vmem>>, vector<64x128xf32>,
    return
  }
  func.func @transform_0(%arg0: i32) -> (i32, i32) {
    %c0_i32 = arith.constant 0 : i32
    %c0_i32_0 = arith.constant 0 : i32
    return %arg0, %c0_i32 : i32, i32
  }
  func.func @transform_1(%arg0: i32) -> (i32, i32) {
    %c0_i32 = arith.constant 0 : i32
    %c0_i32_0 = arith.constant 0 : i32
    %c0_i32_1 = arith.constant 0 : i32
    return %c0_i32, %c0_i32_0 : i32, i32
  }
  func.func @transform_2(%arg0: i32) -> (i32, i32) {
    %c0_i32 = arith.constant 0 : i32
    %c0_i32_0 = arith.constant 0 : i32
    %c0_i32_1 = arith.constant 0 : i32
    return %c0_i32, %c0_i32_0 : i32, i32
  }
  func.func @transform_3(%arg0: i32) -> (i32, i32) {
    %c0_i32 = arith.constant 0 : i32
    %c0_i32_0 = arith.constant 0 : i32
    %c0_i32_1 = arith.constant 0 : i32
    return %c0_i32, %c0_i32_0 : i32, i32
  }
  func.func @transform_4(%arg0: i32) -> (i32, i32) {
    %c0_i32 = arith.constant 0 : i32
    %c0_i32_0 = arith.constant 0 : i32
    %c0_i32_1 = arith.constant 0 : i32
    return %c0_i32, %c0_i32_0 : i32, i32
  }
  func.func @transform_5(%arg0: i32) -> (i32, i32) {
    %c0_i32 = arith.constant 0 : i32
    %c0_i32_0 = arith.constant 0 : i32
    %c0_i32_1 = arith.constant 0 : i32
    return %c0_i32, %c0_i32_0 : i32, i32
  }
  func.func @transform_6(%arg0: i32) -> (i32, i32) {
    %c0_i32 = arith.constant 0 : i32
    %c0_i32_0 = arith.constant 0 : i32
    %c0_i32_1 = arith.constant 0 : i32
    return %c0_i32, %c0_i32_0 : i32, i32
  }
  func.func @transform_7(%arg0: i32) -> (i32, i32) {
    %c0_i32 = arith.constant 0 : i32
    %c0_i32_0 = arith.constant 0 : i32
    %c0_i32_1 = arith.constant 0 : i32
    return %c0_i32, %c0_i32_0 : i32, i32
  }
  func.func @transform_8(%arg0: i32) -> (i32, i32) {
    %c0_i32 = arith.constant 0 : i32
    %c0_i32_0 = arith.constant 0 : i32
    %c0_i32_1 = arith.constant 0 : i32
    return %c0_i32, %c0_i32_0 : i32, i32
  }
  func.func @transform_9(%arg0: i32) -> (i32, i32) {
    %c0_i32 = arith.constant 0 : i32
    %c0_i32_0 = arith.constant 0 : i32
    %c0_i32_1 = arith.constant 0 : i32
    return %c0_i32, %c0_i32_0 : i32, i32
  }
  func.func @transform_10(%arg0: i32) -> (i32, i32) {
    %c0_i32 = arith.constant 0 : i32
    %c0_i32_0 = arith.constant 0 : i32
    %c0_i32_1 = arith.constant 0 : i32
    return %c0_i32, %c0_i32_0 : i32, i32
  }
  func.func @transform_11(%arg0: i32) -> (i32, i32) {
    %c0_i32 = arith.constant 0 : i32
    %c0_i32_0 = arith.constant 0 : i32
    %c0_i32_1 = arith.constant 0 : i32
    return %c0_i32, %c0_i32_0 : i32, i32
  }
  func.func @transform_12(%arg0: i32) -> (i32, i32) {
    %c0_i32 = arith.constant 0 : i32
    %c0_i32_0 = arith.constant 0 : i32
    %c0_i32_1 = arith.constant 0 : i32
    return %c0_i32, %c0_i32_0 : i32, i32
  }
  func.func @transform_13(%arg0: i32) -> (i32, i32) {
    %c0_i32 = arith.constant 0 : i32
    %c0_i32_0 = arith.constant 0 : i32
    return %arg0, %c0_i32 : i32, i32
  }
}

</mosaic_0001>

<llo_original>
// kernel: tpu_custom_call.1
$region0: #{tpu_custom_call.1}
  #allocation0 [shape = 'u32[]', space=smem, size = 0x4, offset = 0x4, fixed_abs, tag = 'smem constant byte address 0x4 - core index']
  #allocation1 [shape = 'u32[72,128]{1,0:T(1,128)}', space=vmem, size = 0x9000, scoped, tag = 'internal scratch']
  %s0 = inlined_call_operand.vmem [shape: f32[192,16], index: 0, kind: input, shape index: {}]
  %s1 = inlined_call_operand.vmem [shape: f32[16,32], index: 1, kind: input, shape index: {}]
  %s2 = inlined_call_operand.vmem [shape: f32[1,32], index: 2, kind: input, shape index: {}]
  %s3 = inlined_call_operand.vmem [shape: f32[32,32], index: 3, kind: input, shape index: {}]
  %s4 = inlined_call_operand.vmem [shape: f32[1,32], index: 4, kind: input, shape index: {}]
  %s5 = inlined_call_operand.vmem [shape: f32[32,128], index: 5, kind: input, shape index: {}]
  %s6 = inlined_call_operand.vmem [shape: f32[32,128], index: 6, kind: input, shape index: {}]
  %s7 = inlined_call_operand.vmem [shape: f32[1,128], index: 7, kind: input, shape index: {}]
  %s8 = inlined_call_operand.vmem [shape: f32[32,128], index: 8, kind: input, shape index: {}]
  %s9 = inlined_call_operand.vmem [shape: f32[32,128], index: 9, kind: input, shape index: {}]
  %s10 = inlined_call_operand.vmem [shape: f32[1,128], index: 10, kind: input, shape index: {}]
  %s11 = inlined_call_operand.vmem [shape: f32[32,128], index: 11, kind: input, shape index: {}]
  %s12 = inlined_call_operand.vmem [shape: f32[1,128], index: 12, kind: input, shape index: {}]
  %s13 = inlined_call_operand.hbm [shape: f32[192,128], index: 13, kind: output, shape index: {}]
  %s14 = sld [smem:[#allocation0]]
  $region85: #{tpu_custom_call.1} parent=0
    _
  %s16 = ssub.s32 1, %s14
  %s17 = scalar_select 0, %s16, %s14
  $region1: #{tpu_custom_call.1} parent=0
    #allocation2 [shape = 'u8[65536]{0}', space=vmem, size = 0x10000, scoped, tag = 'output window, operand 0']
    #allocation3 [shape = 's32[2]{0}', space=sflag, size = 0x8, scoped, tag = 'scoped memory for tpu_custom_call.1']
    %18 = vsyncpa [#allocation3], 0
    %s19 = scalar_lea.sflag [#allocation3], 1
    %20 = vsyncpa %s19, 0
    loop: start=0, step=1, limit=5
    $region2: #{tpu_custom_call.1} parent=1 // loop_pre_header
      _
    $region3: #{tpu_custom_call.1} parent=1 // loop_header
      %s22 = sphi 0, %s26
      %p23 = scmp.ge.s32.totalorder %s22, 5
      %s32 = sphi 0, %s34
      %s35 = sphi 0, %s32
      %s36 = sphi 0, %s35
      %s52 = sphi 0, %s36
      %s56 = sphi 0, %s56
      %s58 = sphi 0, %s56
      %s59 = sphi 0, %s58
      %s73 = sphi 0, %s59
      %s77 = sphi 0, %s77
      %s79 = sphi 0, %s77
      %s80 = sphi 0, %s79
      %s94 = sphi 0, %s80
      %s98 = sphi 0, %s98
      %s100 = sphi 0, %s98
      %s101 = sphi 0, %s100
      %s115 = sphi 0, %s101
      %s119 = sphi 0, %s119
      %s121 = sphi 0, %s119
      %s122 = sphi 0, %s121
      %s136 = sphi 0, %s122
      %s140 = sphi 0, %s140
      %s142 = sphi 0, %s140
      %s143 = sphi 0, %s142
      %s157 = sphi 0, %s143
      %s161 = sphi 0, %s161
      %s163 = sphi 0, %s161
      %s164 = sphi 0, %s163
      %s178 = sphi 0, %s164
      %s182 = sphi 0, %s182
      %s184 = sphi 0, %s182
      %s185 = sphi 0, %s184
      %s199 = sphi 0, %s185
      %s203 = sphi 0, %s203
      %s205 = sphi 0, %s203
      %s206 = sphi 0, %s205
      %s220 = sphi 0, %s206
      %s224 = sphi 0, %s224
      %s226 = sphi 0, %s224
      %s227 = sphi 0, %s226
      %s241 = sphi 0, %s227
      %s245 = sphi 0, %s245
      %s247 = sphi 0, %s245
      %s248 = sphi 0, %s247
      %s262 = sphi 0, %s248
      %s266 = sphi 0, %s266
      %s268 = sphi 0, %s266
      %s269 = sphi 0, %s268
      %s283 = sphi 0, %s269
      %s287 = sphi 0, %s287
      %s289 = sphi 0, %s287
      %s290 = sphi 0, %s289
      %s304 = sphi 0, %s290
      %s310 = sphi 0, %s312
      %s313 = sphi 0, %s310
      %s314 = sphi 0, %s313
      %s330 = sphi 0, %s314
    $region4: #{tpu_custom_call.1} parent=1 // loop_header_branch
      %25 = sbr.rel (%p23) target = $region8
    $region5: #{tpu_custom_call.1} parent=1 // loop_body
      %s27 = ssub.s32 %s22, 1
      %s28 = ssub.s32 %s22, 2
      %s29 = sadd.s32 %s22, 1
      %s30 = ssub.s32 %s22, %s29
      %p31 = scmp.eq.s32.totalorder %s30, 0
      %s33 = sadd.s32 %s32, 1
      %s34 = scalar_select %p31, %s32, %s33
      %p37 = pneg %p31
      %p38 = scmp.eq.s32.totalorder %s22, 2
      %p39 = por %p37, %p38
      %p40 = scmp.ne.s32.totalorder %s32, %s35
      %p41 = scmp.eq.s32.totalorder %s22, 0
      %p42 = por %p40, %p41
      %p43 = scmp.ne.s32.totalorder %s32, %s35
      %p44 = scmp.eq.s32.totalorder %s27, 2
      %p45 = por %p43, %p44
      %p46 = scmp.ne.s32.totalorder %s35, %s36
      %p47 = scmp.eq.s32.totalorder %s27, 0
      %p48 = por %p46, %p47
      %p49 = scmp.ne.s32.totalorder %s35, %s36
      %p50 = scmp.eq.s32.totalorder %s28, 2
      %p51 = por %p49, %p50
      %p53 = scmp.ne.s32.totalorder %s36, %s52
      %p54 = scmp.eq.s32.totalorder %s28, 0
      %p55 = por %p53, %p54
      %s57 = sadd.s32 %s56, 1
      %p60 = scmp.eq.s32.totalorder %s22, 2
      %p61 = scmp.ne.s32.totalorder %s56, %s58
      %p62 = scmp.eq.s32.totalorder %s22, 0
      %p63 = por %p61, %p62
      %p64 = scmp.ne.s32.totalorder %s56, %s58
      %p65 = scmp.eq.s32.totalorder %s27, 2
      %p66 = por %p64, %p65
      %p67 = scmp.ne.s32.totalorder %s58, %s59
      %p68 = scmp.eq.s32.totalorder %s27, 0
      %p69 = por %p67, %p68
      %p70 = scmp.ne.s32.totalorder %s58, %s59
      %p71 = scmp.eq.s32.totalorder %s28, 2
      %p72 = por %p70, %p71
      %p74 = scmp.ne.s32.totalorder %s59, %s73
      %p75 = scmp.eq.s32.totalorder %s28, 0
      %p76 = por %p74, %p75
      %s78 = sadd.s32 %s77, 1
      %p81 = scmp.eq.s32.totalorder %s22, 2
      %p82 = scmp.ne.s32.totalorder %s77, %s79
      %p83 = scmp.eq.s32.totalorder %s22, 0
      %p84 = por %p82, %p83
      %p85 = scmp.ne.s32.totalorder %s77, %s79
      %p86 = scmp.eq.s32.totalorder %s27, 2
      %p87 = por %p85, %p86
      %p88 = scmp.ne.s32.totalorder %s79, %s80
      %p89 = scmp.eq.s32.totalorder %s27, 0
      %p90 = por %p88, %p89
      %p91 = scmp.ne.s32.totalorder %s79, %s80
      %p92 = scmp.eq.s32.totalorder %s28, 2
      %p93 = por %p91, %p92
      %p95 = scmp.ne.s32.totalorder %s80, %s94
      %p96 = scmp.eq.s32.totalorder %s28, 0
      %p97 = por %p95, %p96
      %s99 = sadd.s32 %s98, 1
      %p102 = scmp.eq.s32.totalorder %s22, 2
      %p103 = scmp.ne.s32.totalorder %s98, %s100
      %p104 = scmp.eq.s32.totalorder %s22, 0
      %p105 = por %p103, %p104
      %p106 = scmp.ne.s32.totalorder %s98, %s100
      %p107 = scmp.eq.s32.totalorder %s27, 2
      %p108 = por %p106, %p107
      %p109 = scmp.ne.s32.totalorder %s100, %s101
      %p110 = scmp.eq.s32.totalorder %s27, 0
      %p111 = por %p109, %p110
      %p112 = scmp.ne.s32.totalorder %s100, %s101
      %p113 = scmp.eq.s32.totalorder %s28, 2
      %p114 = por %p112, %p113
      %p116 = scmp.ne.s32.totalorder %s101, %s115
      %p117 = scmp.eq.s32.totalorder %s28, 0
      %p118 = por %p116, %p117
      %s120 = sadd.s32 %s119, 1
      %p123 = scmp.eq.s32.totalorder %s22, 2
      %p124 = scmp.ne.s32.totalorder %s119, %s121
      %p125 = scmp.eq.s32.totalorder %s22, 0
      %p126 = por %p124, %p125
      %p127 = scmp.ne.s32.totalorder %s119, %s121
      %p128 = scmp.eq.s32.totalorder %s27, 2
      %p129 = por %p127, %p128
      %p130 = scmp.ne.s32.totalorder %s121, %s122
      %p131 = scmp.eq.s32.totalorder %s27, 0
      %p132 = por %p130, %p131
      %p133 = scmp.ne.s32.totalorder %s121, %s122
      %p134 = scmp.eq.s32.totalorder %s28, 2
      %p135 = por %p133, %p134
      %p137 = scmp.ne.s32.totalorder %s122, %s136
      %p138 = scmp.eq.s32.totalorder %s28, 0
      %p139 = por %p137, %p138
      %s141 = sadd.s32 %s140, 1
      %p144 = scmp.eq.s32.totalorder %s22, 2
      %p145 = scmp.ne.s32.totalorder %s140, %s142
      %p146 = scmp.eq.s32.totalorder %s22, 0
      %p147 = por %p145, %p146
      %p148 = scmp.ne.s32.totalorder %s140, %s142
      %p149 = scmp.eq.s32.totalorder %s27, 2
      %p150 = por %p148, %p149
      %p151 = scmp.ne.s32.totalorder %s142, %s143
      %p152 = scmp.eq.s32.totalorder %s27, 0
      %p153 = por %p151, %p152
      %p154 = scmp.ne.s32.totalorder %s142, %s143
      %p155 = scmp.eq.s32.totalorder %s28, 2
      %p156 = por %p154, %p155
      %p158 = scmp.ne.s32.totalorder %s143, %s157
      %p159 = scmp.eq.s32.totalorder %s28, 0
      %p160 = por %p158, %p159
      %s162 = sadd.s32 %s161, 1
      %p165 = scmp.eq.s32.totalorder %s22, 2
      %p166 = scmp.ne.s32.totalorder %s161, %s163
      %p167 = scmp.eq.s32.totalorder %s22, 0
      %p168 = por %p166, %p167
      %p169 = scmp.ne.s32.totalorder %s161, %s163
      %p170 = scmp.eq.s32.totalorder %s27, 2
      %p171 = por %p169, %p170
      %p172 = scmp.ne.s32.totalorder %s163, %s164
      %p173 = scmp.eq.s32.totalorder %s27, 0
      %p174 = por %p172, %p173
      %p175 = scmp.ne.s32.totalorder %s163, %s164
      %p176 = scmp.eq.s32.totalorder %s28, 2
      %p177 = por %p175, %p176
      %p179 = scmp.ne.s32.totalorder %s164, %s178
      %p180 = scmp.eq.s32.totalorder %s28, 0
      %p181 = por %p179, %p180
      %s183 = sadd.s32 %s182, 1
      %p186 = scmp.eq.s32.totalorder %s22, 2
      %p187 = scmp.ne.s32.totalorder %s182, %s184
      %p188 = scmp.eq.s32.totalorder %s22, 0
      %p189 = por %p187, %p188
      %p190 = scmp.ne.s32.totalorder %s182, %s184
      %p191 = scmp.eq.s32.totalorder %s27, 2
      %p192 = por %p190, %p191
      %p193 = scmp.ne.s32.totalorder %s184, %s185
      %p194 = scmp.eq.s32.totalorder %s27, 0
      %p195 = por %p193, %p194
      %p196 = scmp.ne.s32.totalorder %s184, %s185
      %p197 = scmp.eq.s32.totalorder %s28, 2
      %p198 = por %p196, %p197
      %p200 = scmp.ne.s32.totalorder %s185, %s199
      %p201 = scmp.eq.s32.totalorder %s28, 0
      %p202 = por %p200, %p201
      %s204 = sadd.s32 %s203, 1
      %p207 = scmp.eq.s32.totalorder %s22, 2
      %p208 = scmp.ne.s32.totalorder %s203, %s205
      %p209 = scmp.eq.s32.totalorder %s22, 0
      %p210 = por %p208, %p209
      %p211 = scmp.ne.s32.totalorder %s203, %s205
      %p212 = scmp.eq.s32.totalorder %s27, 2
      %p213 = por %p211, %p212
      %p214 = scmp.ne.s32.totalorder %s205, %s206
      %p215 = scmp.eq.s32.totalorder %s27, 0
      %p216 = por %p214, %p215
      %p217 = scmp.ne.s32.totalorder %s205, %s206
      %p218 = scmp.eq.s32.totalorder %s28, 2
      %p219 = por %p217, %p218
      %p221 = scmp.ne.s32.totalorder %s206, %s220
      %p222 = scmp.eq.s32.totalorder %s28, 0
      %p223 = por %p221, %p222
      %s225 = sadd.s32 %s224, 1
      %p228 = scmp.eq.s32.totalorder %s22, 2
      %p229 = scmp.ne.s32.totalorder %s224, %s226
      %p230 = scmp.eq.s32.totalorder %s22, 0
      %p231 = por %p229, %p230
      %p232 = scmp.ne.s32.totalorder %s224, %s226
      %p233 = scmp.eq.s32.totalorder %s27, 2
      %p234 = por %p232, %p233
      %p235 = scmp.ne.s32.totalorder %s226, %s227
      %p236 = scmp.eq.s32.totalorder %s27, 0
      %p237 = por %p235, %p236
      %p238 = scmp.ne.s32.totalorder %s226, %s227
      %p239 = scmp.eq.s32.totalorder %s28, 2
      %p240 = por %p238, %p239
      %p242 = scmp.ne.s32.totalorder %s227, %s241
      %p243 = scmp.eq.s32.totalorder %s28, 0
      %p244 = por %p242, %p243
      %s246 = sadd.s32 %s245, 1
      %p249 = scmp.eq.s32.totalorder %s22, 2
      %p250 = scmp.ne.s32.totalorder %s245, %s247
      %p251 = scmp.eq.s32.totalorder %s22, 0
      %p252 = por %p250, %p251
      %p253 = scmp.ne.s32.totalorder %s245, %s247
      %p254 = scmp.eq.s32.totalorder %s27, 2
      %p255 = por %p253, %p254
      %p256 = scmp.ne.s32.totalorder %s247, %s248
      %p257 = scmp.eq.s32.totalorder %s27, 0
      %p258 = por %p256, %p257
      %p259 = scmp.ne.s32.totalorder %s247, %s248
      %p260 = scmp.eq.s32.totalorder %s28, 2
      %p261 = por %p259, %p260
      %p263 = scmp.ne.s32.totalorder %s248, %s262
      %p264 = scmp.eq.s32.totalorder %s28, 0
      %p265 = por %p263, %p264
      %s267 = sadd.s32 %s266, 1
      %p270 = scmp.eq.s32.totalorder %s22, 2
      %p271 = scmp.ne.s32.totalorder %s266, %s268
      %p272 = scmp.eq.s32.totalorder %s22, 0
      %p273 = por %p271, %p272
      %p274 = scmp.ne.s32.totalorder %s266, %s268
      %p275 = scmp.eq.s32.totalorder %s27, 2
      %p276 = por %p274, %p275
      %p277 = scmp.ne.s32.totalorder %s268, %s269
      %p278 = scmp.eq.s32.totalorder %s27, 0
      %p279 = por %p277, %p278
      %p280 = scmp.ne.s32.totalorder %s268, %s269
      %p281 = scmp.eq.s32.totalorder %s28, 2
      %p282 = por %p280, %p281
      %p284 = scmp.ne.s32.totalorder %s269, %s283
      %p285 = scmp.eq.s32.totalorder %s28, 0
      %p286 = por %p284, %p285
      %s288 = sadd.s32 %s287, 1
      %p291 = scmp.eq.s32.totalorder %s22, 2
      %p292 = scmp.ne.s32.totalorder %s287, %s289
      %p293 = scmp.eq.s32.totalorder %s22, 0
      %p294 = por %p292, %p293
      %p295 = scmp.ne.s32.totalorder %s287, %s289
      %p296 = scmp.eq.s32.totalorder %s27, 2
      %p297 = por %p295, %p296
      %p298 = scmp.ne.s32.totalorder %s289, %s290
      %p299 = scmp.eq.s32.totalorder %s27, 0
      %p300 = por %p298, %p299
      %p301 = scmp.ne.s32.totalorder %s289, %s290
      %p302 = scmp.eq.s32.totalorder %s28, 2
      %p303 = por %p301, %p302
      %p305 = scmp.ne.s32.totalorder %s290, %s304
      %p306 = scmp.eq.s32.totalorder %s28, 0
      %p307 = por %p305, %p306
      %s308 = ssub.s32 %s22, %s29
      %p309 = scmp.eq.s32.totalorder %s308, 0
      %s311 = sadd.s32 %s310, 1
      %s312 = scalar_select %p309, %s310, %s311
      %p315 = pneg %p309
      %p316 = scmp.eq.s32.totalorder %s22, 2
      %p317 = por %p315, %p316
      %p318 = scmp.ne.s32.totalorder %s310, %s313
      %p319 = scmp.eq.s32.totalorder %s22, 0
      %p320 = por %p318, %p319
      %p321 = scmp.ne.s32.totalorder %s310, %s313
      %p322 = scmp.eq.s32.totalorder %s27, 2
      %p323 = por %p321, %p322
      %p324 = scmp.ne.s32.totalorder %s313, %s314
      %p325 = scmp.eq.s32.totalorder %s27, 0
      %p326 = por %p324, %p325
      %p327 = scmp.ne.s32.totalorder %s313, %s314
      %p328 = scmp.eq.s32.totalorder %s28, 2
      %p329 = por %p327, %p328
      %p331 = scmp.ne.s32.totalorder %s314, %s330
      %p332 = scmp.eq.s32.totalorder %s28, 0
      %p333 = por %p331, %p332
      %p334 = scmp.le.s32.totalorder 1, %s22
      %p335 = scmp.lt.s32.totalorder %s22, 4
      %p336 = pnand %p334, %p335
      %p337 = pneg %p336
      // Predicated region
      $region9: #{tpu_custom_call.1} parent=5 // pred_check
        _
      $region10: #{tpu_custom_call.1} parent=5 // pred_check_branch
        %339 = sbr.rel (%p336) target = $region12
      $region11: #{tpu_custom_call.1} parent=5 // pred_region
        %s340 = ssub.s32 %s22, 1
        // Predicated region
        $region13: #{tpu_custom_call.1} parent=11 // pred_check
          %p341 = pneg %p69
        $region14: #{tpu_custom_call.1} parent=11 // pred_check_branch
          %343 = sbr.rel (%p341) target = $region16
        $region15: #{tpu_custom_call.1} parent=11 // pred_region
          _
        $region16: #{tpu_custom_call.1} parent=11 // pred_fallthru
          _
        // Predicated region
        $region17: #{tpu_custom_call.1} parent=11 // pred_check
          %p344 = pneg %p90
        $region18: #{tpu_custom_call.1} parent=11 // pred_check_branch
          %346 = sbr.rel (%p344) target = $region20
        $region19: #{tpu_custom_call.1} parent=11 // pred_region
          _
        $region20: #{tpu_custom_call.1} parent=11 // pred_fallthru
          _
        // Predicated region
        $region21: #{tpu_custom_call.1} parent=11 // pred_check
          %p347 = pneg %p111
        $region22: #{tpu_custom_call.1} parent=11 // pred_check_branch
          %349 = sbr.rel (%p347) target = $region24
        $region23: #{tpu_custom_call.1} parent=11 // pred_region
          _
        $region24: #{tpu_custom_call.1} parent=11 // pred_fallthru
          _
        // Predicated region
        $region25: #{tpu_custom_call.1} parent=11 // pred_check
          %p350 = pneg %p132
        $region26: #{tpu_custom_call.1} parent=11 // pred_check_branch
          %352 = sbr.rel (%p350) target = $region28
        $region27: #{tpu_custom_call.1} parent=11 // pred_region
          _
        $region28: #{tpu_custom_call.1} parent=11 // pred_fallthru
          _
        // Predicated region
        $region29: #{tpu_custom_call.1} parent=11 // pred_check
          %p353 = pneg %p153
        $region30: #{tpu_custom_call.1} parent=11 // pred_check_branch
          %355 = sbr.rel (%p353) target = $region32
        $region31: #{tpu_custom_call.1} parent=11 // pred_region
          _
        $region32: #{tpu_custom_call.1} parent=11 // pred_fallthru
          _
        // Predicated region
        $region33: #{tpu_custom_call.1} parent=11 // pred_check
          %p356 = pneg %p174
        $region34: #{tpu_custom_call.1} parent=11 // pred_check_branch
          %358 = sbr.rel (%p356) target = $region36
        $region35: #{tpu_custom_call.1} parent=11 // pred_region
          _
        $region36: #{tpu_custom_call.1} parent=11 // pred_fallthru
          _
        // Predicated region
        $region37: #{tpu_custom_call.1} parent=11 // pred_check
          %p359 = pneg %p195
        $region38: #{tpu_custom_call.1} parent=11 // pred_check_branch
          %361 = sbr.rel (%p359) target = $region40
        $region39: #{tpu_custom_call.1} parent=11 // pred_region
          _
        $region40: #{tpu_custom_call.1} parent=11 // pred_fallthru
          _
        // Predicated region
        $region41: #{tpu_custom_call.1} parent=11 // pred_check
          %p362 = pneg %p216
        $region42: #{tpu_custom_call.1} parent=11 // pred_check_branch
          %364 = sbr.rel (%p362) target = $region44
        $region43: #{tpu_custom_call.1} parent=11 // pred_region
          _
        $region44: #{tpu_custom_call.1} parent=11 // pred_fallthru
          _
        // Predicated region
        $region45: #{tpu_custom_call.1} parent=11 // pred_check
          %p365 = pneg %p237
        $region46: #{tpu_custom_call.1} parent=11 // pred_check_branch
          %367 = sbr.rel (%p365) target = $region48
        $region47: #{tpu_custom_call.1} parent=11 // pred_region
          _
        $region48: #{tpu_custom_call.1} parent=11 // pred_fallthru
          _
        // Predicated region
        $region49: #{tpu_custom_call.1} parent=11 // pred_check
          %p368 = pneg %p258
        $region50: #{tpu_custom_call.1} parent=11 // pred_check_branch
          %370 = sbr.rel (%p368) target = $region52
        $region51: #{tpu_custom_call.1} parent=11 // pred_region
          _
        $region52: #{tpu_custom_call.1} parent=11 // pred_fallthru
          _
        // Predicated region
        $region53: #{tpu_custom_call.1} parent=11 // pred_check
          %p371 = pneg %p279
        $region54: #{tpu_custom_call.1} parent=11 // pred_check_branch
          %373 = sbr.rel (%p371) target = $region56
        $region55: #{tpu_custom_call.1} parent=11 // pred_region
          _
        $region56: #{tpu_custom_call.1} parent=11 // pred_fallthru
          _
        // Predicated region
        $region57: #{tpu_custom_call.1} parent=11 // pred_check
          %p374 = pneg %p300
        $region58: #{tpu_custom_call.1} parent=11 // pred_check_branch
          %376 = sbr.rel (%p374) target = $region60
        $region59: #{tpu_custom_call.1} parent=11 // pred_region
          _
        $region60: #{tpu_custom_call.1} parent=11 // pred_fallthru
          _
      $region12: #{tpu_custom_call.1} parent=5 // pred_fallthru
        _
      %p377 = scmp.lt.s32.totalorder %s22, 3
      // Predicated region
      $region61: #{tpu_custom_call.1} parent=5 // pred_check
        %p378 = pneg %p377
      $region62: #{tpu_custom_call.1} parent=5 // pred_check_branch
        %380 = sbr.rel (%p378) target = $region64
      $region63: #{tpu_custom_call.1} parent=5 // pred_region
        // Predicated region
        $region65: #{tpu_custom_call.1} parent=63 // pred_check
          %p381 = pneg %p42
        $region66: #{tpu_custom_call.1} parent=63 // pred_check_branch
          %383 = sbr.rel (%p381) target = $region68
        $region67: #{tpu_custom_call.1} parent=63 // pred_region
          %s384 = smul.u32 8, %s22
          %p385 = scmp.lt.s32.totalorder %s384, 23
          %s386 = scalar_select %p385, %s384, 23
          %s387 = smul.addr %s386, 8
          %s388 = scalar_lea.vmem %s0, %s387
          %s389 = smul.u32 8, %s22
        $region68: #{tpu_custom_call.1} parent=63 // pred_fallthru
          _
      $region64: #{tpu_custom_call.1} parent=5 // pred_fallthru
        _
      %p390 = scmp.le.s32.totalorder 1, %s22
      %p391 = scmp.lt.s32.totalorder %s22, 4
      %p392 = pnand %p390, %p391
      %p393 = pneg %p392
      // Predicated region
      $region69: #{tpu_custom_call.1} parent=5 // pred_check
        _
      $region70: #{tpu_custom_call.1} parent=5 // pred_check_branch
        %395 = sbr.rel (%p392) target = $region72
      $region71: #{tpu_custom_call.1} parent=5 // pred_region
        %s396 = ssub.s32 %s22, 1
        %s397 = smul.u32 8, %s27
        %p398 = scmp.lt.s32.totalorder %s397, 23
        %s399 = scalar_select %p398, %s397, 23
        %s400 = smul.addr %s399, 8
        %s401 = scalar_lea.vmem %s0, %s400
        %p402 = pneg %p48
        %p403 = pneg %p45
        %p404 = pneg %p69
        %p405 = pneg %p66
        %p406 = pneg %p90
        %p407 = pneg %p87
        %p408 = pneg %p111
        %p409 = pneg %p108
        %p410 = pneg %p132
        %p411 = pneg %p129
        %p412 = pneg %p153
        %p413 = pneg %p150
        %p414 = pneg %p174
        %p415 = pneg %p171
        %p416 = pneg %p195
        %p417 = pneg %p192
        %p418 = pneg %p216
        %p419 = pneg %p213
        %p420 = pneg %p237
        %p421 = pneg %p234
        %p422 = pneg %p258
        %p423 = pneg %p255
        %p424 = pneg %p279
        %p425 = pneg %p276
        %p426 = pneg %p300
        %p427 = pneg %p297
        %p428 = pneg %p326
        %p429 = pneg %p323
        %s430 = sand.u32 %s313, 1
        %s431 = scalar_lea.sflag [#allocation3], %s430
        %s432 = sand.u32 %s313, 1
        %s433 = smul.addr %s432, 64
        %s434 = scalar_lea.vmem [#allocation2], %s433
        %s435 = smul.u32 8, %s27
        %p436 = scmp.lt.s32.totalorder %s435, 23
        %s437 = scalar_select %p436, %s435, 23
        %s438 = smul.addr %s437, 8
        %s439 = scalar_lea.vmem %s0, %s438
        %s440 = smul.u32 8, %s27
        %s441 = smul.u32 8, %s27
        %v442 = vld [vmem:[%s439] sm:$0xff]
        %v443 = vld [vmem:[%s439 + $0x8] sm:$0xff]
        %v444 = vld [vmem:[%s439 + $0x10] sm:$0xff]
        %v445 = vld [vmem:[%s439 + $0x18] sm:$0xff]
        %v446 = vld [vmem:[%s439 + $0x20] sm:$0xff]
        %v447 = vld [vmem:[%s439 + $0x28] sm:$0xff]
        %v448 = vld [vmem:[%s439 + $0x30] sm:$0xff]
        %v449 = vld [vmem:[%s439 + $0x38] sm:$0xff]
        %v450 = vld [vmem:[%s1] sm:$0xff]
        %v451 = vld [vmem:[%s1 + $0x8] sm:$0xff]
        %v452 = vld [vmem:[%s2] sm:$0x1]
        %v454 = vperm.slane %v452, 0
        %vm456 = vcmask 130048
        %v458 = vsel %vm456, %v442, 0
        %v461 = vsel %vm456, %v443, 0
        %v464 = vsel %vm456, %v444, 0
        %v467 = vsel %vm456, %v445, 0
        %v470 = vsel %vm456, %v446, 0
        %v473 = vsel %vm456, %v447, 0
        %v476 = vsel %vm456, %v448, 0
        %v479 = vsel %vm456, %v449, 0
        %481 = vmatpush.msra.mxu0 0.0
        %482 = vmatpush.msra.mxu0 0.0
        %483 = vmatpush.msra.mxu0 0.0
        %484 = vmatpush.msra.mxu0 0.0
        %485 = vmatpush.msra.mxu0 0.0
        %486 = vmatpush.msra.mxu0 0.0
        %487 = vmatpush.msra.mxu0 0.0
        %488 = vmatpush.msra.mxu0 0.0
        %489 = vmatpush.msra.mxu0 0.0
        %490 = vmatpush.msra.mxu0 0.0
        %491 = vmatpush.msra.mxu0 0.0
        %492 = vmatpush.msra.mxu0 0.0
        %493 = vmatpush.msra.mxu0 0.0
        %494 = vmatpush.msra.mxu0 0.0
        %495 = vmatpush.msra.mxu0 %v451
        %496 = vmatpush.msra.mxu0 %v450
        %497 = vmatmul.f32.gmra.mxu0 %v458
        %v498 = vpop.f32.mrf.mxu0
        %v499 = vadd.f32 %v454, %v498
        %500 = vmatmul.f32.gmra.mxu0 %v461
        %v501 = vpop.f32.mrf.mxu0
        %v502 = vadd.f32 %v454, %v501
        %503 = vmatmul.f32.gmra.mxu0 %v464
        %v504 = vpop.f32.mrf.mxu0
        %v505 = vadd.f32 %v454, %v504
        %506 = vmatmul.f32.gmra.mxu0 %v467
        %v507 = vpop.f32.mrf.mxu0
        %v508 = vadd.f32 %v454, %v507
        %509 = vmatmul.f32.gmra.mxu0 %v470
        %v510 = vpop.f32.mrf.mxu0
        %v511 = vadd.f32 %v454, %v510
        %512 = vmatmul.f32.gmra.mxu0 %v473
        %v513 = vpop.f32.mrf.mxu0
        %v514 = vadd.f32 %v454, %v513
        %515 = vmatmul.f32.gmra.mxu0 %v476
        %v516 = vpop.f32.mrf.mxu0
        %v517 = vadd.f32 %v454, %v516
        %518 = vmatmul.f32.gmra.mxu0 %v479
        %v519 = vpop.f32.mrf.mxu0
        %v520 = vadd.f32 %v454, %v519
        %521 = vdwg.mxu0
        %v522 = vmax.f32 %v499, 0.0
        %v523 = vmax.f32 %v502, 0.0
        %v524 = vmax.f32 %v505, 0.0
        %v525 = vmax.f32 %v508, 0.0
        %v526 = vmax.f32 %v511, 0.0
        %v527 = vmax.f32 %v514, 0.0
        %v528 = vmax.f32 %v517, 0.0
        %v529 = vmax.f32 %v520, 0.0
        %v530 = vld [vmem:[%s5] sm:$0xff]
        %v531 = vld [vmem:[%s5 + $0x8] sm:$0xff]
        %v532 = vld [vmem:[%s5 + $0x10] sm:$0xff]
        %v533 = vld [vmem:[%s5 + $0x18] sm:$0xff]
        %v534 = vld [vmem:[%s7] sm:$0x1]
        %v536 = vperm.slane %v534, 0
        %vm538 = vcmask 261120
        %v540 = vsel %vm538, %v522, 0
        %v543 = vsel %vm538, %v523, 0
        %v546 = vsel %vm538, %v524, 0
        %v549 = vsel %vm538, %v525, 0
        %v552 = vsel %vm538, %v526, 0
        %v555 = vsel %vm538, %v527, 0
        %v558 = vsel %vm538, %v528, 0
        %v561 = vsel %vm538, %v529, 0
        %563 = vmatpush.msra.mxu0 0.0
        %564 = vmatpush.msra.mxu0 0.0
        %565 = vmatpush.msra.mxu0 0.0
        %566 = vmatpush.msra.mxu0 0.0
        %567 = vmatpush.msra.mxu0 0.0
        %568 = vmatpush.msra.mxu0 0.0
        %569 = vmatpush.msra.mxu0 0.0
        %570 = vmatpush.msra.mxu0 0.0
        %571 = vmatpush.msra.mxu0 0.0
        %572 = vmatpush.msra.mxu0 0.0
        %573 = vmatpush.msra.mxu0 0.0
        %574 = vmatpush.msra.mxu0 0.0
        %575 = vmatpush.msra.mxu0 %v533
        %576 = vmatpush.msra.mxu0 %v532
        %577 = vmatpush.msra.mxu0 %v531
        %578 = vmatpush.msra.mxu0 %v530
        %579 = vmatmul.f32.gmra.mxu0 %v540
        %v580 = vpop.f32.mrf.mxu0
        %v581 = vadd.f32 %v536, %v580
        %582 = vmatmul.f32.gmra.mxu0 %v543
        %v583 = vpop.f32.mrf.mxu0
        %v584 = vadd.f32 %v536, %v583
        %585 = vmatmul.f32.gmra.mxu0 %v546
        %v586 = vpop.f32.mrf.mxu0
        %v587 = vadd.f32 %v536, %v586
        %588 = vmatmul.f32.gmra.mxu0 %v549
        %v589 = vpop.f32.mrf.mxu0
        %v590 = vadd.f32 %v536, %v589
        %591 = vmatmul.f32.gmra.mxu0 %v552
        %v592 = vpop.f32.mrf.mxu0
        %v593 = vadd.f32 %v536, %v592
        %594 = vmatmul.f32.gmra.mxu0 %v555
        %v595 = vpop.f32.mrf.mxu0
        %v596 = vadd.f32 %v536, %v595
        %597 = vmatmul.f32.gmra.mxu0 %v558
        %v598 = vpop.f32.mrf.mxu0
        %v599 = vadd.f32 %v536, %v598
        %600 = vmatmul.f32.gmra.mxu0 %v561
        %v601 = vpop.f32.mrf.mxu0
        %v602 = vadd.f32 %v536, %v601
        %603 = vdwg.mxu0
        %v604 = vld [vmem:[%s6] sm:$0xff]
        %v605 = vld [vmem:[%s6 + $0x8] sm:$0xff]
        %v606 = vld [vmem:[%s6 + $0x10] sm:$0xff]
        %v607 = vld [vmem:[%s6 + $0x18] sm:$0xff]
        %v608 = vld [vmem:[%s8] sm:$0xff]
        %v609 = vld [vmem:[%s8 + $0x8] sm:$0xff]
        %v610 = vld [vmem:[%s8 + $0x10] sm:$0xff]
        %v611 = vld [vmem:[%s8 + $0x18] sm:$0xff]
        %v612 = vld [vmem:[%s9] sm:$0xff]
        %v613 = vld [vmem:[%s9 + $0x8] sm:$0xff]
        %v614 = vld [vmem:[%s9 + $0x10] sm:$0xff]
        %v615 = vld [vmem:[%s9 + $0x18] sm:$0xff]
        %v616 = vld [vmem:[%s10] sm:$0x1]
        %v618 = vsel %vm538, 0.0, 0
        %620 = vmatpush.msra.mxu0 0.0
        %621 = vmatpush.msra.mxu0 0.0
        %622 = vmatpush.msra.mxu0 0.0
        %623 = vmatpush.msra.mxu0 0.0
        %624 = vmatpush.msra.mxu0 0.0
        %625 = vmatpush.msra.mxu0 0.0
        %626 = vmatpush.msra.mxu0 0.0
        %627 = vmatpush.msra.mxu0 0.0
        %628 = vmatpush.msra.mxu0 0.0
        %629 = vmatpush.msra.mxu0 0.0
        %630 = vmatpush.msra.mxu0 0.0
        %631 = vmatpush.msra.mxu0 0.0
        %632 = vmatpush.msra.mxu0 %v607
        %633 = vmatpush.msra.mxu0 %v606
        %634 = vmatpush.msra.mxu0 %v605
        %635 = vmatpush.msra.mxu0 %v604
        %636 = vmatmul.f32.gmra.mxu0 %v618
        %v637 = vpop.f32.mrf.mxu0
        %v638 = vadd.f32 0.0, %v637
        %639 = vdwg.mxu0
        %v640 = vadd.f32 %v581, %v638
        %v641 = vxor.u32 %v640, 2147483648
        %v642 = vmul.f32 %v641, 1.442695
        %v643 = vpow.pop %v642
        %v644 = vadd.f32 %v643, 1.0
        %v645 = vrcp.pop %v644
        %v646 = vmul.f32 %v644, %v645
        %v647 = vsub.f32 1.0, %v646
        %v648 = vmul.f32 %v645, %v647
        %v649 = vadd.f32 %v645, %v648
        %vm650 = vweird.f32 %v644
        %vm651 = vweird.f32 %v645
        %vm652 = vmor %vm650, %vm651
        %v653 = vsel %vm652, %v645, %v649
        %v654 = vand.u32 2147483647, %v644
        %vm655 = vcmp.eq.f32.partialorder %v654, 8.507059e+37
        %v656 = vand.u32 %v644, 2147483648
        %v657 = vor.u32 1.1754944e-38, %v656
        %v658 = vsel %vm655, %v657, %v653
        %v659 = vmul.f32 1.0, %v658
        %v660 = vtanh.pop %v640
        %v661 = vmul.f32 %v659, 0.0
        %663 = vrot.lane.b32.xlu0 %v660, 64
        %v664 = vpop.permute.xlu0 %663
        %v666 = vmul.f32 %v659, %v664
        %668 = vrot.lane.b32.xlu0 %v666, 32
        %v669 = vpop.permute.xlu0 %668
        %v671 = vadd.f32 %v661, %v669
        %v672 = vtanh.pop %v671
        %674 = vrot.lane.b32.xlu0 %v672, 64
        %v675 = vpop.permute.xlu0 %674
        %v677 = vmul.f32 %v659, %v675
        %v679 = vperm.slane %v616, 0
        %682 = vrot.lane.b32.xlu0 %v677, 32
        %v683 = vpop.permute.xlu0 %682
        %v684 = vsel %vm538, %v683, 0
        %686 = vmatpush.msra.mxu0 0.0
        %687 = vmatpush.msra.mxu0 0.0
        %688 = vmatpush.msra.mxu0 0.0
        %689 = vmatpush.msra.mxu0 0.0
        %690 = vmatpush.msra.mxu0 0.0
        %691 = vmatpush.msra.mxu0 0.0
        %692 = vmatpush.msra.mxu0 0.0
        %693 = vmatpush.msra.mxu0 0.0
        %694 = vmatpush.msra.mxu0 0.0
        %695 = vmatpush.msra.mxu0 0.0
        %696 = vmatpush.msra.mxu0 0.0
        %697 = vmatpush.msra.mxu0 0.0
        %698 = vmatpush.msra.mxu0 %v611
        %699 = vmatpush.msra.mxu0 %v610
        %700 = vmatpush.msra.mxu0 %v609
        %701 = vmatpush.msra.mxu0 %v608
        %702 = vmatmul.f32.gmra.mxu0 %v684
        %v703 = vpop.f32.mrf.mxu0
        %v704 = vadd.f32 %v679, %v703
        %705 = vdwg.mxu0
        %706 = vmatpush.msra.mxu0 0.0
        %707 = vmatpush.msra.mxu0 0.0
        %708 = vmatpush.msra.mxu0 0.0
        %709 = vmatpush.msra.mxu0 0.0
        %710 = vmatpush.msra.mxu0 0.0
        %711 = vmatpush.msra.mxu0 0.0
        %712 = vmatpush.msra.mxu0 0.0
        %713 = vmatpush.msra.mxu0 0.0
        %714 = vmatpush.msra.mxu0 0.0
        %715 = vmatpush.msra.mxu0 0.0
        %716 = vmatpush.msra.mxu0 0.0
        %717 = vmatpush.msra.mxu0 0.0
        %718 = vmatpush.msra.mxu0 %v615
        %719 = vmatpush.msra.mxu0 %v614
        %720 = vmatpush.msra.mxu0 %v613
        %721 = vmatpush.msra.mxu0 %v612
        %722 = vmatmul.f32.gmra.mxu0 %v618
        %v723 = vpop.f32.mrf.mxu0
        %v724 = vadd.f32 0.0, %v723
        %725 = vdwg.mxu0
        %v726 = vadd.f32 %v704, %v724
        %v727 = vxor.u32 %v726, 2147483648
        %v728 = vmul.f32 %v727, 1.442695
        %v729 = vpow.pop %v728
        %v730 = vadd.f32 %v729, 1.0
        %v731 = vrcp.pop %v730
        %v732 = vmul.f32 %v730, %v731
        %v733 = vsub.f32 1.0, %v732
        %v734 = vmul.f32 %v731, %v733
        %v735 = vadd.f32 %v731, %v734
        %vm736 = vweird.f32 %v730
        %vm737 = vweird.f32 %v731
        %vm738 = vmor %vm736, %vm737
        %v739 = vsel %vm738, %v731, %v735
        %v740 = vand.u32 2147483647, %v730
        %vm741 = vcmp.eq.f32.partialorder %v740, 8.507059e+37
        %v742 = vand.u32 %v730, 2147483648
        %v743 = vor.u32 1.1754944e-38, %v742
        %v744 = vsel %vm741, %v743, %v739
        %v745 = vmul.f32 1.0, %v744
        %v746 = vtanh.pop %v726
        %v747 = vmul.f32 %v745, 0.0
        %749 = vrot.lane.b32.xlu0 %v746, 64
        %v750 = vpop.permute.xlu0 %749
        %v752 = vmul.f32 %v745, %v750
        %754 = vrot.lane.b32.xlu0 %v752, 32
        %v755 = vpop.permute.xlu0 %754
        %v757 = vadd.f32 %v747, %v755
        %v758 = vtanh.pop %v757
        %760 = vrot.lane.b32.xlu0 %v758, 64
        %v761 = vpop.permute.xlu0 %760
        %v763 = vmul.f32 %v745, %v761
        %764 = vmatpush.msra.mxu0 0.0
        %765 = vmatpush.msra.mxu0 0.0
        %766 = vmatpush.msra.mxu0 0.0
        %767 = vmatpush.msra.mxu0 0.0
        %768 = vmatpush.msra.mxu0 0.0
        %769 = vmatpush.msra.mxu0 0.0
        %770 = vmatpush.msra.mxu0 0.0
        %771 = vmatpush.msra.mxu0 0.0
        %772 = vmatpush.msra.mxu0 0.0
        %773 = vmatpush.msra.mxu0 0.0
        %774 = vmatpush.msra.mxu0 0.0
        %775 = vmatpush.msra.mxu0 0.0
        %776 = vmatpush.msra.mxu0 %v607
        %777 = vmatpush.msra.mxu0 %v606
        %778 = vmatpush.msra.mxu0 %v605
        %779 = vmatpush.msra.mxu0 %v604
        %780 = vmatmul.f32.gmra.mxu0 %v684
        %v781 = vpop.f32.mrf.mxu0
        %v782 = vadd.f32 0.0, %v781
        %783 = vdwg.mxu0
        %v784 = vadd.f32 %v584, %v782
        %v785 = vxor.u32 %v784, 2147483648
        %v786 = vmul.f32 %v785, 1.442695
        %v787 = vpow.pop %v786
        %v788 = vadd.f32 %v787, 1.0
        %v789 = vrcp.pop %v788
        %v790 = vmul.f32 %v788, %v789
        %v791 = vsub.f32 1.0, %v790
        %v792 = vmul.f32 %v789, %v791
        %v793 = vadd.f32 %v789, %v792
        %vm794 = vweird.f32 %v788
        %vm795 = vweird.f32 %v789
        %vm796 = vmor %vm794, %vm795
        %v797 = vsel %vm796, %v789, %v793
        %v798 = vand.u32 2147483647, %v788
        %vm799 = vcmp.eq.f32.partialorder %v798, 8.507059e+37
        %v800 = vand.u32 %v788, 2147483648
        %v801 = vor.u32 1.1754944e-38, %v800
        %v802 = vsel %vm799, %v801, %v797
        %v803 = vmul.f32 1.0, %v802
        %v804 = vtanh.pop %v784
        %v805 = vmul.f32 %v803, %v671
        %807 = vrot.lane.b32.xlu0 %v804, 64
        %v808 = vpop.permute.xlu0 %807
        %v810 = vmul.f32 %v803, %v808
        %812 = vrot.lane.b32.xlu0 %v810, 32
        %v813 = vpop.permute.xlu0 %812
        %v815 = vadd.f32 %v805, %v813
        %v816 = vtanh.pop %v815
        %818 = vrot.lane.b32.xlu0 %v816, 64
        %v819 = vpop.permute.xlu0 %818
        %v821 = vmul.f32 %v803, %v819
        %823 = vrot.lane.b32.xlu0 %v821, 32
        %v824 = vpop.permute.xlu0 %823
        %v825 = vsel %vm538, %v824, 0
        %827 = vmatpush.msra.mxu0 0.0
        %828 = vmatpush.msra.mxu0 0.0
        %829 = vmatpush.msra.mxu0 0.0
        %830 = vmatpush.msra.mxu0 0.0
        %831 = vmatpush.msra.mxu0 0.0
        %832 = vmatpush.msra.mxu0 0.0
        %833 = vmatpush.msra.mxu0 0.0
        %834 = vmatpush.msra.mxu0 0.0
        %835 = vmatpush.msra.mxu0 0.0
        %836 = vmatpush.msra.mxu0 0.0
        %837 = vmatpush.msra.mxu0 0.0
        %838 = vmatpush.msra.mxu0 0.0
        %839 = vmatpush.msra.mxu0 %v611
        %840 = vmatpush.msra.mxu0 %v610
        %841 = vmatpush.msra.mxu0 %v609
        %842 = vmatpush.msra.mxu0 %v608
        %843 = vmatmul.f32.gmra.mxu0 %v825
        %v844 = vpop.f32.mrf.mxu0
        %v845 = vadd.f32 %v679, %v844
        %846 = vdwg.mxu0
        %848 = vrot.lane.b32.xlu0 %v763, 32
        %v849 = vpop.permute.xlu0 %848
        %v850 = vsel %vm538, %v849, 0
        %852 = vmatpush.msra.mxu0 0.0
        %853 = vmatpush.msra.mxu0 0.0
        %854 = vmatpush.msra.mxu0 0.0
        %855 = vmatpush.msra.mxu0 0.0
        %856 = vmatpush.msra.mxu0 0.0
        %857 = vmatpush.msra.mxu0 0.0
        %858 = vmatpush.msra.mxu0 0.0
        %859 = vmatpush.msra.mxu0 0.0
        %860 = vmatpush.msra.mxu0 0.0
        %861 = vmatpush.msra.mxu0 0.0
        %862 = vmatpush.msra.mxu0 0.0
        %863 = vmatpush.msra.mxu0 0.0
        %864 = vmatpush.msra.mxu0 %v615
        %865 = vmatpush.msra.mxu0 %v614
        %866 = vmatpush.msra.mxu0 %v613
        %867 = vmatpush.msra.mxu0 %v612
        %868 = vmatmul.f32.gmra.mxu0 %v850
        %v869 = vpop.f32.mrf.mxu0
        %v870 = vadd.f32 0.0, %v869
        %871 = vdwg.mxu0
        %v872 = vadd.f32 %v845, %v870
        %v873 = vxor.u32 %v872, 2147483648
        %v874 = vmul.f32 %v873, 1.442695
        %v875 = vpow.pop %v874
        %v876 = vadd.f32 %v875, 1.0
        %v877 = vrcp.pop %v876
        %v878 = vmul.f32 %v876, %v877
        %v879 = vsub.f32 1.0, %v878
        %v880 = vmul.f32 %v877, %v879
        %v881 = vadd.f32 %v877, %v880
        %vm882 = vweird.f32 %v876
        %vm883 = vweird.f32 %v877
        %vm884 = vmor %vm882, %vm883
        %v885 = vsel %vm884, %v877, %v881
        %v886 = vand.u32 2147483647, %v876
        %vm887 = vcmp.eq.f32.partialorder %v886, 8.507059e+37
        %v888 = vand.u32 %v876, 2147483648
        %v889 = vor.u32 1.1754944e-38, %v888
        %v890 = vsel %vm887, %v889, %v885
        %v891 = vmul.f32 1.0, %v890
        %v892 = vtanh.pop %v872
        %v893 = vmul.f32 %v891, %v757
        %895 = vrot.lane.b32.xlu0 %v892, 64
        %v896 = vpop.permute.xlu0 %895
        %v898 = vmul.f32 %v891, %v896
        %900 = vrot.lane.b32.xlu0 %v898, 32
        %v901 = vpop.permute.xlu0 %900
        %v903 = vadd.f32 %v893, %v901
        %v904 = vtanh.pop %v903
        %906 = vrot.lane.b32.xlu0 %v904, 64
        %v907 = vpop.permute.xlu0 %906
        %v909 = vmul.f32 %v891, %v907
        %910 = vmatpush.msra.mxu0 0.0
        %911 = vmatpush.msra.mxu0 0.0
        %912 = vmatpush.msra.mxu0 0.0
        %913 = vmatpush.msra.mxu0 0.0
        %914 = vmatpush.msra.mxu0 0.0
        %915 = vmatpush.msra.mxu0 0.0
        %916 = vmatpush.msra.mxu0 0.0
        %917 = vmatpush.msra.mxu0 0.0
        %918 = vmatpush.msra.mxu0 0.0
        %919 = vmatpush.msra.mxu0 0.0
        %920 = vmatpush.msra.mxu0 0.0
        %921 = vmatpush.msra.mxu0 0.0
        %922 = vmatpush.msra.mxu0 %v607
        %923 = vmatpush.msra.mxu0 %v606
        %924 = vmatpush.msra.mxu0 %v605
        %925 = vmatpush.msra.mxu0 %v604
        %926 = vmatmul.f32.gmra.mxu0 %v825
        %v927 = vpop.f32.mrf.mxu0
        %v928 = vadd.f32 0.0, %v927
        %929 = vdwg.mxu0
        %v930 = vadd.f32 %v587, %v928
        %v931 = vxor.u32 %v930, 2147483648
        %v932 = vmul.f32 %v931, 1.442695
        %v933 = vpow.pop %v932
        %v934 = vadd.f32 %v933, 1.0
        %v935 = vrcp.pop %v934
        %v936 = vmul.f32 %v934, %v935
        %v937 = vsub.f32 1.0, %v936
        %v938 = vmul.f32 %v935, %v937
        %v939 = vadd.f32 %v935, %v938
        %vm940 = vweird.f32 %v934
        %vm941 = vweird.f32 %v935
        %vm942 = vmor %vm940, %vm941
        %v943 = vsel %vm942, %v935, %v939
        %v944 = vand.u32 2147483647, %v934
        %vm945 = vcmp.eq.f32.partialorder %v944, 8.507059e+37
        %v946 = vand.u32 %v934, 2147483648
        %v947 = vor.u32 1.1754944e-38, %v946
        %v948 = vsel %vm945, %v947, %v943
        %v949 = vmul.f32 1.0, %v948
        %v950 = vtanh.pop %v930
        %v951 = vmul.f32 %v949, %v815
        %953 = vrot.lane.b32.xlu0 %v950, 64
        %v954 = vpop.permute.xlu0 %953
        %v956 = vmul.f32 %v949, %v954
        %958 = vrot.lane.b32.xlu0 %v956, 32
        %v959 = vpop.permute.xlu0 %958
        %v961 = vadd.f32 %v951, %v959
        %v962 = vtanh.pop %v961
        %964 = vrot.lane.b32.xlu0 %v962, 64
        %v965 = vpop.permute.xlu0 %964
        %v967 = vmul.f32 %v949, %v965
        %969 = vrot.lane.b32.xlu0 %v967, 32
        %v970 = vpop.permute.xlu0 %969
        %v971 = vsel %vm538, %v970, 0
        %973 = vmatpush.msra.mxu0 0.0
        %974 = vmatpush.msra.mxu0 0.0
        %975 = vmatpush.msra.mxu0 0.0
        %976 = vmatpush.msra.mxu0 0.0
        %977 = vmatpush.msra.mxu0 0.0
        %978 = vmatpush.msra.mxu0 0.0
        %979 = vmatpush.msra.mxu0 0.0
        %980 = vmatpush.msra.mxu0 0.0
        %981 = vmatpush.msra.mxu0 0.0
        %982 = vmatpush.msra.mxu0 0.0
        %983 = vmatpush.msra.mxu0 0.0
        %984 = vmatpush.msra.mxu0 0.0
        %985 = vmatpush.msra.mxu0 %v611
        %986 = vmatpush.msra.mxu0 %v610
        %987 = vmatpush.msra.mxu0 %v609
        %988 = vmatpush.msra.mxu0 %v608
        %989 = vmatmul.f32.gmra.mxu0 %v971
        %v990 = vpop.f32.mrf.mxu0
        %v991 = vadd.f32 %v679, %v990
        %992 = vdwg.mxu0
        %994 = vrot.lane.b32.xlu0 %v909, 32
        %v995 = vpop.permute.xlu0 %994
        %v996 = vsel %vm538, %v995, 0
        %998 = vmatpush.msra.mxu0 0.0
        %999 = vmatpush.msra.mxu0 0.0
        %1000 = vmatpush.msra.mxu0 0.0
        %1001 = vmatpush.msra.mxu0 0.0
        %1002 = vmatpush.msra.mxu0 0.0
        %1003 = vmatpush.msra.mxu0 0.0
        %1004 = vmatpush.msra.mxu0 0.0
        %1005 = vmatpush.msra.mxu0 0.0
        %1006 = vmatpush.msra.mxu0 0.0
        %1007 = vmatpush.msra.mxu0 0.0
        %1008 = vmatpush.msra.mxu0 0.0
        %1009 = vmatpush.msra.mxu0 0.0
        %1010 = vmatpush.msra.mxu0 %v615
        %1011 = vmatpush.msra.mxu0 %v614
        %1012 = vmatpush.msra.mxu0 %v613
        %1013 = vmatpush.msra.mxu0 %v612
        %1014 = vmatmul.f32.gmra.mxu0 %v996
        %v1015 = vpop.f32.mrf.mxu0
        %v1016 = vadd.f32 0.0, %v1015
        %1017 = vdwg.mxu0
        %v1018 = vadd.f32 %v991, %v1016
        %v1019 = vxor.u32 %v1018, 2147483648
        %v1020 = vmul.f32 %v1019, 1.442695
        %v1021 = vpow.pop %v1020
        %v1022 = vadd.f32 %v1021, 1.0
        %v1023 = vrcp.pop %v1022
        %v1024 = vmul.f32 %v1022, %v1023
        %v1025 = vsub.f32 1.0, %v1024
        %v1026 = vmul.f32 %v1023, %v1025
        %v1027 = vadd.f32 %v1023, %v1026
        %vm1028 = vweird.f32 %v1022
        %vm1029 = vweird.f32 %v1023
        %vm1030 = vmor %vm1028, %vm1029
        %v1031 = vsel %vm1030, %v1023, %v1027
        %v1032 = vand.u32 2147483647, %v1022
        %vm1033 = vcmp.eq.f32.partialorder %v1032, 8.507059e+37
        %v1034 = vand.u32 %v1022, 2147483648
        %v1035 = vor.u32 1.1754944e-38, %v1034
        %v1036 = vsel %vm1033, %v1035, %v1031
        %v1037 = vmul.f32 1.0, %v1036
        %v1038 = vtanh.pop %v1018
        %v1039 = vmul.f32 %v1037, %v903
        %1041 = vrot.lane.b32.xlu0 %v1038, 64
        %v1042 = vpop.permute.xlu0 %1041
        %v1044 = vmul.f32 %v1037, %v1042
        %1046 = vrot.lane.b32.xlu0 %v1044, 32
        %v1047 = vpop.permute.xlu0 %1046
        %v1049 = vadd.f32 %v1039, %v1047
        %v1050 = vtanh.pop %v1049
        %1052 = vrot.lane.b32.xlu0 %v1050, 64
        %v1053 = vpop.permute.xlu0 %1052
        %v1055 = vmul.f32 %v1037, %v1053
        %1056 = vmatpush.msra.mxu0 0.0
        %1057 = vmatpush.msra.mxu0 0.0
        %1058 = vmatpush.msra.mxu0 0.0
        %1059 = vmatpush.msra.mxu0 0.0
        %1060 = vmatpush.msra.mxu0 0.0
        %1061 = vmatpush.msra.mxu0 0.0
        %1062 = vmatpush.msra.mxu0 0.0
        %1063 = vmatpush.msra.mxu0 0.0
        %1064 = vmatpush.msra.mxu0 0.0
        %1065 = vmatpush.msra.mxu0 0.0
        %1066 = vmatpush.msra.mxu0 0.0
        %1067 = vmatpush.msra.mxu0 0.0
        %1068 = vmatpush.msra.mxu0 %v607
        %1069 = vmatpush.msra.mxu0 %v606
        %1070 = vmatpush.msra.mxu0 %v605
        %1071 = vmatpush.msra.mxu0 %v604
        %1072 = vmatmul.f32.gmra.mxu0 %v971
        %v1073 = vpop.f32.mrf.mxu0
        %v1074 = vadd.f32 0.0, %v1073
        %1075 = vdwg.mxu0
        %v1076 = vadd.f32 %v590, %v1074
        %v1077 = vxor.u32 %v1076, 2147483648
        %v1078 = vmul.f32 %v1077, 1.442695
        %v1079 = vpow.pop %v1078
        %v1080 = vadd.f32 %v1079, 1.0
        %v1081 = vrcp.pop %v1080
        %v1082 = vmul.f32 %v1080, %v1081
        %v1083 = vsub.f32 1.0, %v1082
        %v1084 = vmul.f32 %v1081, %v1083
        %v1085 = vadd.f32 %v1081, %v1084
        %vm1086 = vweird.f32 %v1080
        %vm1087 = vweird.f32 %v1081
        %vm1088 = vmor %vm1086, %vm1087
        %v1089 = vsel %vm1088, %v1081, %v1085
        %v1090 = vand.u32 2147483647, %v1080
        %vm1091 = vcmp.eq.f32.partialorder %v1090, 8.507059e+37
        %v1092 = vand.u32 %v1080, 2147483648
        %v1093 = vor.u32 1.1754944e-38, %v1092
        %v1094 = vsel %vm1091, %v1093, %v1089
        %v1095 = vmul.f32 1.0, %v1094
        %v1096 = vtanh.pop %v1076
        %v1097 = vmul.f32 %v1095, %v961
        %1099 = vrot.lane.b32.xlu0 %v1096, 64
        %v1100 = vpop.permute.xlu0 %1099
        %v1102 = vmul.f32 %v1095, %v1100
        %1104 = vrot.lane.b32.xlu0 %v1102, 32
        %v1105 = vpop.permute.xlu0 %1104
        %v1107 = vadd.f32 %v1097, %v1105
        %v1108 = vtanh.pop %v1107
        %1110 = vrot.lane.b32.xlu0 %v1108, 64
        %v1111 = vpop.permute.xlu0 %1110
        %v1113 = vmul.f32 %v1095, %v1111
        %1115 = vrot.lane.b32.xlu0 %v1113, 32
        %v1116 = vpop.permute.xlu0 %1115
        %v1117 = vsel %vm538, %v1116, 0
        %1119 = vmatpush.msra.mxu0 0.0
        %1120 = vmatpush.msra.mxu0 0.0
        %1121 = vmatpush.msra.mxu0 0.0
        %1122 = vmatpush.msra.mxu0 0.0
        %1123 = vmatpush.msra.mxu0 0.0
        %1124 = vmatpush.msra.mxu0 0.0
        %1125 = vmatpush.msra.mxu0 0.0
        %1126 = vmatpush.msra.mxu0 0.0
        %1127 = vmatpush.msra.mxu0 0.0
        %1128 = vmatpush.msra.mxu0 0.0
        %1129 = vmatpush.msra.mxu0 0.0
        %1130 = vmatpush.msra.mxu0 0.0
        %1131 = vmatpush.msra.mxu0 %v611
        %1132 = vmatpush.msra.mxu0 %v610
        %1133 = vmatpush.msra.mxu0 %v609
        %1134 = vmatpush.msra.mxu0 %v608
        %1135 = vmatmul.f32.gmra.mxu0 %v1117
        %v1136 = vpop.f32.mrf.mxu0
        %v1137 = vadd.f32 %v679, %v1136
        %1138 = vdwg.mxu0
        %1140 = vrot.lane.b32.xlu0 %v1055, 32
        %v1141 = vpop.permute.xlu0 %1140
        %v1142 = vsel %vm538, %v1141, 0
        %1144 = vmatpush.msra.mxu0 0.0
        %1145 = vmatpush.msra.mxu0 0.0
        %1146 = vmatpush.msra.mxu0 0.0
        %1147 = vmatpush.msra.mxu0 0.0
        %1148 = vmatpush.msra.mxu0 0.0
        %1149 = vmatpush.msra.mxu0 0.0
        %1150 = vmatpush.msra.mxu0 0.0
        %1151 = vmatpush.msra.mxu0 0.0
        %1152 = vmatpush.msra.mxu0 0.0
        %1153 = vmatpush.msra.mxu0 0.0
        %1154 = vmatpush.msra.mxu0 0.0
        %1155 = vmatpush.msra.mxu0 0.0
        %1156 = vmatpush.msra.mxu0 %v615
        %1157 = vmatpush.msra.mxu0 %v614
        %1158 = vmatpush.msra.mxu0 %v613
        %1159 = vmatpush.msra.mxu0 %v612
        %1160 = vmatmul.f32.gmra.mxu0 %v1142
        %v1161 = vpop.f32.mrf.mxu0
        %v1162 = vadd.f32 0.0, %v1161
        %1163 = vdwg.mxu0
        %v1164 = vadd.f32 %v1137, %v1162
        %v1165 = vxor.u32 %v1164, 2147483648
        %v1166 = vmul.f32 %v1165, 1.442695
        %v1167 = vpow.pop %v1166
        %v1168 = vadd.f32 %v1167, 1.0
        %v1169 = vrcp.pop %v1168
        %v1170 = vmul.f32 %v1168, %v1169
        %v1171 = vsub.f32 1.0, %v1170
        %v1172 = vmul.f32 %v1169, %v1171
        %v1173 = vadd.f32 %v1169, %v1172
        %vm1174 = vweird.f32 %v1168
        %vm1175 = vweird.f32 %v1169
        %vm1176 = vmor %vm1174, %vm1175
        %v1177 = vsel %vm1176, %v1169, %v1173
        %v1178 = vand.u32 2147483647, %v1168
        %vm1179 = vcmp.eq.f32.partialorder %v1178, 8.507059e+37
        %v1180 = vand.u32 %v1168, 2147483648
        %v1181 = vor.u32 1.1754944e-38, %v1180
        %v1182 = vsel %vm1179, %v1181, %v1177
        %v1183 = vmul.f32 1.0, %v1182
        %v1184 = vtanh.pop %v1164
        %v1185 = vmul.f32 %v1183, %v1049
        %1187 = vrot.lane.b32.xlu0 %v1184, 64
        %v1188 = vpop.permute.xlu0 %1187
        %v1190 = vmul.f32 %v1183, %v1188
        %1192 = vrot.lane.b32.xlu0 %v1190, 32
        %v1193 = vpop.permute.xlu0 %1192
        %v1195 = vadd.f32 %v1185, %v1193
        %v1196 = vtanh.pop %v1195
        %1198 = vrot.lane.b32.xlu0 %v1196, 64
        %v1199 = vpop.permute.xlu0 %1198
        %v1201 = vmul.f32 %v1183, %v1199
        %1202 = vmatpush.msra.mxu0 0.0
        %1203 = vmatpush.msra.mxu0 0.0
        %1204 = vmatpush.msra.mxu0 0.0
        %1205 = vmatpush.msra.mxu0 0.0
        %1206 = vmatpush.msra.mxu0 0.0
        %1207 = vmatpush.msra.mxu0 0.0
        %1208 = vmatpush.msra.mxu0 0.0
        %1209 = vmatpush.msra.mxu0 0.0
        %1210 = vmatpush.msra.mxu0 0.0
        %1211 = vmatpush.msra.mxu0 0.0
        %1212 = vmatpush.msra.mxu0 0.0
        %1213 = vmatpush.msra.mxu0 0.0
        %1214 = vmatpush.msra.mxu0 %v607
        %1215 = vmatpush.msra.mxu0 %v606
        %1216 = vmatpush.msra.mxu0 %v605
        %1217 = vmatpush.msra.mxu0 %v604
        %1218 = vmatmul.f32.gmra.mxu0 %v1117
        %v1219 = vpop.f32.mrf.mxu0
        %v1220 = vadd.f32 0.0, %v1219
        %1221 = vdwg.mxu0
        %v1222 = vadd.f32 %v593, %v1220
        %v1223 = vxor.u32 %v1222, 2147483648
        %v1224 = vmul.f32 %v1223, 1.442695
        %v1225 = vpow.pop %v1224
        %v1226 = vadd.f32 %v1225, 1.0
        %v1227 = vrcp.pop %v1226
        %v1228 = vmul.f32 %v1226, %v1227
        %v1229 = vsub.f32 1.0, %v1228
        %v1230 = vmul.f32 %v1227, %v1229
        %v1231 = vadd.f32 %v1227, %v1230
        %vm1232 = vweird.f32 %v1226
        %vm1233 = vweird.f32 %v1227
        %vm1234 = vmor %vm1232, %vm1233
        %v1235 = vsel %vm1234, %v1227, %v1231
        %v1236 = vand.u32 2147483647, %v1226
        %vm1237 = vcmp.eq.f32.partialorder %v1236, 8.507059e+37
        %v1238 = vand.u32 %v1226, 2147483648
        %v1239 = vor.u32 1.1754944e-38, %v1238
        %v1240 = vsel %vm1237, %v1239, %v1235
        %v1241 = vmul.f32 1.0, %v1240
        %v1242 = vtanh.pop %v1222
        %v1243 = vmul.f32 %v1241, %v1107
        %1245 = vrot.lane.b32.xlu0 %v1242, 64
        %v1246 = vpop.permute.xlu0 %1245
        %v1248 = vmul.f32 %v1241, %v1246
        %1250 = vrot.lane.b32.xlu0 %v1248, 32
        %v1251 = vpop.permute.xlu0 %1250
        %v1253 = vadd.f32 %v1243, %v1251
        %v1254 = vtanh.pop %v1253
        %1256 = vrot.lane.b32.xlu0 %v1254, 64
        %v1257 = vpop.permute.xlu0 %1256
        %v1259 = vmul.f32 %v1241, %v1257
        %1261 = vrot.lane.b32.xlu0 %v1259, 32
        %v1262 = vpop.permute.xlu0 %1261
        %v1263 = vsel %vm538, %v1262, 0
        %1265 = vmatpush.msra.mxu0 0.0
        %1266 = vmatpush.msra.mxu0 0.0
        %1267 = vmatpush.msra.mxu0 0.0
        %1268 = vmatpush.msra.mxu0 0.0
        %1269 = vmatpush.msra.mxu0 0.0
        %1270 = vmatpush.msra.mxu0 0.0
        %1271 = vmatpush.msra.mxu0 0.0
        %1272 = vmatpush.msra.mxu0 0.0
        %1273 = vmatpush.msra.mxu0 0.0
        %1274 = vmatpush.msra.mxu0 0.0
        %1275 = vmatpush.msra.mxu0 0.0
        %1276 = vmatpush.msra.mxu0 0.0
        %1277 = vmatpush.msra.mxu0 %v611
        %1278 = vmatpush.msra.mxu0 %v610
        %1279 = vmatpush.msra.mxu0 %v609
        %1280 = vmatpush.msra.mxu0 %v608
        %1281 = vmatmul.f32.gmra.mxu0 %v1263
        %v1282 = vpop.f32.mrf.mxu0
        %v1283 = vadd.f32 %v679, %v1282
        %1284 = vdwg.mxu0
        %1286 = vrot.lane.b32.xlu0 %v1201, 32
        %v1287 = vpop.permute.xlu0 %1286
        %v1288 = vsel %vm538, %v1287, 0
        %1290 = vmatpush.msra.mxu0 0.0
        %1291 = vmatpush.msra.mxu0 0.0
        %1292 = vmatpush.msra.mxu0 0.0
        %1293 = vmatpush.msra.mxu0 0.0
        %1294 = vmatpush.msra.mxu0 0.0
        %1295 = vmatpush.msra.mxu0 0.0
        %1296 = vmatpush.msra.mxu0 0.0
        %1297 = vmatpush.msra.mxu0 0.0
        %1298 = vmatpush.msra.mxu0 0.0
        %1299 = vmatpush.msra.mxu0 0.0
        %1300 = vmatpush.msra.mxu0 0.0
        %1301 = vmatpush.msra.mxu0 0.0
        %1302 = vmatpush.msra.mxu0 %v615
        %1303 = vmatpush.msra.mxu0 %v614
        %1304 = vmatpush.msra.mxu0 %v613
        %1305 = vmatpush.msra.mxu0 %v612
        %1306 = vmatmul.f32.gmra.mxu0 %v1288
        %v1307 = vpop.f32.mrf.mxu0
        %v1308 = vadd.f32 0.0, %v1307
        %1309 = vdwg.mxu0
        %v1310 = vadd.f32 %v1283, %v1308
        %v1311 = vxor.u32 %v1310, 2147483648
        %v1312 = vmul.f32 %v1311, 1.442695
        %v1313 = vpow.pop %v1312
        %v1314 = vadd.f32 %v1313, 1.0
        %v1315 = vrcp.pop %v1314
        %v1316 = vmul.f32 %v1314, %v1315
        %v1317 = vsub.f32 1.0, %v1316
        %v1318 = vmul.f32 %v1315, %v1317
        %v1319 = vadd.f32 %v1315, %v1318
        %vm1320 = vweird.f32 %v1314
        %vm1321 = vweird.f32 %v1315
        %vm1322 = vmor %vm1320, %vm1321
        %v1323 = vsel %vm1322, %v1315, %v1319
        %v1324 = vand.u32 2147483647, %v1314
        %vm1325 = vcmp.eq.f32.partialorder %v1324, 8.507059e+37
        %v1326 = vand.u32 %v1314, 2147483648
        %v1327 = vor.u32 1.1754944e-38, %v1326
        %v1328 = vsel %vm1325, %v1327, %v1323
        %v1329 = vmul.f32 1.0, %v1328
        %v1330 = vtanh.pop %v1310
        %v1331 = vmul.f32 %v1329, %v1195
        %1333 = vrot.lane.b32.xlu0 %v1330, 64
        %v1334 = vpop.permute.xlu0 %1333
        %v1336 = vmul.f32 %v1329, %v1334
        %1338 = vrot.lane.b32.xlu0 %v1336, 32
        %v1339 = vpop.permute.xlu0 %1338
        %v1341 = vadd.f32 %v1331, %v1339
        %v1342 = vtanh.pop %v1341
        %1344 = vrot.lane.b32.xlu0 %v1342, 64
        %v1345 = vpop.permute.xlu0 %1344
        %v1347 = vmul.f32 %v1329, %v1345
        %1348 = vmatpush.msra.mxu0 0.0
        %1349 = vmatpush.msra.mxu0 0.0
        %1350 = vmatpush.msra.mxu0 0.0
        %1351 = vmatpush.msra.mxu0 0.0
        %1352 = vmatpush.msra.mxu0 0.0
        %1353 = vmatpush.msra.mxu0 0.0
        %1354 = vmatpush.msra.mxu0 0.0
        %1355 = vmatpush.msra.mxu0 0.0
        %1356 = vmatpush.msra.mxu0 0.0
        %1357 = vmatpush.msra.mxu0 0.0
        %1358 = vmatpush.msra.mxu0 0.0
        %1359 = vmatpush.msra.mxu0 0.0
        %1360 = vmatpush.msra.mxu0 %v607
        %1361 = vmatpush.msra.mxu0 %v606
        %1362 = vmatpush.msra.mxu0 %v605
        %1363 = vmatpush.msra.mxu0 %v604
        %1364 = vmatmul.f32.gmra.mxu0 %v1263
        %v1365 = vpop.f32.mrf.mxu0
        %v1366 = vadd.f32 0.0, %v1365
        %1367 = vdwg.mxu0
        %v1368 = vadd.f32 %v596, %v1366
        %v1369 = vxor.u32 %v1368, 2147483648
        %v1370 = vmul.f32 %v1369, 1.442695
        %v1371 = vpow.pop %v1370
        %v1372 = vadd.f32 %v1371, 1.0
        %v1373 = vrcp.pop %v1372
        %v1374 = vmul.f32 %v1372, %v1373
        %v1375 = vsub.f32 1.0, %v1374
        %v1376 = vmul.f32 %v1373, %v1375
        %v1377 = vadd.f32 %v1373, %v1376
        %vm1378 = vweird.f32 %v1372
        %vm1379 = vweird.f32 %v1373
        %vm1380 = vmor %vm1378, %vm1379
        %v1381 = vsel %vm1380, %v1373, %v1377
        %v1382 = vand.u32 2147483647, %v1372
        %vm1383 = vcmp.eq.f32.partialorder %v1382, 8.507059e+37
        %v1384 = vand.u32 %v1372, 2147483648
        %v1385 = vor.u32 1.1754944e-38, %v1384
        %v1386 = vsel %vm1383, %v1385, %v1381
        %v1387 = vmul.f32 1.0, %v1386
        %v1388 = vtanh.pop %v1368
        %v1389 = vmul.f32 %v1387, %v1253
        %1391 = vrot.lane.b32.xlu0 %v1388, 64
        %v1392 = vpop.permute.xlu0 %1391
        %v1394 = vmul.f32 %v1387, %v1392
        %1396 = vrot.lane.b32.xlu0 %v1394, 32
        %v1397 = vpop.permute.xlu0 %1396
        %v1399 = vadd.f32 %v1389, %v1397
        %v1400 = vtanh.pop %v1399
        %1402 = vrot.lane.b32.xlu0 %v1400, 64
        %v1403 = vpop.permute.xlu0 %1402
        %v1405 = vmul.f32 %v1387, %v1403
        %1407 = vrot.lane.b32.xlu0 %v1405, 32
        %v1408 = vpop.permute.xlu0 %1407
        %v1409 = vsel %vm538, %v1408, 0
        %1411 = vmatpush.msra.mxu0 0.0
        %1412 = vmatpush.msra.mxu0 0.0
        %1413 = vmatpush.msra.mxu0 0.0
        %1414 = vmatpush.msra.mxu0 0.0
        %1415 = vmatpush.msra.mxu0 0.0
        %1416 = vmatpush.msra.mxu0 0.0
        %1417 = vmatpush.msra.mxu0 0.0
        %1418 = vmatpush.msra.mxu0 0.0
        %1419 = vmatpush.msra.mxu0 0.0
        %1420 = vmatpush.msra.mxu0 0.0
        %1421 = vmatpush.msra.mxu0 0.0
        %1422 = vmatpush.msra.mxu0 0.0
        %1423 = vmatpush.msra.mxu0 %v611
        %1424 = vmatpush.msra.mxu0 %v610
        %1425 = vmatpush.msra.mxu0 %v609
        %1426 = vmatpush.msra.mxu0 %v608
        %1427 = vmatmul.f32.gmra.mxu0 %v1409
        %v1428 = vpop.f32.mrf.mxu0
        %v1429 = vadd.f32 %v679, %v1428
        %1430 = vdwg.mxu0
        %1432 = vrot.lane.b32.xlu0 %v1347, 32
        %v1433 = vpop.permute.xlu0 %1432
        %v1434 = vsel %vm538, %v1433, 0
        %1436 = vmatpush.msra.mxu0 0.0
        %1437 = vmatpush.msra.mxu0 0.0
        %1438 = vmatpush.msra.mxu0 0.0
        %1439 = vmatpush.msra.mxu0 0.0
        %1440 = vmatpush.msra.mxu0 0.0
        %1441 = vmatpush.msra.mxu0 0.0
        %1442 = vmatpush.msra.mxu0 0.0
        %1443 = vmatpush.msra.mxu0 0.0
        %1444 = vmatpush.msra.mxu0 0.0
        %1445 = vmatpush.msra.mxu0 0.0
        %1446 = vmatpush.msra.mxu0 0.0
        %1447 = vmatpush.msra.mxu0 0.0
        %1448 = vmatpush.msra.mxu0 %v615
        %1449 = vmatpush.msra.mxu0 %v614
        %1450 = vmatpush.msra.mxu0 %v613
        %1451 = vmatpush.msra.mxu0 %v612
        %1452 = vmatmul.f32.gmra.mxu0 %v1434
        %v1453 = vpop.f32.mrf.mxu0
        %v1454 = vadd.f32 0.0, %v1453
        %1455 = vdwg.mxu0
        %v1456 = vadd.f32 %v1429, %v1454
        %v1457 = vxor.u32 %v1456, 2147483648
        %v1458 = vmul.f32 %v1457, 1.442695
        %v1459 = vpow.pop %v1458
        %v1460 = vadd.f32 %v1459, 1.0
        %v1461 = vrcp.pop %v1460
        %v1462 = vmul.f32 %v1460, %v1461
        %v1463 = vsub.f32 1.0, %v1462
        %v1464 = vmul.f32 %v1461, %v1463
        %v1465 = vadd.f32 %v1461, %v1464
        %vm1466 = vweird.f32 %v1460
        %vm1467 = vweird.f32 %v1461
        %vm1468 = vmor %vm1466, %vm1467
        %v1469 = vsel %vm1468, %v1461, %v1465
        %v1470 = vand.u32 2147483647, %v1460
        %vm1471 = vcmp.eq.f32.partialorder %v1470, 8.507059e+37
        %v1472 = vand.u32 %v1460, 2147483648
        %v1473 = vor.u32 1.1754944e-38, %v1472
        %v1474 = vsel %vm1471, %v1473, %v1469
        %v1475 = vmul.f32 1.0, %v1474
        %v1476 = vtanh.pop %v1456
        %v1477 = vmul.f32 %v1475, %v1341
        %1479 = vrot.lane.b32.xlu0 %v1476, 64
        %v1480 = vpop.permute.xlu0 %1479
        %v1482 = vmul.f32 %v1475, %v1480
        %1484 = vrot.lane.b32.xlu0 %v1482, 32
        %v1485 = vpop.permute.xlu0 %1484
        %v1487 = vadd.f32 %v1477, %v1485
        %v1488 = vtanh.pop %v1487
        %1490 = vrot.lane.b32.xlu0 %v1488, 64
        %v1491 = vpop.permute.xlu0 %1490
        %v1493 = vmul.f32 %v1475, %v1491
        %1494 = vmatpush.msra.mxu0 0.0
        %1495 = vmatpush.msra.mxu0 0.0
        %1496 = vmatpush.msra.mxu0 0.0
        %1497 = vmatpush.msra.mxu0 0.0
        %1498 = vmatpush.msra.mxu0 0.0
        %1499 = vmatpush.msra.mxu0 0.0
        %1500 = vmatpush.msra.mxu0 0.0
        %1501 = vmatpush.msra.mxu0 0.0
        %1502 = vmatpush.msra.mxu0 0.0
        %1503 = vmatpush.msra.mxu0 0.0
        %1504 = vmatpush.msra.mxu0 0.0
        %1505 = vmatpush.msra.mxu0 0.0
        %1506 = vmatpush.msra.mxu0 %v607
        %1507 = vmatpush.msra.mxu0 %v606
        %1508 = vmatpush.msra.mxu0 %v605
        %1509 = vmatpush.msra.mxu0 %v604
        %1510 = vmatmul.f32.gmra.mxu0 %v1409
        %v1511 = vpop.f32.mrf.mxu0
        %v1512 = vadd.f32 0.0, %v1511
        %1513 = vdwg.mxu0
        %v1514 = vadd.f32 %v599, %v1512
        %v1515 = vxor.u32 %v1514, 2147483648
        %v1516 = vmul.f32 %v1515, 1.442695
        %v1517 = vpow.pop %v1516
        %v1518 = vadd.f32 %v1517, 1.0
        %v1519 = vrcp.pop %v1518
        %v1520 = vmul.f32 %v1518, %v1519
        %v1521 = vsub.f32 1.0, %v1520
        %v1522 = vmul.f32 %v1519, %v1521
        %v1523 = vadd.f32 %v1519, %v1522
        %vm1524 = vweird.f32 %v1518
        %vm1525 = vweird.f32 %v1519
        %vm1526 = vmor %vm1524, %vm1525
        %v1527 = vsel %vm1526, %v1519, %v1523
        %v1528 = vand.u32 2147483647, %v1518
        %vm1529 = vcmp.eq.f32.partialorder %v1528, 8.507059e+37
        %v1530 = vand.u32 %v1518, 2147483648
        %v1531 = vor.u32 1.1754944e-38, %v1530
        %v1532 = vsel %vm1529, %v1531, %v1527
        %v1533 = vmul.f32 1.0, %v1532
        %v1534 = vtanh.pop %v1514
        %v1535 = vmul.f32 %v1533, %v1399
        %1537 = vrot.lane.b32.xlu0 %v1534, 64
        %v1538 = vpop.permute.xlu0 %1537
        %v1540 = vmul.f32 %v1533, %v1538
        %1542 = vrot.lane.b32.xlu0 %v1540, 32
        %v1543 = vpop.permute.xlu0 %1542
        %v1545 = vadd.f32 %v1535, %v1543
        %v1546 = vtanh.pop %v1545
        %1548 = vrot.lane.b32.xlu0 %v1546, 64
        %v1549 = vpop.permute.xlu0 %1548
        %v1551 = vmul.f32 %v1533, %v1549
        %1553 = vrot.lane.b32.xlu0 %v1551, 32
        %v1554 = vpop.permute.xlu0 %1553
        %v1555 = vsel %vm538, %v1554, 0
        %1557 = vmatpush.msra.mxu0 0.0
        %1558 = vmatpush.msra.mxu0 0.0
        %1559 = vmatpush.msra.mxu0 0.0
        %1560 = vmatpush.msra.mxu0 0.0
        %1561 = vmatpush.msra.mxu0 0.0
        %1562 = vmatpush.msra.mxu0 0.0
        %1563 = vmatpush.msra.mxu0 0.0
        %1564 = vmatpush.msra.mxu0 0.0
        %1565 = vmatpush.msra.mxu0 0.0
        %1566 = vmatpush.msra.mxu0 0.0
        %1567 = vmatpush.msra.mxu0 0.0
        %1568 = vmatpush.msra.mxu0 0.0
        %1569 = vmatpush.msra.mxu0 %v611
        %1570 = vmatpush.msra.mxu0 %v610
        %1571 = vmatpush.msra.mxu0 %v609
        %1572 = vmatpush.msra.mxu0 %v608
        %1573 = vmatmul.f32.gmra.mxu0 %v1555
        %v1574 = vpop.f32.mrf.mxu0
        %v1575 = vadd.f32 %v679, %v1574
        %1576 = vdwg.mxu0
        %1578 = vrot.lane.b32.xlu0 %v1493, 32
        %v1579 = vpop.permute.xlu0 %1578
        %v1580 = vsel %vm538, %v1579, 0
        %1582 = vmatpush.msra.mxu0 0.0
        %1583 = vmatpush.msra.mxu0 0.0
        %1584 = vmatpush.msra.mxu0 0.0
        %1585 = vmatpush.msra.mxu0 0.0
        %1586 = vmatpush.msra.mxu0 0.0
        %1587 = vmatpush.msra.mxu0 0.0
        %1588 = vmatpush.msra.mxu0 0.0
        %1589 = vmatpush.msra.mxu0 0.0
        %1590 = vmatpush.msra.mxu0 0.0
        %1591 = vmatpush.msra.mxu0 0.0
        %1592 = vmatpush.msra.mxu0 0.0
        %1593 = vmatpush.msra.mxu0 0.0
        %1594 = vmatpush.msra.mxu0 %v615
        %1595 = vmatpush.msra.mxu0 %v614
        %1596 = vmatpush.msra.mxu0 %v613
        %1597 = vmatpush.msra.mxu0 %v612
        %1598 = vmatmul.f32.gmra.mxu0 %v1580
        %v1599 = vpop.f32.mrf.mxu0
        %v1600 = vadd.f32 0.0, %v1599
        %1601 = vdwg.mxu0
        %v1602 = vadd.f32 %v1575, %v1600
        %v1603 = vxor.u32 %v1602, 2147483648
        %v1604 = vmul.f32 %v1603, 1.442695
        %v1605 = vpow.pop %v1604
        %v1606 = vadd.f32 %v1605, 1.0
        %v1607 = vrcp.pop %v1606
        %v1608 = vmul.f32 %v1606, %v1607
        %v1609 = vsub.f32 1.0, %v1608
        %v1610 = vmul.f32 %v1607, %v1609
        %v1611 = vadd.f32 %v1607, %v1610
        %vm1612 = vweird.f32 %v1606
        %vm1613 = vweird.f32 %v1607
        %vm1614 = vmor %vm1612, %vm1613
        %v1615 = vsel %vm1614, %v1607, %v1611
        %v1616 = vand.u32 2147483647, %v1606
        %vm1617 = vcmp.eq.f32.partialorder %v1616, 8.507059e+37
        %v1618 = vand.u32 %v1606, 2147483648
        %v1619 = vor.u32 1.1754944e-38, %v1618
        %v1620 = vsel %vm1617, %v1619, %v1615
        %v1621 = vmul.f32 1.0, %v1620
        %v1622 = vtanh.pop %v1602
        %v1623 = vmul.f32 %v1621, %v1487
        %1625 = vrot.lane.b32.xlu0 %v1622, 64
        %v1626 = vpop.permute.xlu0 %1625
        %v1628 = vmul.f32 %v1621, %v1626
        %1630 = vrot.lane.b32.xlu0 %v1628, 32
        %v1631 = vpop.permute.xlu0 %1630
        %v1633 = vadd.f32 %v1623, %v1631
        %v1634 = vtanh.pop %v1633
        %1636 = vrot.lane.b32.xlu0 %v1634, 64
        %v1637 = vpop.permute.xlu0 %1636
        %v1639 = vmul.f32 %v1621, %v1637
        %1640 = vmatpush.msra.mxu0 0.0
        %1641 = vmatpush.msra.mxu0 0.0
        %1642 = vmatpush.msra.mxu0 0.0
        %1643 = vmatpush.msra.mxu0 0.0
        %1644 = vmatpush.msra.mxu0 0.0
        %1645 = vmatpush.msra.mxu0 0.0
        %1646 = vmatpush.msra.mxu0 0.0
        %1647 = vmatpush.msra.mxu0 0.0
        %1648 = vmatpush.msra.mxu0 0.0
        %1649 = vmatpush.msra.mxu0 0.0
        %1650 = vmatpush.msra.mxu0 0.0
        %1651 = vmatpush.msra.mxu0 0.0
        %1652 = vmatpush.msra.mxu0 %v607
        %1653 = vmatpush.msra.mxu0 %v606
        %1654 = vmatpush.msra.mxu0 %v605
        %1655 = vmatpush.msra.mxu0 %v604
        %1656 = vmatmul.f32.gmra.mxu0 %v1555
        %v1657 = vpop.f32.mrf.mxu0
        %v1658 = vadd.f32 0.0, %v1657
        %1659 = vdwg.mxu0
        %v1660 = vadd.f32 %v602, %v1658
        %v1661 = vxor.u32 %v1660, 2147483648
        %v1662 = vmul.f32 %v1661, 1.442695
        %v1663 = vpow.pop %v1662
        %v1664 = vadd.f32 %v1663, 1.0
        %v1665 = vrcp.pop %v1664
        %v1666 = vmul.f32 %v1664, %v1665
        %v1667 = vsub.f32 1.0, %v1666
        %v1668 = vmul.f32 %v1665, %v1667
        %v1669 = vadd.f32 %v1665, %v1668
        %vm1670 = vweird.f32 %v1664
        %vm1671 = vweird.f32 %v1665
        %vm1672 = vmor %vm1670, %vm1671
        %v1673 = vsel %vm1672, %v1665, %v1669
        %v1674 = vand.u32 2147483647, %v1664
        %vm1675 = vcmp.eq.f32.partialorder %v1674, 8.507059e+37
        %v1676 = vand.u32 %v1664, 2147483648
        %v1677 = vor.u32 1.1754944e-38, %v1676
        %v1678 = vsel %vm1675, %v1677, %v1673
        %v1679 = vmul.f32 1.0, %v1678
        %v1680 = vtanh.pop %v1660
        %v1681 = vmul.f32 %v1679, %v1545
        %1683 = vrot.lane.b32.xlu0 %v1680, 64
        %v1684 = vpop.permute.xlu0 %1683
        %v1686 = vmul.f32 %v1679, %v1684
        %1688 = vrot.lane.b32.xlu0 %v1686, 32
        %v1689 = vpop.permute.xlu0 %1688
        %v1691 = vadd.f32 %v1681, %v1689
        %v1692 = vtanh.pop %v1691
        %1694 = vrot.lane.b32.xlu0 %v1692, 64
        %v1695 = vpop.permute.xlu0 %1694
        %v1697 = vmul.f32 %v1679, %v1695
        %1699 = vrot.lane.b32.xlu0 %v1697, 32
        %v1700 = vpop.permute.xlu0 %1699
        %v1701 = vsel %vm538, %v1700, 0
        %1703 = vmatpush.msra.mxu0 0.0
        %1704 = vmatpush.msra.mxu0 0.0
        %1705 = vmatpush.msra.mxu0 0.0
        %1706 = vmatpush.msra.mxu0 0.0
        %1707 = vmatpush.msra.mxu0 0.0
        %1708 = vmatpush.msra.mxu0 0.0
        %1709 = vmatpush.msra.mxu0 0.0
        %1710 = vmatpush.msra.mxu0 0.0
        %1711 = vmatpush.msra.mxu0 0.0
        %1712 = vmatpush.msra.mxu0 0.0
        %1713 = vmatpush.msra.mxu0 0.0
        %1714 = vmatpush.msra.mxu0 0.0
        %1715 = vmatpush.msra.mxu0 %v611
        %1716 = vmatpush.msra.mxu0 %v610
        %1717 = vmatpush.msra.mxu0 %v609
        %1718 = vmatpush.msra.mxu0 %v608
        %1719 = vmatmul.f32.gmra.mxu0 %v1701
        %v1720 = vpop.f32.mrf.mxu0
        %v1721 = vadd.f32 %v679, %v1720
        %1722 = vdwg.mxu0
        %1724 = vrot.lane.b32.xlu0 %v1639, 32
        %v1725 = vpop.permute.xlu0 %1724
        %v1726 = vsel %vm538, %v1725, 0
        %1728 = vmatpush.msra.mxu0 0.0
        %1729 = vmatpush.msra.mxu0 0.0
        %1730 = vmatpush.msra.mxu0 0.0
        %1731 = vmatpush.msra.mxu0 0.0
        %1732 = vmatpush.msra.mxu0 0.0
        %1733 = vmatpush.msra.mxu0 0.0
        %1734 = vmatpush.msra.mxu0 0.0
        %1735 = vmatpush.msra.mxu0 0.0
        %1736 = vmatpush.msra.mxu0 0.0
        %1737 = vmatpush.msra.mxu0 0.0
        %1738 = vmatpush.msra.mxu0 0.0
        %1739 = vmatpush.msra.mxu0 0.0
        %1740 = vmatpush.msra.mxu0 %v615
        %1741 = vmatpush.msra.mxu0 %v614
        %1742 = vmatpush.msra.mxu0 %v613
        %1743 = vmatpush.msra.mxu0 %v612
        %1744 = vmatmul.f32.gmra.mxu0 %v1726
        %v1745 = vpop.f32.mrf.mxu0
        %v1746 = vadd.f32 0.0, %v1745
        %1747 = vdwg.mxu0
        %v1748 = vadd.f32 %v1721, %v1746
        %v1749 = vxor.u32 %v1748, 2147483648
        %v1750 = vmul.f32 %v1749, 1.442695
        %v1751 = vpow.pop %v1750
        %v1752 = vadd.f32 %v1751, 1.0
        %v1753 = vrcp.pop %v1752
        %v1754 = vmul.f32 %v1752, %v1753
        %v1755 = vsub.f32 1.0, %v1754
        %v1756 = vmul.f32 %v1753, %v1755
        %v1757 = vadd.f32 %v1753, %v1756
        %vm1758 = vweird.f32 %v1752
        %vm1759 = vweird.f32 %v1753
        %vm1760 = vmor %vm1758, %vm1759
        %v1761 = vsel %vm1760, %v1753, %v1757
        %v1762 = vand.u32 2147483647, %v1752
        %vm1763 = vcmp.eq.f32.partialorder %v1762, 8.507059e+37
        %v1764 = vand.u32 %v1752, 2147483648
        %v1765 = vor.u32 1.1754944e-38, %v1764
        %v1766 = vsel %vm1763, %v1765, %v1761
        %v1767 = vmul.f32 1.0, %v1766
        %v1768 = vtanh.pop %v1748
        %v1769 = vmul.f32 %v1767, %v1633
        %1771 = vrot.lane.b32.xlu0 %v1768, 64
        %v1772 = vpop.permute.xlu0 %1771
        %v1774 = vmul.f32 %v1767, %v1772
        %1776 = vrot.lane.b32.xlu0 %v1774, 32
        %v1777 = vpop.permute.xlu0 %1776
        %v1779 = vadd.f32 %v1769, %v1777
        %v1780 = vtanh.pop %v1779
        %1782 = vrot.lane.b32.xlu0 %v1780, 64
        %v1783 = vpop.permute.xlu0 %1782
        %v1785 = vmul.f32 %v1767, %v1783
        %v1786 = vlaneseq
        %v1787 = vand.u32 %v1786, 127
        %v1788 = vmul.f32 %v763, %v763
        %v1789 = vmul.f32 %v909, %v763
        %v1790 = vmul.f32 %v1055, %v763
        %v1791 = vmul.f32 %v1201, %v763
        %v1792 = vmul.f32 %v1347, %v763
        %v1793 = vmul.f32 %v1493, %v763
        %v1794 = vmul.f32 %v1639, %v763
        %v1795 = vmul.f32 %v1785, %v763
        %1804 = vrot.lane.b32.xlu0 %v1788, 32
        %v1805 = vpop.permute.xlu0 %1804
        %1806 = vrot.lane.b32.xlu0 %v1789, 32
        %v1807 = vpop.permute.xlu0 %1806
        %1808 = vrot.lane.b32.xlu0 %v1790, 32
        %v1809 = vpop.permute.xlu0 %1808
        %1810 = vrot.lane.b32.xlu0 %v1791, 32
        %v1811 = vpop.permute.xlu0 %1810
        %1812 = vrot.lane.b32.xlu0 %v1792, 32
        %v1813 = vpop.permute.xlu0 %1812
        %1814 = vrot.lane.b32.xlu0 %v1793, 32
        %v1815 = vpop.permute.xlu0 %1814
        %1816 = vrot.lane.b32.xlu0 %v1794, 32
        %v1817 = vpop.permute.xlu0 %1816
        %1818 = vrot.lane.b32.xlu0 %v1795, 32
        %v1819 = vpop.permute.xlu0 %1818
        %v1828 = vsel %vm538, %v1805, 0.0
        %1829 = vadd.xlane.f32.xlu0 %v1828
        %v1830 = vpop.xlane.xlu0 %1829
        %v1831 = vsel %vm538, %v1807, 0.0
        %1832 = vadd.xlane.f32.xlu0 %v1831
        %v1833 = vpop.xlane.xlu0 %1832
        %v1834 = vsel %vm538, %v1809, 0.0
        %1835 = vadd.xlane.f32.xlu0 %v1834
        %v1836 = vpop.xlane.xlu0 %1835
        %v1837 = vsel %vm538, %v1811, 0.0
        %1838 = vadd.xlane.f32.xlu0 %v1837
        %v1839 = vpop.xlane.xlu0 %1838
        %v1840 = vsel %vm538, %v1813, 0.0
        %1841 = vadd.xlane.f32.xlu0 %v1840
        %v1842 = vpop.xlane.xlu0 %1841
        %v1843 = vsel %vm538, %v1815, 0.0
        %1844 = vadd.xlane.f32.xlu0 %v1843
        %v1845 = vpop.xlane.xlu0 %1844
        %v1846 = vsel %vm538, %v1817, 0.0
        %1847 = vadd.xlane.f32.xlu0 %v1846
        %v1848 = vpop.xlane.xlu0 %1847
        %v1849 = vsel %vm538, %v1819, 0.0
        %1850 = vadd.xlane.f32.xlu0 %v1849
        %v1851 = vpop.xlane.xlu0 %1850
        %vm1852 = vcmp.eq.s32.totalorder %v1787, 0
        %v1853 = vsel %vm1852, %v1830, 0.0
        %v1854 = vsel %vm1852, %v1833, 0.0
        %v1855 = vsel %vm1852, %v1836, 0.0
        %v1856 = vsel %vm1852, %v1839, 0.0
        %v1857 = vsel %vm1852, %v1842, 0.0
        %v1858 = vsel %vm1852, %v1845, 0.0
        %v1859 = vsel %vm1852, %v1848, 0.0
        %v1860 = vsel %vm1852, %v1851, 0.0
        %v1861 = vadd.f32 %v1853, 0.0
        %v1862 = vadd.f32 %v1854, 0.0
        %v1863 = vadd.f32 %v1855, 0.0
        %v1864 = vadd.f32 %v1856, 0.0
        %v1865 = vadd.f32 %v1857, 0.0
        %v1866 = vadd.f32 %v1858, 0.0
        %v1867 = vadd.f32 %v1859, 0.0
        %v1868 = vadd.f32 %v1860, 0.0
        %v1869 = vmul.f32 %v909, %v909
        %v1870 = vmul.f32 %v1055, %v909
        %v1871 = vmul.f32 %v1201, %v909
        %v1872 = vmul.f32 %v1347, %v909
        %v1873 = vmul.f32 %v1493, %v909
        %v1874 = vmul.f32 %v1639, %v909
        %v1875 = vmul.f32 %v1785, %v909
        %1883 = vrot.lane.b32.xlu0 %v1869, 32
        %v1884 = vpop.permute.xlu0 %1883
        %1885 = vrot.lane.b32.xlu0 %v1870, 32
        %v1886 = vpop.permute.xlu0 %1885
        %1887 = vrot.lane.b32.xlu0 %v1871, 32
        %v1888 = vpop.permute.xlu0 %1887
        %1889 = vrot.lane.b32.xlu0 %v1872, 32
        %v1890 = vpop.permute.xlu0 %1889
        %1891 = vrot.lane.b32.xlu0 %v1873, 32
        %v1892 = vpop.permute.xlu0 %1891
        %1893 = vrot.lane.b32.xlu0 %v1874, 32
        %v1894 = vpop.permute.xlu0 %1893
        %1895 = vrot.lane.b32.xlu0 %v1875, 32
        %v1896 = vpop.permute.xlu0 %1895
        %v1904 = vsel %vm538, %v1884, 0.0
        %1905 = vadd.xlane.f32.xlu0 %v1904
        %v1906 = vpop.xlane.xlu0 %1905
        %v1907 = vsel %vm538, %v1886, 0.0
        %1908 = vadd.xlane.f32.xlu0 %v1907
        %v1909 = vpop.xlane.xlu0 %1908
        %v1910 = vsel %vm538, %v1888, 0.0
        %1911 = vadd.xlane.f32.xlu0 %v1910
        %v1912 = vpop.xlane.xlu0 %1911
        %v1913 = vsel %vm538, %v1890, 0.0
        %1914 = vadd.xlane.f32.xlu0 %v1913
        %v1915 = vpop.xlane.xlu0 %1914
        %v1916 = vsel %vm538, %v1892, 0.0
        %1917 = vadd.xlane.f32.xlu0 %v1916
        %v1918 = vpop.xlane.xlu0 %1917
        %v1919 = vsel %vm538, %v1894, 0.0
        %1920 = vadd.xlane.f32.xlu0 %v1919
        %v1921 = vpop.xlane.xlu0 %1920
        %v1922 = vsel %vm538, %v1896, 0.0
        %1923 = vadd.xlane.f32.xlu0 %v1922
        %v1924 = vpop.xlane.xlu0 %1923
        %vm1925 = vcmp.eq.s32.totalorder %v1787, 1
        %v1926 = vsel %vm1925, %v1833, 0.0
        %v1927 = vsel %vm1925, %v1906, 0.0
        %v1928 = vsel %vm1925, %v1909, 0.0
        %v1929 = vsel %vm1925, %v1912, 0.0
        %v1930 = vsel %vm1925, %v1915, 0.0
        %v1931 = vsel %vm1925, %v1918, 0.0
        %v1932 = vsel %vm1925, %v1921, 0.0
        %v1933 = vsel %vm1925, %v1924, 0.0
        %v1934 = vadd.f32 %v1861, %v1926
        %v1935 = vadd.f32 %v1862, %v1927
        %v1936 = vadd.f32 %v1863, %v1928
        %v1937 = vadd.f32 %v1864, %v1929
        %v1938 = vadd.f32 %v1865, %v1930
        %v1939 = vadd.f32 %v1866, %v1931
        %v1940 = vadd.f32 %v1867, %v1932
        %v1941 = vadd.f32 %v1868, %v1933
        %v1942 = vmul.f32 %v1055, %v1055
        %v1943 = vmul.f32 %v1201, %v1055
        %v1944 = vmul.f32 %v1347, %v1055
        %v1945 = vmul.f32 %v1493, %v1055
        %v1946 = vmul.f32 %v1639, %v1055
        %v1947 = vmul.f32 %v1785, %v1055
        %1954 = vrot.lane.b32.xlu0 %v1942, 32
        %v1955 = vpop.permute.xlu0 %1954
        %1956 = vrot.lane.b32.xlu0 %v1943, 32
        %v1957 = vpop.permute.xlu0 %1956
        %1958 = vrot.lane.b32.xlu0 %v1944, 32
        %v1959 = vpop.permute.xlu0 %1958
        %1960 = vrot.lane.b32.xlu0 %v1945, 32
        %v1961 = vpop.permute.xlu0 %1960
        %1962 = vrot.lane.b32.xlu0 %v1946, 32
        %v1963 = vpop.permute.xlu0 %1962
        %1964 = vrot.lane.b32.xlu0 %v1947, 32
        %v1965 = vpop.permute.xlu0 %1964
        %v1972 = vsel %vm538, %v1955, 0.0
        %1973 = vadd.xlane.f32.xlu0 %v1972
        %v1974 = vpop.xlane.xlu0 %1973
        %v1975 = vsel %vm538, %v1957, 0.0
        %1976 = vadd.xlane.f32.xlu0 %v1975
        %v1977 = vpop.xlane.xlu0 %1976
        %v1978 = vsel %vm538, %v1959, 0.0
        %1979 = vadd.xlane.f32.xlu0 %v1978
        %v1980 = vpop.xlane.xlu0 %1979
        %v1981 = vsel %vm538, %v1961, 0.0
        %1982 = vadd.xlane.f32.xlu0 %v1981
        %v1983 = vpop.xlane.xlu0 %1982
        %v1984 = vsel %vm538, %v1963, 0.0
        %1985 = vadd.xlane.f32.xlu0 %v1984
        %v1986 = vpop.xlane.xlu0 %1985
        %v1987 = vsel %vm538, %v1965, 0.0
        %1988 = vadd.xlane.f32.xlu0 %v1987
        %v1989 = vpop.xlane.xlu0 %1988
        %vm1990 = vcmp.eq.s32.totalorder %v1787, 2
        %v1991 = vsel %vm1990, %v1836, 0.0
        %v1992 = vsel %vm1990, %v1909, 0.0
        %v1993 = vsel %vm1990, %v1974, 0.0
        %v1994 = vsel %vm1990, %v1977, 0.0
        %v1995 = vsel %vm1990, %v1980, 0.0
        %v1996 = vsel %vm1990, %v1983, 0.0
        %v1997 = vsel %vm1990, %v1986, 0.0
        %v1998 = vsel %vm1990, %v1989, 0.0
        %v1999 = vadd.f32 %v1934, %v1991
        %v2000 = vadd.f32 %v1935, %v1992
        %v2001 = vadd.f32 %v1936, %v1993
        %v2002 = vadd.f32 %v1937, %v1994
        %v2003 = vadd.f32 %v1938, %v1995
        %v2004 = vadd.f32 %v1939, %v1996
        %v2005 = vadd.f32 %v1940, %v1997
        %v2006 = vadd.f32 %v1941, %v1998
        %v2007 = vmul.f32 %v1201, %v1201
        %v2008 = vmul.f32 %v1347, %v1201
        %v2009 = vmul.f32 %v1493, %v1201
        %v2010 = vmul.f32 %v1639, %v1201
        %v2011 = vmul.f32 %v1785, %v1201
        %2017 = vrot.lane.b32.xlu0 %v2007, 32
        %v2018 = vpop.permute.xlu0 %2017
        %2019 = vrot.lane.b32.xlu0 %v2008, 32
        %v2020 = vpop.permute.xlu0 %2019
        %2021 = vrot.lane.b32.xlu0 %v2009, 32
        %v2022 = vpop.permute.xlu0 %2021
        %2023 = vrot.lane.b32.xlu0 %v2010, 32
        %v2024 = vpop.permute.xlu0 %2023
        %2025 = vrot.lane.b32.xlu0 %v2011, 32
        %v2026 = vpop.permute.xlu0 %2025
        %v2032 = vsel %vm538, %v2018, 0.0
        %2033 = vadd.xlane.f32.xlu0 %v2032
        %v2034 = vpop.xlane.xlu0 %2033
        %v2035 = vsel %vm538, %v2020, 0.0
        %2036 = vadd.xlane.f32.xlu0 %v2035
        %v2037 = vpop.xlane.xlu0 %2036
        %v2038 = vsel %vm538, %v2022, 0.0
        %2039 = vadd.xlane.f32.xlu0 %v2038
        %v2040 = vpop.xlane.xlu0 %2039
        %v2041 = vsel %vm538, %v2024, 0.0
        %2042 = vadd.xlane.f32.xlu0 %v2041
        %v2043 = vpop.xlane.xlu0 %2042
        %v2044 = vsel %vm538, %v2026, 0.0
        %2045 = vadd.xlane.f32.xlu0 %v2044
        %v2046 = vpop.xlane.xlu0 %2045
        %vm2047 = vcmp.eq.s32.totalorder %v1787, 3
        %v2048 = vsel %vm2047, %v1839, 0.0
        %v2049 = vsel %vm2047, %v1912, 0.0
        %v2050 = vsel %vm2047, %v1977, 0.0
        %v2051 = vsel %vm2047, %v2034, 0.0
        %v2052 = vsel %vm2047, %v2037, 0.0
        %v2053 = vsel %vm2047, %v2040, 0.0
        %v2054 = vsel %vm2047, %v2043, 0.0
        %v2055 = vsel %vm2047, %v2046, 0.0
        %v2056 = vadd.f32 %v1999, %v2048
        %v2057 = vadd.f32 %v2000, %v2049
        %v2058 = vadd.f32 %v2001, %v2050
        %v2059 = vadd.f32 %v2002, %v2051
        %v2060 = vadd.f32 %v2003, %v2052
        %v2061 = vadd.f32 %v2004, %v2053
        %v2062 = vadd.f32 %v2005, %v2054
        %v2063 = vadd.f32 %v2006, %v2055
        %v2064 = vmul.f32 %v1347, %v1347
        %v2065 = vmul.f32 %v1493, %v1347
        %v2066 = vmul.f32 %v1639, %v1347
        %v2067 = vmul.f32 %v1785, %v1347
        %2072 = vrot.lane.b32.xlu0 %v2064, 32
        %v2073 = vpop.permute.xlu0 %2072
        %2074 = vrot.lane.b32.xlu0 %v2065, 32
        %v2075 = vpop.permute.xlu0 %2074
        %2076 = vrot.lane.b32.xlu0 %v2066, 32
        %v2077 = vpop.permute.xlu0 %2076
        %2078 = vrot.lane.b32.xlu0 %v2067, 32
        %v2079 = vpop.permute.xlu0 %2078
        %v2084 = vsel %vm538, %v2073, 0.0
        %2085 = vadd.xlane.f32.xlu0 %v2084
        %v2086 = vpop.xlane.xlu0 %2085
        %v2087 = vsel %vm538, %v2075, 0.0
        %2088 = vadd.xlane.f32.xlu0 %v2087
        %v2089 = vpop.xlane.xlu0 %2088
        %v2090 = vsel %vm538, %v2077, 0.0
        %2091 = vadd.xlane.f32.xlu0 %v2090
        %v2092 = vpop.xlane.xlu0 %2091
        %v2093 = vsel %vm538, %v2079, 0.0
        %2094 = vadd.xlane.f32.xlu0 %v2093
        %v2095 = vpop.xlane.xlu0 %2094
        %vm2096 = vcmp.eq.s32.totalorder %v1787, 4
        %v2097 = vsel %vm2096, %v1842, 0.0
        %v2098 = vsel %vm2096, %v1915, 0.0
        %v2099 = vsel %vm2096, %v1980, 0.0
        %v2100 = vsel %vm2096, %v2037, 0.0
        %v2101 = vsel %vm2096, %v2086, 0.0
        %v2102 = vsel %vm2096, %v2089, 0.0
        %v2103 = vsel %vm2096, %v2092, 0.0
        %v2104 = vsel %vm2096, %v2095, 0.0
        %v2105 = vadd.f32 %v2056, %v2097
        %v2106 = vadd.f32 %v2057, %v2098
        %v2107 = vadd.f32 %v2058, %v2099
        %v2108 = vadd.f32 %v2059, %v2100
        %v2109 = vadd.f32 %v2060, %v2101
        %v2110 = vadd.f32 %v2061, %v2102
        %v2111 = vadd.f32 %v2062, %v2103
        %v2112 = vadd.f32 %v2063, %v2104
        %v2113 = vmul.f32 %v1493, %v1493
        %v2114 = vmul.f32 %v1639, %v1493
        %v2115 = vmul.f32 %v1785, %v1493
        %2119 = vrot.lane.b32.xlu0 %v2113, 32
        %v2120 = vpop.permute.xlu0 %2119
        %2121 = vrot.lane.b32.xlu0 %v2114, 32
        %v2122 = vpop.permute.xlu0 %2121
        %2123 = vrot.lane.b32.xlu0 %v2115, 32
        %v2124 = vpop.permute.xlu0 %2123
        %v2128 = vsel %vm538, %v2120, 0.0
        %2129 = vadd.xlane.f32.xlu0 %v2128
        %v2130 = vpop.xlane.xlu0 %2129
        %v2131 = vsel %vm538, %v2122, 0.0
        %2132 = vadd.xlane.f32.xlu0 %v2131
        %v2133 = vpop.xlane.xlu0 %2132
        %v2134 = vsel %vm538, %v2124, 0.0
        %2135 = vadd.xlane.f32.xlu0 %v2134
        %v2136 = vpop.xlane.xlu0 %2135
        %vm2137 = vcmp.eq.s32.totalorder %v1787, 5
        %v2138 = vsel %vm2137, %v1845, 0.0
        %v2139 = vsel %vm2137, %v1918, 0.0
        %v2140 = vsel %vm2137, %v1983, 0.0
        %v2141 = vsel %vm2137, %v2040, 0.0
        %v2142 = vsel %vm2137, %v2089, 0.0
        %v2143 = vsel %vm2137, %v2130, 0.0
        %v2144 = vsel %vm2137, %v2133, 0.0
        %v2145 = vsel %vm2137, %v2136, 0.0
        %v2146 = vadd.f32 %v2105, %v2138
        %v2147 = vadd.f32 %v2106, %v2139
        %v2148 = vadd.f32 %v2107, %v2140
        %v2149 = vadd.f32 %v2108, %v2141
        %v2150 = vadd.f32 %v2109, %v2142
        %v2151 = vadd.f32 %v2110, %v2143
        %v2152 = vadd.f32 %v2111, %v2144
        %v2153 = vadd.f32 %v2112, %v2145
        %v2154 = vmul.f32 %v1639, %v1639
        %v2155 = vmul.f32 %v1785, %v1639
        %2158 = vrot.lane.b32.xlu0 %v2154, 32
        %v2159 = vpop.permute.xlu0 %2158
        %2160 = vrot.lane.b32.xlu0 %v2155, 32
        %v2161 = vpop.permute.xlu0 %2160
        %v2164 = vsel %vm538, %v2159, 0.0
        %2165 = vadd.xlane.f32.xlu0 %v2164
        %v2166 = vpop.xlane.xlu0 %2165
        %v2167 = vsel %vm538, %v2161, 0.0
        %2168 = vadd.xlane.f32.xlu0 %v2167
        %v2169 = vpop.xlane.xlu0 %2168
        %vm2170 = vcmp.eq.s32.totalorder %v1787, 6
        %v2171 = vsel %vm2170, %v1848, 0.0
        %v2172 = vsel %vm2170, %v1921, 0.0
        %v2173 = vsel %vm2170, %v1986, 0.0
        %v2174 = vsel %vm2170, %v2043, 0.0
        %v2175 = vsel %vm2170, %v2092, 0.0
        %v2176 = vsel %vm2170, %v2133, 0.0
        %v2177 = vsel %vm2170, %v2166, 0.0
        %v2178 = vsel %vm2170, %v2169, 0.0
        %v2179 = vadd.f32 %v2146, %v2171
        %v2180 = vadd.f32 %v2147, %v2172
        %v2181 = vadd.f32 %v2148, %v2173
        %v2182 = vadd.f32 %v2149, %v2174
        %v2183 = vadd.f32 %v2150, %v2175
        %v2184 = vadd.f32 %v2151, %v2176
        %v2185 = vadd.f32 %v2152, %v2177
        %v2186 = vadd.f32 %v2153, %v2178
        %v2187 = vmul.f32 %v1785, %v1785
        %2189 = vrot.lane.b32.xlu0 %v2187, 32
        %v2190 = vpop.permute.xlu0 %2189
        %v2192 = vsel %vm538, %v2190, 0.0
        %2193 = vadd.xlane.f32.xlu0 %v2192
        %v2194 = vpop.xlane.xlu0 %2193
        %vm2195 = vcmp.eq.s32.totalorder %v1787, 7
        %v2196 = vsel %vm2195, %v1851, 0.0
        %v2197 = vsel %vm2195, %v1924, 0.0
        %v2198 = vsel %vm2195, %v1989, 0.0
        %v2199 = vsel %vm2195, %v2046, 0.0
        %v2200 = vsel %vm2195, %v2095, 0.0
        %v2201 = vsel %vm2195, %v2136, 0.0
        %v2202 = vsel %vm2195, %v2169, 0.0
        %v2203 = vsel %vm2195, %v2194, 0.0
        %v2204 = vadd.f32 %v2179, %v2196
        %v2205 = vadd.f32 %v2180, %v2197
        %v2206 = vadd.f32 %v2181, %v2198
        %v2207 = vadd.f32 %v2182, %v2199
        %v2208 = vadd.f32 %v2183, %v2200
        %v2209 = vadd.f32 %v2184, %v2201
        %v2210 = vadd.f32 %v2185, %v2202
        %v2211 = vadd.f32 %v2186, %v2203
        %vm2212 = vcmask 64512
        %v2213 = vsel %vm2212, %v2204, -inf
        %2214 = vmax.xlane.f32.xlu0 %v2213
        %v2215 = vpop.xlane.xlu0 %2214
        %v2216 = vsel %vm2212, %v2205, -inf
        %2217 = vmax.xlane.f32.xlu0 %v2216
        %v2218 = vpop.xlane.xlu0 %2217
        %v2219 = vsel %vm2212, %v2206, -inf
        %2220 = vmax.xlane.f32.xlu0 %v2219
        %v2221 = vpop.xlane.xlu0 %2220
        %v2222 = vsel %vm2212, %v2207, -inf
        %2223 = vmax.xlane.f32.xlu0 %v2222
        %v2224 = vpop.xlane.xlu0 %2223
        %v2225 = vsel %vm2212, %v2208, -inf
        %2226 = vmax.xlane.f32.xlu0 %v2225
        %v2227 = vpop.xlane.xlu0 %2226
        %v2228 = vsel %vm2212, %v2209, -inf
        %2229 = vmax.xlane.f32.xlu0 %v2228
        %v2230 = vpop.xlane.xlu0 %2229
        %v2231 = vsel %vm2212, %v2210, -inf
        %2232 = vmax.xlane.f32.xlu0 %v2231
        %v2233 = vpop.xlane.xlu0 %2232
        %v2234 = vsel %vm2212, %v2211, -inf
        %2235 = vmax.xlane.f32.xlu0 %v2234
        %v2236 = vpop.xlane.xlu0 %2235
        %v2237 = vadd.f32 %v2215, 0.0
        %v2238 = vadd.f32 %v2218, 0.0
        %v2239 = vadd.f32 %v2221, 0.0
        %v2240 = vadd.f32 %v2224, 0.0
        %v2241 = vadd.f32 %v2227, 0.0
        %v2242 = vadd.f32 %v2230, 0.0
        %v2243 = vadd.f32 %v2233, 0.0
        %v2244 = vadd.f32 %v2236, 0.0
        %v2245 = vsub.f32 %v2237, 1.0
        %v2246 = vsub.f32 %v2238, 1.0
        %v2247 = vsub.f32 %v2239, 1.0
        %v2248 = vsub.f32 %v2240, 1.0
        %v2249 = vsub.f32 %v2241, 1.0
        %v2250 = vsub.f32 %v2242, 1.0
        %v2251 = vsub.f32 %v2243, 1.0
        %v2252 = vsub.f32 %v2244, 1.0
        %v2253 = vsub.f32 %v2215, %v2245
        %v2254 = vsub.f32 %v2218, %v2246
        %v2255 = vsub.f32 %v2221, %v2247
        %v2256 = vsub.f32 %v2224, %v2248
        %v2257 = vsub.f32 %v2227, %v2249
        %v2258 = vsub.f32 %v2230, %v2250
        %v2259 = vsub.f32 %v2233, %v2251
        %v2260 = vsub.f32 %v2236, %v2252
        %vm2261 = vcmp.gt.f32.partialorder %v2253, 0.0
        %vm2262 = vcmp.gt.f32.partialorder %v2254, 0.0
        %vm2263 = vcmp.gt.f32.partialorder %v2255, 0.0
        %vm2264 = vcmp.gt.f32.partialorder %v2256, 0.0
        %vm2265 = vcmp.gt.f32.partialorder %v2257, 0.0
        %vm2266 = vcmp.gt.f32.partialorder %v2258, 0.0
        %vm2267 = vcmp.gt.f32.partialorder %v2259, 0.0
        %vm2268 = vcmp.gt.f32.partialorder %v2260, 0.0
        %v2269 = vsel %vm2261, 1, 0
        %v2270 = vsel %vm2262, 1, 0
        %v2271 = vsel %vm2263, 1, 0
        %v2272 = vsel %vm2264, 1, 0
        %v2273 = vsel %vm2265, 1, 0
        %v2274 = vsel %vm2266, 1, 0
        %v2275 = vsel %vm2267, 1, 0
        %v2276 = vsel %vm2268, 1, 0
        %v2277 = vcvt.s32.f32 %v2269
        %v2278 = vcvt.s32.f32 %v2270
        %v2279 = vcvt.s32.f32 %v2271
        %v2280 = vcvt.s32.f32 %v2272
        %v2281 = vcvt.s32.f32 %v2273
        %v2282 = vcvt.s32.f32 %v2274
        %v2283 = vcvt.s32.f32 %v2275
        %v2284 = vcvt.s32.f32 %v2276
        %v2285 = vadd.f32 %v2277, 0.0
        %v2286 = vadd.f32 %v2278, 0.0
        %v2287 = vadd.f32 %v2279, 0.0
        %v2288 = vadd.f32 %v2280, 0.0
        %v2289 = vadd.f32 %v2281, 0.0
        %v2290 = vadd.f32 %v2282, 0.0
        %v2291 = vadd.f32 %v2283, 0.0
        %v2292 = vadd.f32 %v2284, 0.0
        %v2293 = vsel %vm2261, %v2237, 0.0
        %v2294 = vsel %vm2262, %v2238, 0.0
        %v2295 = vsel %vm2263, %v2239, 0.0
        %v2296 = vsel %vm2264, %v2240, 0.0
        %v2297 = vsel %vm2265, %v2241, 0.0
        %v2298 = vsel %vm2266, %v2242, 0.0
        %v2299 = vsel %vm2267, %v2243, 0.0
        %v2300 = vsel %vm2268, %v2244, 0.0
        %vm2301 = vcmp.eq.f32.partialorder %v2204, %v2215
        %vm2302 = vcmp.eq.f32.partialorder %v2205, %v2218
        %vm2303 = vcmp.eq.f32.partialorder %v2206, %v2221
        %vm2304 = vcmp.eq.f32.partialorder %v2207, %v2224
        %vm2305 = vcmp.eq.f32.partialorder %v2208, %v2227
        %vm2306 = vcmp.eq.f32.partialorder %v2209, %v2230
        %vm2307 = vcmp.eq.f32.partialorder %v2210, %v2233
        %vm2308 = vcmp.eq.f32.partialorder %v2211, %v2236
        %v2309 = vsel %vm2301, %v1787, 8
        %v2310 = vsel %vm2302, %v1787, 8
        %v2311 = vsel %vm2303, %v1787, 8
        %v2312 = vsel %vm2304, %v1787, 8
        %v2313 = vsel %vm2305, %v1787, 8
        %v2314 = vsel %vm2306, %v1787, 8
        %v2315 = vsel %vm2307, %v1787, 8
        %v2316 = vsel %vm2308, %v1787, 8
        %v2317 = vsel %vm2212, %v2309, 2147483647
        %v2318 = vand.u32 %v2317, 65535
        %v2319 = vshra.s32 %v2317, 16
        %v2320 = vcvt.s32.f32 %v2318
        %v2321 = vcvt.s32.f32 %v2319
        %2322 = vmin.xlane.f32.xlu0 %v2321
        %v2323 = vpop.xlane.xlu0 %2322
        %vm2324 = vcmp.eq.f32.partialorder %v2321, %v2323
        %v2325 = vsel %vm2324, %v2320, inf
        %2326 = vmin.xlane.f32.xlu0 %v2325
        %v2327 = vpop.xlane.xlu0 %2326
        %v2328 = vcvt.f32.s32 %v2327
        %v2329 = vcvt.f32.s32 %v2323
        %v2330 = vshll.u32 %v2329, 16
        %v2331 = vadd.s32 %v2330, %v2328
        %v2332 = vsel %vm2212, %v2310, 2147483647
        %v2333 = vand.u32 %v2332, 65535
        %v2334 = vshra.s32 %v2332, 16
        %v2335 = vcvt.s32.f32 %v2333
        %v2336 = vcvt.s32.f32 %v2334
        %2337 = vmin.xlane.f32.xlu0 %v2336
        %v2338 = vpop.xlane.xlu0 %2337
        %vm2339 = vcmp.eq.f32.partialorder %v2336, %v2338
        %v2340 = vsel %vm2339, %v2335, inf
        %2341 = vmin.xlane.f32.xlu0 %v2340
        %v2342 = vpop.xlane.xlu0 %2341
        %v2343 = vcvt.f32.s32 %v2342
        %v2344 = vcvt.f32.s32 %v2338
        %v2345 = vshll.u32 %v2344, 16
        %v2346 = vadd.s32 %v2345, %v2343
        %v2347 = vsel %vm2212, %v2311, 2147483647
        %v2348 = vand.u32 %v2347, 65535
        %v2349 = vshra.s32 %v2347, 16
        %v2350 = vcvt.s32.f32 %v2348
        %v2351 = vcvt.s32.f32 %v2349
        %2352 = vmin.xlane.f32.xlu0 %v2351
        %v2353 = vpop.xlane.xlu0 %2352
        %vm2354 = vcmp.eq.f32.partialorder %v2351, %v2353
        %v2355 = vsel %vm2354, %v2350, inf
        %2356 = vmin.xlane.f32.xlu0 %v2355
        %v2357 = vpop.xlane.xlu0 %2356
        %v2358 = vcvt.f32.s32 %v2357
        %v2359 = vcvt.f32.s32 %v2353
        %v2360 = vshll.u32 %v2359, 16
        %v2361 = vadd.s32 %v2360, %v2358
        %v2362 = vsel %vm2212, %v2312, 2147483647
        %v2363 = vand.u32 %v2362, 65535
        %v2364 = vshra.s32 %v2362, 16
        %v2365 = vcvt.s32.f32 %v2363
        %v2366 = vcvt.s32.f32 %v2364
        %2367 = vmin.xlane.f32.xlu0 %v2366
        %v2368 = vpop.xlane.xlu0 %2367
        %vm2369 = vcmp.eq.f32.partialorder %v2366, %v2368
        %v2370 = vsel %vm2369, %v2365, inf
        %2371 = vmin.xlane.f32.xlu0 %v2370
        %v2372 = vpop.xlane.xlu0 %2371
        %v2373 = vcvt.f32.s32 %v2372
        %v2374 = vcvt.f32.s32 %v2368
        %v2375 = vshll.u32 %v2374, 16
        %v2376 = vadd.s32 %v2375, %v2373
        %v2377 = vsel %vm2212, %v2313, 2147483647
        %v2378 = vand.u32 %v2377, 65535
        %v2379 = vshra.s32 %v2377, 16
        %v2380 = vcvt.s32.f32 %v2378
        %v2381 = vcvt.s32.f32 %v2379
        %2382 = vmin.xlane.f32.xlu0 %v2381
        %v2383 = vpop.xlane.xlu0 %2382
        %vm2384 = vcmp.eq.f32.partialorder %v2381, %v2383
        %v2385 = vsel %vm2384, %v2380, inf
        %2386 = vmin.xlane.f32.xlu0 %v2385
        %v2387 = vpop.xlane.xlu0 %2386
        %v2388 = vcvt.f32.s32 %v2387
        %v2389 = vcvt.f32.s32 %v2383
        %v2390 = vshll.u32 %v2389, 16
        %v2391 = vadd.s32 %v2390, %v2388
        %v2392 = vsel %vm2212, %v2314, 2147483647
        %v2393 = vand.u32 %v2392, 65535
        %v2394 = vshra.s32 %v2392, 16
        %v2395 = vcvt.s32.f32 %v2393
        %v2396 = vcvt.s32.f32 %v2394
        %2397 = vmin.xlane.f32.xlu0 %v2396
        %v2398 = vpop.xlane.xlu0 %2397
        %vm2399 = vcmp.eq.f32.partialorder %v2396, %v2398
        %v2400 = vsel %vm2399, %v2395, inf
        %2401 = vmin.xlane.f32.xlu0 %v2400
        %v2402 = vpop.xlane.xlu0 %2401
        %v2403 = vcvt.f32.s32 %v2402
        %v2404 = vcvt.f32.s32 %v2398
        %v2405 = vshll.u32 %v2404, 16
        %v2406 = vadd.s32 %v2405, %v2403
        %v2407 = vsel %vm2212, %v2315, 2147483647
        %v2408 = vand.u32 %v2407, 65535
        %v2409 = vshra.s32 %v2407, 16
        %v2410 = vcvt.s32.f32 %v2408
        %v2411 = vcvt.s32.f32 %v2409
        %2412 = vmin.xlane.f32.xlu0 %v2411
        %v2413 = vpop.xlane.xlu0 %2412
        %vm2414 = vcmp.eq.f32.partialorder %v2411, %v2413
        %v2415 = vsel %vm2414, %v2410, inf
        %2416 = vmin.xlane.f32.xlu0 %v2415
        %v2417 = vpop.xlane.xlu0 %2416
        %v2418 = vcvt.f32.s32 %v2417
        %v2419 = vcvt.f32.s32 %v2413
        %v2420 = vshll.u32 %v2419, 16
        %v2421 = vadd.s32 %v2420, %v2418
        %v2422 = vsel %vm2212, %v2316, 2147483647
        %v2423 = vand.u32 %v2422, 65535
        %v2424 = vshra.s32 %v2422, 16
        %v2425 = vcvt.s32.f32 %v2423
        %v2426 = vcvt.s32.f32 %v2424
        %2427 = vmin.xlane.f32.xlu0 %v2426
        %v2428 = vpop.xlane.xlu0 %2427
        %vm2429 = vcmp.eq.f32.partialorder %v2426, %v2428
        %v2430 = vsel %vm2429, %v2425, inf
        %2431 = vmin.xlane.f32.xlu0 %v2430
        %v2432 = vpop.xlane.xlu0 %2431
        %v2433 = vcvt.f32.s32 %v2432
        %v2434 = vcvt.f32.s32 %v2428
        %v2435 = vshll.u32 %v2434, 16
        %v2436 = vadd.s32 %v2435, %v2433
        %vm2437 = vcmp.eq.s32.totalorder %v1787, %v2331
        %vm2438 = vcmp.eq.s32.totalorder %v1787, %v2346
        %vm2439 = vcmp.eq.s32.totalorder %v1787, %v2361
        %vm2440 = vcmp.eq.s32.totalorder %v1787, %v2376
        %vm2441 = vcmp.eq.s32.totalorder %v1787, %v2391
        %vm2442 = vcmp.eq.s32.totalorder %v1787, %v2406
        %vm2443 = vcmp.eq.s32.totalorder %v1787, %v2421
        %vm2444 = vcmp.eq.s32.totalorder %v1787, %v2436
        %v2445 = vsel %vm2437, -1e+30, %v2204
        %v2446 = vsel %vm2438, -1e+30, %v2205
        %v2447 = vsel %vm2439, -1e+30, %v2206
        %v2448 = vsel %vm2440, -1e+30, %v2207
        %v2449 = vsel %vm2441, -1e+30, %v2208
        %v2450 = vsel %vm2442, -1e+30, %v2209
        %v2451 = vsel %vm2443, -1e+30, %v2210
        %v2452 = vsel %vm2444, -1e+30, %v2211
        %v2453 = vsel %vm2212, %v2445, -inf
        %2454 = vmax.xlane.f32.xlu0 %v2453
        %v2455 = vpop.xlane.xlu0 %2454
        %v2456 = vsel %vm2212, %v2446, -inf
        %2457 = vmax.xlane.f32.xlu0 %v2456
        %v2458 = vpop.xlane.xlu0 %2457
        %v2459 = vsel %vm2212, %v2447, -inf
        %2460 = vmax.xlane.f32.xlu0 %v2459
        %v2461 = vpop.xlane.xlu0 %2460
        %v2462 = vsel %vm2212, %v2448, -inf
        %2463 = vmax.xlane.f32.xlu0 %v2462
        %v2464 = vpop.xlane.xlu0 %2463
        %v2465 = vsel %vm2212, %v2449, -inf
        %2466 = vmax.xlane.f32.xlu0 %v2465
        %v2467 = vpop.xlane.xlu0 %2466
        %v2468 = vsel %vm2212, %v2450, -inf
        %2469 = vmax.xlane.f32.xlu0 %v2468
        %v2470 = vpop.xlane.xlu0 %2469
        %v2471 = vsel %vm2212, %v2451, -inf
        %2472 = vmax.xlane.f32.xlu0 %v2471
        %v2473 = vpop.xlane.xlu0 %2472
        %v2474 = vsel %vm2212, %v2452, -inf
        %2475 = vmax.xlane.f32.xlu0 %v2474
        %v2476 = vpop.xlane.xlu0 %2475
        %v2477 = vadd.f32 %v2237, %v2455
        %v2478 = vadd.f32 %v2238, %v2458
        %v2479 = vadd.f32 %v2239, %v2461
        %v2480 = vadd.f32 %v2240, %v2464
        %v2481 = vadd.f32 %v2241, %v2467
        %v2482 = vadd.f32 %v2242, %v2470
        %v2483 = vadd.f32 %v2243, %v2473
        %v2484 = vadd.f32 %v2244, %v2476
        %v2485 = vsub.f32 %v2477, 1.0
        %v2486 = vsub.f32 %v2478, 1.0
        %v2487 = vsub.f32 %v2479, 1.0
        %v2488 = vsub.f32 %v2480, 1.0
        %v2489 = vsub.f32 %v2481, 1.0
        %v2490 = vsub.f32 %v2482, 1.0
        %v2491 = vsub.f32 %v2483, 1.0
        %v2492 = vsub.f32 %v2484, 1.0
        %v2493 = vrcp.pop 2.0
        %v2494 = vmul.f32 2.0, %v2493
        %v2495 = vsub.f32 1.0, %v2494
        %v2496 = vmul.f32 %v2493, %v2495
        %v2497 = vadd.f32 %v2493, %v2496
        %vm2498 = vweird.f32 %v2493
        %v2499 = vsel %vm2498, %v2493, %v2497
        %v2500 = vmul.f32 %v2485, %v2499
        %v2501 = vmul.f32 %v2486, %v2499
        %v2502 = vmul.f32 %v2487, %v2499
        %v2503 = vmul.f32 %v2488, %v2499
        %v2504 = vmul.f32 %v2489, %v2499
        %v2505 = vmul.f32 %v2490, %v2499
        %v2506 = vmul.f32 %v2491, %v2499
        %v2507 = vmul.f32 %v2492, %v2499
        %v2508 = vsub.f32 %v2455, %v2500
        %v2509 = vsub.f32 %v2458, %v2501
        %v2510 = vsub.f32 %v2461, %v2502
        %v2511 = vsub.f32 %v2464, %v2503
        %v2512 = vsub.f32 %v2467, %v2504
        %v2513 = vsub.f32 %v2470, %v2505
        %v2514 = vsub.f32 %v2473, %v2506
        %v2515 = vsub.f32 %v2476, %v2507
        %vm2516 = vcmp.gt.f32.partialorder %v2508, 0.0
        %vm2517 = vcmp.gt.f32.partialorder %v2509, 0.0
        %vm2518 = vcmp.gt.f32.partialorder %v2510, 0.0
        %vm2519 = vcmp.gt.f32.partialorder %v2511, 0.0
        %vm2520 = vcmp.gt.f32.partialorder %v2512, 0.0
        %vm2521 = vcmp.gt.f32.partialorder %v2513, 0.0
        %vm2522 = vcmp.gt.f32.partialorder %v2514, 0.0
        %vm2523 = vcmp.gt.f32.partialorder %v2515, 0.0
        %v2524 = vsel %vm2516, 1, 0
        %v2525 = vsel %vm2517, 1, 0
        %v2526 = vsel %vm2518, 1, 0
        %v2527 = vsel %vm2519, 1, 0
        %v2528 = vsel %vm2520, 1, 0
        %v2529 = vsel %vm2521, 1, 0
        %v2530 = vsel %vm2522, 1, 0
        %v2531 = vsel %vm2523, 1, 0
        %v2532 = vcvt.s32.f32 %v2524
        %v2533 = vcvt.s32.f32 %v2525
        %v2534 = vcvt.s32.f32 %v2526
        %v2535 = vcvt.s32.f32 %v2527
        %v2536 = vcvt.s32.f32 %v2528
        %v2537 = vcvt.s32.f32 %v2529
        %v2538 = vcvt.s32.f32 %v2530
        %v2539 = vcvt.s32.f32 %v2531
        %v2540 = vadd.f32 %v2285, %v2532
        %v2541 = vadd.f32 %v2286, %v2533
        %v2542 = vadd.f32 %v2287, %v2534
        %v2543 = vadd.f32 %v2288, %v2535
        %v2544 = vadd.f32 %v2289, %v2536
        %v2545 = vadd.f32 %v2290, %v2537
        %v2546 = vadd.f32 %v2291, %v2538
        %v2547 = vadd.f32 %v2292, %v2539
        %v2548 = vsel %vm2516, %v2477, %v2293
        %v2549 = vsel %vm2517, %v2478, %v2294
        %v2550 = vsel %vm2518, %v2479, %v2295
        %v2551 = vsel %vm2519, %v2480, %v2296
        %v2552 = vsel %vm2520, %v2481, %v2297
        %v2553 = vsel %vm2521, %v2482, %v2298
        %v2554 = vsel %vm2522, %v2483, %v2299
        %v2555 = vsel %vm2523, %v2484, %v2300
        %vm2556 = vcmp.eq.f32.partialorder %v2445, %v2455
        %vm2557 = vcmp.eq.f32.partialorder %v2446, %v2458
        %vm2558 = vcmp.eq.f32.partialorder %v2447, %v2461
        %vm2559 = vcmp.eq.f32.partialorder %v2448, %v2464
        %vm2560 = vcmp.eq.f32.partialorder %v2449, %v2467
        %vm2561 = vcmp.eq.f32.partialorder %v2450, %v2470
        %vm2562 = vcmp.eq.f32.partialorder %v2451, %v2473
        %vm2563 = vcmp.eq.f32.partialorder %v2452, %v2476
        %v2564 = vsel %vm2556, %v1787, 8
        %v2565 = vsel %vm2557, %v1787, 8
        %v2566 = vsel %vm2558, %v1787, 8
        %v2567 = vsel %vm2559, %v1787, 8
        %v2568 = vsel %vm2560, %v1787, 8
        %v2569 = vsel %vm2561, %v1787, 8
        %v2570 = vsel %vm2562, %v1787, 8
        %v2571 = vsel %vm2563, %v1787, 8
        %v2572 = vsel %vm2212, %v2564, 2147483647
        %v2573 = vand.u32 %v2572, 65535
        %v2574 = vshra.s32 %v2572, 16
        %v2575 = vcvt.s32.f32 %v2573
        %v2576 = vcvt.s32.f32 %v2574
        %2577 = vmin.xlane.f32.xlu0 %v2576
        %v2578 = vpop.xlane.xlu0 %2577
        %vm2579 = vcmp.eq.f32.partialorder %v2576, %v2578
        %v2580 = vsel %vm2579, %v2575, inf
        %2581 = vmin.xlane.f32.xlu0 %v2580
        %v2582 = vpop.xlane.xlu0 %2581
        %v2583 = vcvt.f32.s32 %v2582
        %v2584 = vcvt.f32.s32 %v2578
        %v2585 = vshll.u32 %v2584, 16
        %v2586 = vadd.s32 %v2585, %v2583
        %v2587 = vsel %vm2212, %v2565, 2147483647
        %v2588 = vand.u32 %v2587, 65535
        %v2589 = vshra.s32 %v2587, 16
        %v2590 = vcvt.s32.f32 %v2588
        %v2591 = vcvt.s32.f32 %v2589
        %2592 = vmin.xlane.f32.xlu0 %v2591
        %v2593 = vpop.xlane.xlu0 %2592
        %vm2594 = vcmp.eq.f32.partialorder %v2591, %v2593
        %v2595 = vsel %vm2594, %v2590, inf
        %2596 = vmin.xlane.f32.xlu0 %v2595
        %v2597 = vpop.xlane.xlu0 %2596
        %v2598 = vcvt.f32.s32 %v2597
        %v2599 = vcvt.f32.s32 %v2593
        %v2600 = vshll.u32 %v2599, 16
        %v2601 = vadd.s32 %v2600, %v2598
        %v2602 = vsel %vm2212, %v2566, 2147483647
        %v2603 = vand.u32 %v2602, 65535
        %v2604 = vshra.s32 %v2602, 16
        %v2605 = vcvt.s32.f32 %v2603
        %v2606 = vcvt.s32.f32 %v2604
        %2607 = vmin.xlane.f32.xlu0 %v2606
        %v2608 = vpop.xlane.xlu0 %2607
        %vm2609 = vcmp.eq.f32.partialorder %v2606, %v2608
        %v2610 = vsel %vm2609, %v2605, inf
        %2611 = vmin.xlane.f32.xlu0 %v2610
        %v2612 = vpop.xlane.xlu0 %2611
        %v2613 = vcvt.f32.s32 %v2612
        %v2614 = vcvt.f32.s32 %v2608
        %v2615 = vshll.u32 %v2614, 16
        %v2616 = vadd.s32 %v2615, %v2613
        %v2617 = vsel %vm2212, %v2567, 2147483647
        %v2618 = vand.u32 %v2617, 65535
        %v2619 = vshra.s32 %v2617, 16
        %v2620 = vcvt.s32.f32 %v2618
        %v2621 = vcvt.s32.f32 %v2619
        %2622 = vmin.xlane.f32.xlu0 %v2621
        %v2623 = vpop.xlane.xlu0 %2622
        %vm2624 = vcmp.eq.f32.partialorder %v2621, %v2623
        %v2625 = vsel %vm2624, %v2620, inf
        %2626 = vmin.xlane.f32.xlu0 %v2625
        %v2627 = vpop.xlane.xlu0 %2626
        %v2628 = vcvt.f32.s32 %v2627
        %v2629 = vcvt.f32.s32 %v2623
        %v2630 = vshll.u32 %v2629, 16
        %v2631 = vadd.s32 %v2630, %v2628
        %v2632 = vsel %vm2212, %v2568, 2147483647
        %v2633 = vand.u32 %v2632, 65535
        %v2634 = vshra.s32 %v2632, 16
        %v2635 = vcvt.s32.f32 %v2633
        %v2636 = vcvt.s32.f32 %v2634
        %2637 = vmin.xlane.f32.xlu0 %v2636
        %v2638 = vpop.xlane.xlu0 %2637
        %vm2639 = vcmp.eq.f32.partialorder %v2636, %v2638
        %v2640 = vsel %vm2639, %v2635, inf
        %2641 = vmin.xlane.f32.xlu0 %v2640
        %v2642 = vpop.xlane.xlu0 %2641
        %v2643 = vcvt.f32.s32 %v2642
        %v2644 = vcvt.f32.s32 %v2638
        %v2645 = vshll.u32 %v2644, 16
        %v2646 = vadd.s32 %v2645, %v2643
        %v2647 = vsel %vm2212, %v2569, 2147483647
        %v2648 = vand.u32 %v2647, 65535
        %v2649 = vshra.s32 %v2647, 16
        %v2650 = vcvt.s32.f32 %v2648
        %v2651 = vcvt.s32.f32 %v2649
        %2652 = vmin.xlane.f32.xlu0 %v2651
        %v2653 = vpop.xlane.xlu0 %2652
        %vm2654 = vcmp.eq.f32.partialorder %v2651, %v2653
        %v2655 = vsel %vm2654, %v2650, inf
        %2656 = vmin.xlane.f32.xlu0 %v2655
        %v2657 = vpop.xlane.xlu0 %2656
        %v2658 = vcvt.f32.s32 %v2657
        %v2659 = vcvt.f32.s32 %v2653
        %v2660 = vshll.u32 %v2659, 16
        %v2661 = vadd.s32 %v2660, %v2658
        %v2662 = vsel %vm2212, %v2570, 2147483647
        %v2663 = vand.u32 %v2662, 65535
        %v2664 = vshra.s32 %v2662, 16
        %v2665 = vcvt.s32.f32 %v2663
        %v2666 = vcvt.s32.f32 %v2664
        %2667 = vmin.xlane.f32.xlu0 %v2666
        %v2668 = vpop.xlane.xlu0 %2667
        %vm2669 = vcmp.eq.f32.partialorder %v2666, %v2668
        %v2670 = vsel %vm2669, %v2665, inf
        %2671 = vmin.xlane.f32.xlu0 %v2670
        %v2672 = vpop.xlane.xlu0 %2671
        %v2673 = vcvt.f32.s32 %v2672
        %v2674 = vcvt.f32.s32 %v2668
        %v2675 = vshll.u32 %v2674, 16
        %v2676 = vadd.s32 %v2675, %v2673
        %v2677 = vsel %vm2212, %v2571, 2147483647
        %v2678 = vand.u32 %v2677, 65535
        %v2679 = vshra.s32 %v2677, 16
        %v2680 = vcvt.s32.f32 %v2678
        %v2681 = vcvt.s32.f32 %v2679
        %2682 = vmin.xlane.f32.xlu0 %v2681
        %v2683 = vpop.xlane.xlu0 %2682
        %vm2684 = vcmp.eq.f32.partialorder %v2681, %v2683
        %v2685 = vsel %vm2684, %v2680, inf
        %2686 = vmin.xlane.f32.xlu0 %v2685
        %v2687 = vpop.xlane.xlu0 %2686
        %v2688 = vcvt.f32.s32 %v2687
        %v2689 = vcvt.f32.s32 %v2683
        %v2690 = vshll.u32 %v2689, 16
        %v2691 = vadd.s32 %v2690, %v2688
        %vm2692 = vcmp.eq.s32.totalorder %v1787, %v2586
        %vm2693 = vcmp.eq.s32.totalorder %v1787, %v2601
        %vm2694 = vcmp.eq.s32.totalorder %v1787, %v2616
        %vm2695 = vcmp.eq.s32.totalorder %v1787, %v2631
        %vm2696 = vcmp.eq.s32.totalorder %v1787, %v2646
        %vm2697 = vcmp.eq.s32.totalorder %v1787, %v2661
        %vm2698 = vcmp.eq.s32.totalorder %v1787, %v2676
        %vm2699 = vcmp.eq.s32.totalorder %v1787, %v2691
        %v2700 = vsel %vm2692, -1e+30, %v2445
        %v2701 = vsel %vm2693, -1e+30, %v2446
        %v2702 = vsel %vm2694, -1e+30, %v2447
        %v2703 = vsel %vm2695, -1e+30, %v2448
        %v2704 = vsel %vm2696, -1e+30, %v2449
        %v2705 = vsel %vm2697, -1e+30, %v2450
        %v2706 = vsel %vm2698, -1e+30, %v2451
        %v2707 = vsel %vm2699, -1e+30, %v2452
        %v2708 = vsel %vm2212, %v2700, -inf
        %2709 = vmax.xlane.f32.xlu0 %v2708
        %v2710 = vpop.xlane.xlu0 %2709
        %v2711 = vsel %vm2212, %v2701, -inf
        %2712 = vmax.xlane.f32.xlu0 %v2711
        %v2713 = vpop.xlane.xlu0 %2712
        %v2714 = vsel %vm2212, %v2702, -inf
        %2715 = vmax.xlane.f32.xlu0 %v2714
        %v2716 = vpop.xlane.xlu0 %2715
        %v2717 = vsel %vm2212, %v2703, -inf
        %2718 = vmax.xlane.f32.xlu0 %v2717
        %v2719 = vpop.xlane.xlu0 %2718
        %v2720 = vsel %vm2212, %v2704, -inf
        %2721 = vmax.xlane.f32.xlu0 %v2720
        %v2722 = vpop.xlane.xlu0 %2721
        %v2723 = vsel %vm2212, %v2705, -inf
        %2724 = vmax.xlane.f32.xlu0 %v2723
        %v2725 = vpop.xlane.xlu0 %2724
        %v2726 = vsel %vm2212, %v2706, -inf
        %2727 = vmax.xlane.f32.xlu0 %v2726
        %v2728 = vpop.xlane.xlu0 %2727
        %v2729 = vsel %vm2212, %v2707, -inf
        %2730 = vmax.xlane.f32.xlu0 %v2729
        %v2731 = vpop.xlane.xlu0 %2730
        %v2732 = vadd.f32 %v2477, %v2710
        %v2733 = vadd.f32 %v2478, %v2713
        %v2734 = vadd.f32 %v2479, %v2716
        %v2735 = vadd.f32 %v2480, %v2719
        %v2736 = vadd.f32 %v2481, %v2722
        %v2737 = vadd.f32 %v2482, %v2725
        %v2738 = vadd.f32 %v2483, %v2728
        %v2739 = vadd.f32 %v2484, %v2731
        %v2740 = vsub.f32 %v2732, 1.0
        %v2741 = vsub.f32 %v2733, 1.0
        %v2742 = vsub.f32 %v2734, 1.0
        %v2743 = vsub.f32 %v2735, 1.0
        %v2744 = vsub.f32 %v2736, 1.0
        %v2745 = vsub.f32 %v2737, 1.0
        %v2746 = vsub.f32 %v2738, 1.0
        %v2747 = vsub.f32 %v2739, 1.0
        %v2748 = vrcp.pop 3.0
        %v2749 = vmul.f32 3.0, %v2748
        %v2750 = vsub.f32 1.0, %v2749
        %v2751 = vmul.f32 %v2748, %v2750
        %v2752 = vadd.f32 %v2748, %v2751
        %vm2753 = vweird.f32 %v2748
        %v2754 = vsel %vm2753, %v2748, %v2752
        %v2755 = vmul.f32 %v2740, %v2754
        %v2756 = vmul.f32 %v2741, %v2754
        %v2757 = vmul.f32 %v2742, %v2754
        %v2758 = vmul.f32 %v2743, %v2754
        %v2759 = vmul.f32 %v2744, %v2754
        %v2760 = vmul.f32 %v2745, %v2754
        %v2761 = vmul.f32 %v2746, %v2754
        %v2762 = vmul.f32 %v2747, %v2754
        %v2763 = vsub.f32 %v2710, %v2755
        %v2764 = vsub.f32 %v2713, %v2756
        %v2765 = vsub.f32 %v2716, %v2757
        %v2766 = vsub.f32 %v2719, %v2758
        %v2767 = vsub.f32 %v2722, %v2759
        %v2768 = vsub.f32 %v2725, %v2760
        %v2769 = vsub.f32 %v2728, %v2761
        %v2770 = vsub.f32 %v2731, %v2762
        %vm2771 = vcmp.gt.f32.partialorder %v2763, 0.0
        %vm2772 = vcmp.gt.f32.partialorder %v2764, 0.0
        %vm2773 = vcmp.gt.f32.partialorder %v2765, 0.0
        %vm2774 = vcmp.gt.f32.partialorder %v2766, 0.0
        %vm2775 = vcmp.gt.f32.partialorder %v2767, 0.0
        %vm2776 = vcmp.gt.f32.partialorder %v2768, 0.0
        %vm2777 = vcmp.gt.f32.partialorder %v2769, 0.0
        %vm2778 = vcmp.gt.f32.partialorder %v2770, 0.0
        %v2779 = vsel %vm2771, 1, 0
        %v2780 = vsel %vm2772, 1, 0
        %v2781 = vsel %vm2773, 1, 0
        %v2782 = vsel %vm2774, 1, 0
        %v2783 = vsel %vm2775, 1, 0
        %v2784 = vsel %vm2776, 1, 0
        %v2785 = vsel %vm2777, 1, 0
        %v2786 = vsel %vm2778, 1, 0
        %v2787 = vcvt.s32.f32 %v2779
        %v2788 = vcvt.s32.f32 %v2780
        %v2789 = vcvt.s32.f32 %v2781
        %v2790 = vcvt.s32.f32 %v2782
        %v2791 = vcvt.s32.f32 %v2783
        %v2792 = vcvt.s32.f32 %v2784
        %v2793 = vcvt.s32.f32 %v2785
        %v2794 = vcvt.s32.f32 %v2786
        %v2795 = vadd.f32 %v2540, %v2787
        %v2796 = vadd.f32 %v2541, %v2788
        %v2797 = vadd.f32 %v2542, %v2789
        %v2798 = vadd.f32 %v2543, %v2790
        %v2799 = vadd.f32 %v2544, %v2791
        %v2800 = vadd.f32 %v2545, %v2792
        %v2801 = vadd.f32 %v2546, %v2793
        %v2802 = vadd.f32 %v2547, %v2794
        %v2803 = vsel %vm2771, %v2732, %v2548
        %v2804 = vsel %vm2772, %v2733, %v2549
        %v2805 = vsel %vm2773, %v2734, %v2550
        %v2806 = vsel %vm2774, %v2735, %v2551
        %v2807 = vsel %vm2775, %v2736, %v2552
        %v2808 = vsel %vm2776, %v2737, %v2553
        %v2809 = vsel %vm2777, %v2738, %v2554
        %v2810 = vsel %vm2778, %v2739, %v2555
        %vm2811 = vcmp.eq.f32.partialorder %v2700, %v2710
        %vm2812 = vcmp.eq.f32.partialorder %v2701, %v2713
        %vm2813 = vcmp.eq.f32.partialorder %v2702, %v2716
        %vm2814 = vcmp.eq.f32.partialorder %v2703, %v2719
        %vm2815 = vcmp.eq.f32.partialorder %v2704, %v2722
        %vm2816 = vcmp.eq.f32.partialorder %v2705, %v2725
        %vm2817 = vcmp.eq.f32.partialorder %v2706, %v2728
        %vm2818 = vcmp.eq.f32.partialorder %v2707, %v2731
        %v2819 = vsel %vm2811, %v1787, 8
        %v2820 = vsel %vm2812, %v1787, 8
        %v2821 = vsel %vm2813, %v1787, 8
        %v2822 = vsel %vm2814, %v1787, 8
        %v2823 = vsel %vm2815, %v1787, 8
        %v2824 = vsel %vm2816, %v1787, 8
        %v2825 = vsel %vm2817, %v1787, 8
        %v2826 = vsel %vm2818, %v1787, 8
        %v2827 = vsel %vm2212, %v2819, 2147483647
        %v2828 = vand.u32 %v2827, 65535
        %v2829 = vshra.s32 %v2827, 16
        %v2830 = vcvt.s32.f32 %v2828
        %v2831 = vcvt.s32.f32 %v2829
        %2832 = vmin.xlane.f32.xlu0 %v2831
        %v2833 = vpop.xlane.xlu0 %2832
        %vm2834 = vcmp.eq.f32.partialorder %v2831, %v2833
        %v2835 = vsel %vm2834, %v2830, inf
        %2836 = vmin.xlane.f32.xlu0 %v2835
        %v2837 = vpop.xlane.xlu0 %2836
        %v2838 = vcvt.f32.s32 %v2837
        %v2839 = vcvt.f32.s32 %v2833
        %v2840 = vshll.u32 %v2839, 16
        %v2841 = vadd.s32 %v2840, %v2838
        %v2842 = vsel %vm2212, %v2820, 2147483647
        %v2843 = vand.u32 %v2842, 65535
        %v2844 = vshra.s32 %v2842, 16
        %v2845 = vcvt.s32.f32 %v2843
        %v2846 = vcvt.s32.f32 %v2844
        %2847 = vmin.xlane.f32.xlu0 %v2846
        %v2848 = vpop.xlane.xlu0 %2847
        %vm2849 = vcmp.eq.f32.partialorder %v2846, %v2848
        %v2850 = vsel %vm2849, %v2845, inf
        %2851 = vmin.xlane.f32.xlu0 %v2850
        %v2852 = vpop.xlane.xlu0 %2851
        %v2853 = vcvt.f32.s32 %v2852
        %v2854 = vcvt.f32.s32 %v2848
        %v2855 = vshll.u32 %v2854, 16
        %v2856 = vadd.s32 %v2855, %v2853
        %v2857 = vsel %vm2212, %v2821, 2147483647
        %v2858 = vand.u32 %v2857, 65535
        %v2859 = vshra.s32 %v2857, 16
        %v2860 = vcvt.s32.f32 %v2858
        %v2861 = vcvt.s32.f32 %v2859
        %2862 = vmin.xlane.f32.xlu0 %v2861
        %v2863 = vpop.xlane.xlu0 %2862
        %vm2864 = vcmp.eq.f32.partialorder %v2861, %v2863
        %v2865 = vsel %vm2864, %v2860, inf
        %2866 = vmin.xlane.f32.xlu0 %v2865
        %v2867 = vpop.xlane.xlu0 %2866
        %v2868 = vcvt.f32.s32 %v2867
        %v2869 = vcvt.f32.s32 %v2863
        %v2870 = vshll.u32 %v2869, 16
        %v2871 = vadd.s32 %v2870, %v2868
        %v2872 = vsel %vm2212, %v2822, 2147483647
        %v2873 = vand.u32 %v2872, 65535
        %v2874 = vshra.s32 %v2872, 16
        %v2875 = vcvt.s32.f32 %v2873
        %v2876 = vcvt.s32.f32 %v2874
        %2877 = vmin.xlane.f32.xlu0 %v2876
        %v2878 = vpop.xlane.xlu0 %2877
        %vm2879 = vcmp.eq.f32.partialorder %v2876, %v2878
        %v2880 = vsel %vm2879, %v2875, inf
        %2881 = vmin.xlane.f32.xlu0 %v2880
        %v2882 = vpop.xlane.xlu0 %2881
        %v2883 = vcvt.f32.s32 %v2882
        %v2884 = vcvt.f32.s32 %v2878
        %v2885 = vshll.u32 %v2884, 16
        %v2886 = vadd.s32 %v2885, %v2883
        %v2887 = vsel %vm2212, %v2823, 2147483647
        %v2888 = vand.u32 %v2887, 65535
        %v2889 = vshra.s32 %v2887, 16
        %v2890 = vcvt.s32.f32 %v2888
        %v2891 = vcvt.s32.f32 %v2889
        %2892 = vmin.xlane.f32.xlu0 %v2891
        %v2893 = vpop.xlane.xlu0 %2892
        %vm2894 = vcmp.eq.f32.partialorder %v2891, %v2893
        %v2895 = vsel %vm2894, %v2890, inf
        %2896 = vmin.xlane.f32.xlu0 %v2895
        %v2897 = vpop.xlane.xlu0 %2896
        %v2898 = vcvt.f32.s32 %v2897
        %v2899 = vcvt.f32.s32 %v2893
        %v2900 = vshll.u32 %v2899, 16
        %v2901 = vadd.s32 %v2900, %v2898
        %v2902 = vsel %vm2212, %v2824, 2147483647
        %v2903 = vand.u32 %v2902, 65535
        %v2904 = vshra.s32 %v2902, 16
        %v2905 = vcvt.s32.f32 %v2903
        %v2906 = vcvt.s32.f32 %v2904
        %2907 = vmin.xlane.f32.xlu0 %v2906
        %v2908 = vpop.xlane.xlu0 %2907
        %vm2909 = vcmp.eq.f32.partialorder %v2906, %v2908
        %v2910 = vsel %vm2909, %v2905, inf
        %2911 = vmin.xlane.f32.xlu0 %v2910
        %v2912 = vpop.xlane.xlu0 %2911
        %v2913 = vcvt.f32.s32 %v2912
        %v2914 = vcvt.f32.s32 %v2908
        %v2915 = vshll.u32 %v2914, 16
        %v2916 = vadd.s32 %v2915, %v2913
        %v2917 = vsel %vm2212, %v2825, 2147483647
        %v2918 = vand.u32 %v2917, 65535
        %v2919 = vshra.s32 %v2917, 16
        %v2920 = vcvt.s32.f32 %v2918
        %v2921 = vcvt.s32.f32 %v2919
        %2922 = vmin.xlane.f32.xlu0 %v2921
        %v2923 = vpop.xlane.xlu0 %2922
        %vm2924 = vcmp.eq.f32.partialorder %v2921, %v2923
        %v2925 = vsel %vm2924, %v2920, inf
        %2926 = vmin.xlane.f32.xlu0 %v2925
        %v2927 = vpop.xlane.xlu0 %2926
        %v2928 = vcvt.f32.s32 %v2927
        %v2929 = vcvt.f32.s32 %v2923
        %v2930 = vshll.u32 %v2929, 16
        %v2931 = vadd.s32 %v2930, %v2928
        %v2932 = vsel %vm2212, %v2826, 2147483647
        %v2933 = vand.u32 %v2932, 65535
        %v2934 = vshra.s32 %v2932, 16
        %v2935 = vcvt.s32.f32 %v2933
        %v2936 = vcvt.s32.f32 %v2934
        %2937 = vmin.xlane.f32.xlu0 %v2936
        %v2938 = vpop.xlane.xlu0 %2937
        %vm2939 = vcmp.eq.f32.partialorder %v2936, %v2938
        %v2940 = vsel %vm2939, %v2935, inf
        %2941 = vmin.xlane.f32.xlu0 %v2940
        %v2942 = vpop.xlane.xlu0 %2941
        %v2943 = vcvt.f32.s32 %v2942
        %v2944 = vcvt.f32.s32 %v2938
        %v2945 = vshll.u32 %v2944, 16
        %v2946 = vadd.s32 %v2945, %v2943
        %vm2947 = vcmp.eq.s32.totalorder %v1787, %v2841
        %vm2948 = vcmp.eq.s32.totalorder %v1787, %v2856
        %vm2949 = vcmp.eq.s32.totalorder %v1787, %v2871
        %vm2950 = vcmp.eq.s32.totalorder %v1787, %v2886
        %vm2951 = vcmp.eq.s32.totalorder %v1787, %v2901
        %vm2952 = vcmp.eq.s32.totalorder %v1787, %v2916
        %vm2953 = vcmp.eq.s32.totalorder %v1787, %v2931
        %vm2954 = vcmp.eq.s32.totalorder %v1787, %v2946
        %v2955 = vsel %vm2947, -1e+30, %v2700
        %v2956 = vsel %vm2948, -1e+30, %v2701
        %v2957 = vsel %vm2949, -1e+30, %v2702
        %v2958 = vsel %vm2950, -1e+30, %v2703
        %v2959 = vsel %vm2951, -1e+30, %v2704
        %v2960 = vsel %vm2952, -1e+30, %v2705
        %v2961 = vsel %vm2953, -1e+30, %v2706
        %v2962 = vsel %vm2954, -1e+30, %v2707
        %v2963 = vsel %vm2212, %v2955, -inf
        %2964 = vmax.xlane.f32.xlu0 %v2963
        %v2965 = vpop.xlane.xlu0 %2964
        %v2966 = vsel %vm2212, %v2956, -inf
        %2967 = vmax.xlane.f32.xlu0 %v2966
        %v2968 = vpop.xlane.xlu0 %2967
        %v2969 = vsel %vm2212, %v2957, -inf
        %2970 = vmax.xlane.f32.xlu0 %v2969
        %v2971 = vpop.xlane.xlu0 %2970
        %v2972 = vsel %vm2212, %v2958, -inf
        %2973 = vmax.xlane.f32.xlu0 %v2972
        %v2974 = vpop.xlane.xlu0 %2973
        %v2975 = vsel %vm2212, %v2959, -inf
        %2976 = vmax.xlane.f32.xlu0 %v2975
        %v2977 = vpop.xlane.xlu0 %2976
        %v2978 = vsel %vm2212, %v2960, -inf
        %2979 = vmax.xlane.f32.xlu0 %v2978
        %v2980 = vpop.xlane.xlu0 %2979
        %v2981 = vsel %vm2212, %v2961, -inf
        %2982 = vmax.xlane.f32.xlu0 %v2981
        %v2983 = vpop.xlane.xlu0 %2982
        %v2984 = vsel %vm2212, %v2962, -inf
        %2985 = vmax.xlane.f32.xlu0 %v2984
        %v2986 = vpop.xlane.xlu0 %2985
        %v2987 = vadd.f32 %v2732, %v2965
        %v2988 = vadd.f32 %v2733, %v2968
        %v2989 = vadd.f32 %v2734, %v2971
        %v2990 = vadd.f32 %v2735, %v2974
        %v2991 = vadd.f32 %v2736, %v2977
        %v2992 = vadd.f32 %v2737, %v2980
        %v2993 = vadd.f32 %v2738, %v2983
        %v2994 = vadd.f32 %v2739, %v2986
        %v2995 = vsub.f32 %v2987, 1.0
        %v2996 = vsub.f32 %v2988, 1.0
        %v2997 = vsub.f32 %v2989, 1.0
        %v2998 = vsub.f32 %v2990, 1.0
        %v2999 = vsub.f32 %v2991, 1.0
        %v3000 = vsub.f32 %v2992, 1.0
        %v3001 = vsub.f32 %v2993, 1.0
        %v3002 = vsub.f32 %v2994, 1.0
        %v3003 = vrcp.pop 4.0
        %v3004 = vmul.f32 4.0, %v3003
        %v3005 = vsub.f32 1.0, %v3004
        %v3006 = vmul.f32 %v3003, %v3005
        %v3007 = vadd.f32 %v3003, %v3006
        %vm3008 = vweird.f32 %v3003
        %v3009 = vsel %vm3008, %v3003, %v3007
        %v3010 = vmul.f32 %v2995, %v3009
        %v3011 = vmul.f32 %v2996, %v3009
        %v3012 = vmul.f32 %v2997, %v3009
        %v3013 = vmul.f32 %v2998, %v3009
        %v3014 = vmul.f32 %v2999, %v3009
        %v3015 = vmul.f32 %v3000, %v3009
        %v3016 = vmul.f32 %v3001, %v3009
        %v3017 = vmul.f32 %v3002, %v3009
        %v3018 = vsub.f32 %v2965, %v3010
        %v3019 = vsub.f32 %v2968, %v3011
        %v3020 = vsub.f32 %v2971, %v3012
        %v3021 = vsub.f32 %v2974, %v3013
        %v3022 = vsub.f32 %v2977, %v3014
        %v3023 = vsub.f32 %v2980, %v3015
        %v3024 = vsub.f32 %v2983, %v3016
        %v3025 = vsub.f32 %v2986, %v3017
        %vm3026 = vcmp.gt.f32.partialorder %v3018, 0.0
        %vm3027 = vcmp.gt.f32.partialorder %v3019, 0.0
        %vm3028 = vcmp.gt.f32.partialorder %v3020, 0.0
        %vm3029 = vcmp.gt.f32.partialorder %v3021, 0.0
        %vm3030 = vcmp.gt.f32.partialorder %v3022, 0.0
        %vm3031 = vcmp.gt.f32.partialorder %v3023, 0.0
        %vm3032 = vcmp.gt.f32.partialorder %v3024, 0.0
        %vm3033 = vcmp.gt.f32.partialorder %v3025, 0.0
        %v3034 = vsel %vm3026, 1, 0
        %v3035 = vsel %vm3027, 1, 0
        %v3036 = vsel %vm3028, 1, 0
        %v3037 = vsel %vm3029, 1, 0
        %v3038 = vsel %vm3030, 1, 0
        %v3039 = vsel %vm3031, 1, 0
        %v3040 = vsel %vm3032, 1, 0
        %v3041 = vsel %vm3033, 1, 0
        %v3042 = vcvt.s32.f32 %v3034
        %v3043 = vcvt.s32.f32 %v3035
        %v3044 = vcvt.s32.f32 %v3036
        %v3045 = vcvt.s32.f32 %v3037
        %v3046 = vcvt.s32.f32 %v3038
        %v3047 = vcvt.s32.f32 %v3039
        %v3048 = vcvt.s32.f32 %v3040
        %v3049 = vcvt.s32.f32 %v3041
        %v3050 = vadd.f32 %v2795, %v3042
        %v3051 = vadd.f32 %v2796, %v3043
        %v3052 = vadd.f32 %v2797, %v3044
        %v3053 = vadd.f32 %v2798, %v3045
        %v3054 = vadd.f32 %v2799, %v3046
        %v3055 = vadd.f32 %v2800, %v3047
        %v3056 = vadd.f32 %v2801, %v3048
        %v3057 = vadd.f32 %v2802, %v3049
        %v3058 = vsel %vm3026, %v2987, %v2803
        %v3059 = vsel %vm3027, %v2988, %v2804
        %v3060 = vsel %vm3028, %v2989, %v2805
        %v3061 = vsel %vm3029, %v2990, %v2806
        %v3062 = vsel %vm3030, %v2991, %v2807
        %v3063 = vsel %vm3031, %v2992, %v2808
        %v3064 = vsel %vm3032, %v2993, %v2809
        %v3065 = vsel %vm3033, %v2994, %v2810
        %vm3066 = vcmp.eq.f32.partialorder %v2955, %v2965
        %vm3067 = vcmp.eq.f32.partialorder %v2956, %v2968
        %vm3068 = vcmp.eq.f32.partialorder %v2957, %v2971
        %vm3069 = vcmp.eq.f32.partialorder %v2958, %v2974
        %vm3070 = vcmp.eq.f32.partialorder %v2959, %v2977
        %vm3071 = vcmp.eq.f32.partialorder %v2960, %v2980
        %vm3072 = vcmp.eq.f32.partialorder %v2961, %v2983
        %vm3073 = vcmp.eq.f32.partialorder %v2962, %v2986
        %v3074 = vsel %vm3066, %v1787, 8
        %v3075 = vsel %vm3067, %v1787, 8
        %v3076 = vsel %vm3068, %v1787, 8
        %v3077 = vsel %vm3069, %v1787, 8
        %v3078 = vsel %vm3070, %v1787, 8
        %v3079 = vsel %vm3071, %v1787, 8
        %v3080 = vsel %vm3072, %v1787, 8
        %v3081 = vsel %vm3073, %v1787, 8
        %v3082 = vsel %vm2212, %v3074, 2147483647
        %v3083 = vand.u32 %v3082, 65535
        %v3084 = vshra.s32 %v3082, 16
        %v3085 = vcvt.s32.f32 %v3083
        %v3086 = vcvt.s32.f32 %v3084
        %3087 = vmin.xlane.f32.xlu0 %v3086
        %v3088 = vpop.xlane.xlu0 %3087
        %vm3089 = vcmp.eq.f32.partialorder %v3086, %v3088
        %v3090 = vsel %vm3089, %v3085, inf
        %3091 = vmin.xlane.f32.xlu0 %v3090
        %v3092 = vpop.xlane.xlu0 %3091
        %v3093 = vcvt.f32.s32 %v3092
        %v3094 = vcvt.f32.s32 %v3088
        %v3095 = vshll.u32 %v3094, 16
        %v3096 = vadd.s32 %v3095, %v3093
        %v3097 = vsel %vm2212, %v3075, 2147483647
        %v3098 = vand.u32 %v3097, 65535
        %v3099 = vshra.s32 %v3097, 16
        %v3100 = vcvt.s32.f32 %v3098
        %v3101 = vcvt.s32.f32 %v3099
        %3102 = vmin.xlane.f32.xlu0 %v3101
        %v3103 = vpop.xlane.xlu0 %3102
        %vm3104 = vcmp.eq.f32.partialorder %v3101, %v3103
        %v3105 = vsel %vm3104, %v3100, inf
        %3106 = vmin.xlane.f32.xlu0 %v3105
        %v3107 = vpop.xlane.xlu0 %3106
        %v3108 = vcvt.f32.s32 %v3107
        %v3109 = vcvt.f32.s32 %v3103
        %v3110 = vshll.u32 %v3109, 16
        %v3111 = vadd.s32 %v3110, %v3108
        %v3112 = vsel %vm2212, %v3076, 2147483647
        %v3113 = vand.u32 %v3112, 65535
        %v3114 = vshra.s32 %v3112, 16
        %v3115 = vcvt.s32.f32 %v3113
        %v3116 = vcvt.s32.f32 %v3114
        %3117 = vmin.xlane.f32.xlu0 %v3116
        %v3118 = vpop.xlane.xlu0 %3117
        %vm3119 = vcmp.eq.f32.partialorder %v3116, %v3118
        %v3120 = vsel %vm3119, %v3115, inf
        %3121 = vmin.xlane.f32.xlu0 %v3120
        %v3122 = vpop.xlane.xlu0 %3121
        %v3123 = vcvt.f32.s32 %v3122
        %v3124 = vcvt.f32.s32 %v3118
        %v3125 = vshll.u32 %v3124, 16
        %v3126 = vadd.s32 %v3125, %v3123
        %v3127 = vsel %vm2212, %v3077, 2147483647
        %v3128 = vand.u32 %v3127, 65535
        %v3129 = vshra.s32 %v3127, 16
        %v3130 = vcvt.s32.f32 %v3128
        %v3131 = vcvt.s32.f32 %v3129
        %3132 = vmin.xlane.f32.xlu0 %v3131
        %v3133 = vpop.xlane.xlu0 %3132
        %vm3134 = vcmp.eq.f32.partialorder %v3131, %v3133
        %v3135 = vsel %vm3134, %v3130, inf
        %3136 = vmin.xlane.f32.xlu0 %v3135
        %v3137 = vpop.xlane.xlu0 %3136
        %v3138 = vcvt.f32.s32 %v3137
        %v3139 = vcvt.f32.s32 %v3133
        %v3140 = vshll.u32 %v3139, 16
        %v3141 = vadd.s32 %v3140, %v3138
        %v3142 = vsel %vm2212, %v3078, 2147483647
        %v3143 = vand.u32 %v3142, 65535
        %v3144 = vshra.s32 %v3142, 16
        %v3145 = vcvt.s32.f32 %v3143
        %v3146 = vcvt.s32.f32 %v3144
        %3147 = vmin.xlane.f32.xlu0 %v3146
        %v3148 = vpop.xlane.xlu0 %3147
        %vm3149 = vcmp.eq.f32.partialorder %v3146, %v3148
        %v3150 = vsel %vm3149, %v3145, inf
        %3151 = vmin.xlane.f32.xlu0 %v3150
        %v3152 = vpop.xlane.xlu0 %3151
        %v3153 = vcvt.f32.s32 %v3152
        %v3154 = vcvt.f32.s32 %v3148
        %v3155 = vshll.u32 %v3154, 16
        %v3156 = vadd.s32 %v3155, %v3153
        %v3157 = vsel %vm2212, %v3079, 2147483647
        %v3158 = vand.u32 %v3157, 65535
        %v3159 = vshra.s32 %v3157, 16
        %v3160 = vcvt.s32.f32 %v3158
        %v3161 = vcvt.s32.f32 %v3159
        %3162 = vmin.xlane.f32.xlu0 %v3161
        %v3163 = vpop.xlane.xlu0 %3162
        %vm3164 = vcmp.eq.f32.partialorder %v3161, %v3163
        %v3165 = vsel %vm3164, %v3160, inf
        %3166 = vmin.xlane.f32.xlu0 %v3165
        %v3167 = vpop.xlane.xlu0 %3166
        %v3168 = vcvt.f32.s32 %v3167
        %v3169 = vcvt.f32.s32 %v3163
        %v3170 = vshll.u32 %v3169, 16
        %v3171 = vadd.s32 %v3170, %v3168
        %v3172 = vsel %vm2212, %v3080, 2147483647
        %v3173 = vand.u32 %v3172, 65535
        %v3174 = vshra.s32 %v3172, 16
        %v3175 = vcvt.s32.f32 %v3173
        %v3176 = vcvt.s32.f32 %v3174
        %3177 = vmin.xlane.f32.xlu0 %v3176
        %v3178 = vpop.xlane.xlu0 %3177
        %vm3179 = vcmp.eq.f32.partialorder %v3176, %v3178
        %v3180 = vsel %vm3179, %v3175, inf
        %3181 = vmin.xlane.f32.xlu0 %v3180
        %v3182 = vpop.xlane.xlu0 %3181
        %v3183 = vcvt.f32.s32 %v3182
        %v3184 = vcvt.f32.s32 %v3178
        %v3185 = vshll.u32 %v3184, 16
        %v3186 = vadd.s32 %v3185, %v3183
        %v3187 = vsel %vm2212, %v3081, 2147483647
        %v3188 = vand.u32 %v3187, 65535
        %v3189 = vshra.s32 %v3187, 16
        %v3190 = vcvt.s32.f32 %v3188
        %v3191 = vcvt.s32.f32 %v3189
        %3192 = vmin.xlane.f32.xlu0 %v3191
        %v3193 = vpop.xlane.xlu0 %3192
        %vm3194 = vcmp.eq.f32.partialorder %v3191, %v3193
        %v3195 = vsel %vm3194, %v3190, inf
        %3196 = vmin.xlane.f32.xlu0 %v3195
        %v3197 = vpop.xlane.xlu0 %3196
        %v3198 = vcvt.f32.s32 %v3197
        %v3199 = vcvt.f32.s32 %v3193
        %v3200 = vshll.u32 %v3199, 16
        %v3201 = vadd.s32 %v3200, %v3198
        %vm3202 = vcmp.eq.s32.totalorder %v1787, %v3096
        %vm3203 = vcmp.eq.s32.totalorder %v1787, %v3111
        %vm3204 = vcmp.eq.s32.totalorder %v1787, %v3126
        %vm3205 = vcmp.eq.s32.totalorder %v1787, %v3141
        %vm3206 = vcmp.eq.s32.totalorder %v1787, %v3156
        %vm3207 = vcmp.eq.s32.totalorder %v1787, %v3171
        %vm3208 = vcmp.eq.s32.totalorder %v1787, %v3186
        %vm3209 = vcmp.eq.s32.totalorder %v1787, %v3201
        %v3210 = vsel %vm3202, -1e+30, %v2955
        %v3211 = vsel %vm3203, -1e+30, %v2956
        %v3212 = vsel %vm3204, -1e+30, %v2957
        %v3213 = vsel %vm3205, -1e+30, %v2958
        %v3214 = vsel %vm3206, -1e+30, %v2959
        %v3215 = vsel %vm3207, -1e+30, %v2960
        %v3216 = vsel %vm3208, -1e+30, %v2961
        %v3217 = vsel %vm3209, -1e+30, %v2962
        %v3218 = vsel %vm2212, %v3210, -inf
        %3219 = vmax.xlane.f32.xlu0 %v3218
        %v3220 = vpop.xlane.xlu0 %3219
        %v3221 = vsel %vm2212, %v3211, -inf
        %3222 = vmax.xlane.f32.xlu0 %v3221
        %v3223 = vpop.xlane.xlu0 %3222
        %v3224 = vsel %vm2212, %v3212, -inf
        %3225 = vmax.xlane.f32.xlu0 %v3224
        %v3226 = vpop.xlane.xlu0 %3225
        %v3227 = vsel %vm2212, %v3213, -inf
        %3228 = vmax.xlane.f32.xlu0 %v3227
        %v3229 = vpop.xlane.xlu0 %3228
        %v3230 = vsel %vm2212, %v3214, -inf
        %3231 = vmax.xlane.f32.xlu0 %v3230
        %v3232 = vpop.xlane.xlu0 %3231
        %v3233 = vsel %vm2212, %v3215, -inf
        %3234 = vmax.xlane.f32.xlu0 %v3233
        %v3235 = vpop.xlane.xlu0 %3234
        %v3236 = vsel %vm2212, %v3216, -inf
        %3237 = vmax.xlane.f32.xlu0 %v3236
        %v3238 = vpop.xlane.xlu0 %3237
        %v3239 = vsel %vm2212, %v3217, -inf
        %3240 = vmax.xlane.f32.xlu0 %v3239
        %v3241 = vpop.xlane.xlu0 %3240
        %v3242 = vadd.f32 %v2987, %v3220
        %v3243 = vadd.f32 %v2988, %v3223
        %v3244 = vadd.f32 %v2989, %v3226
        %v3245 = vadd.f32 %v2990, %v3229
        %v3246 = vadd.f32 %v2991, %v3232
        %v3247 = vadd.f32 %v2992, %v3235
        %v3248 = vadd.f32 %v2993, %v3238
        %v3249 = vadd.f32 %v2994, %v3241
        %v3250 = vsub.f32 %v3242, 1.0
        %v3251 = vsub.f32 %v3243, 1.0
        %v3252 = vsub.f32 %v3244, 1.0
        %v3253 = vsub.f32 %v3245, 1.0
        %v3254 = vsub.f32 %v3246, 1.0
        %v3255 = vsub.f32 %v3247, 1.0
        %v3256 = vsub.f32 %v3248, 1.0
        %v3257 = vsub.f32 %v3249, 1.0
        %v3258 = vrcp.pop 5.0
        %v3259 = vmul.f32 5.0, %v3258
        %v3260 = vsub.f32 1.0, %v3259
        %v3261 = vmul.f32 %v3258, %v3260
        %v3262 = vadd.f32 %v3258, %v3261
        %vm3263 = vweird.f32 %v3258
        %v3264 = vsel %vm3263, %v3258, %v3262
        %v3265 = vmul.f32 %v3250, %v3264
        %v3266 = vmul.f32 %v3251, %v3264
        %v3267 = vmul.f32 %v3252, %v3264
        %v3268 = vmul.f32 %v3253, %v3264
        %v3269 = vmul.f32 %v3254, %v3264
        %v3270 = vmul.f32 %v3255, %v3264
        %v3271 = vmul.f32 %v3256, %v3264
        %v3272 = vmul.f32 %v3257, %v3264
        %v3273 = vsub.f32 %v3220, %v3265
        %v3274 = vsub.f32 %v3223, %v3266
        %v3275 = vsub.f32 %v3226, %v3267
        %v3276 = vsub.f32 %v3229, %v3268
        %v3277 = vsub.f32 %v3232, %v3269
        %v3278 = vsub.f32 %v3235, %v3270
        %v3279 = vsub.f32 %v3238, %v3271
        %v3280 = vsub.f32 %v3241, %v3272
        %vm3281 = vcmp.gt.f32.partialorder %v3273, 0.0
        %vm3282 = vcmp.gt.f32.partialorder %v3274, 0.0
        %vm3283 = vcmp.gt.f32.partialorder %v3275, 0.0
        %vm3284 = vcmp.gt.f32.partialorder %v3276, 0.0
        %vm3285 = vcmp.gt.f32.partialorder %v3277, 0.0
        %vm3286 = vcmp.gt.f32.partialorder %v3278, 0.0
        %vm3287 = vcmp.gt.f32.partialorder %v3279, 0.0
        %vm3288 = vcmp.gt.f32.partialorder %v3280, 0.0
        %v3289 = vsel %vm3281, 1, 0
        %v3290 = vsel %vm3282, 1, 0
        %v3291 = vsel %vm3283, 1, 0
        %v3292 = vsel %vm3284, 1, 0
        %v3293 = vsel %vm3285, 1, 0
        %v3294 = vsel %vm3286, 1, 0
        %v3295 = vsel %vm3287, 1, 0
        %v3296 = vsel %vm3288, 1, 0
        %v3297 = vcvt.s32.f32 %v3289
        %v3298 = vcvt.s32.f32 %v3290
        %v3299 = vcvt.s32.f32 %v3291
        %v3300 = vcvt.s32.f32 %v3292
        %v3301 = vcvt.s32.f32 %v3293
        %v3302 = vcvt.s32.f32 %v3294
        %v3303 = vcvt.s32.f32 %v3295
        %v3304 = vcvt.s32.f32 %v3296
        %v3305 = vadd.f32 %v3050, %v3297
        %v3306 = vadd.f32 %v3051, %v3298
        %v3307 = vadd.f32 %v3052, %v3299
        %v3308 = vadd.f32 %v3053, %v3300
        %v3309 = vadd.f32 %v3054, %v3301
        %v3310 = vadd.f32 %v3055, %v3302
        %v3311 = vadd.f32 %v3056, %v3303
        %v3312 = vadd.f32 %v3057, %v3304
        %v3313 = vsel %vm3281, %v3242, %v3058
        %v3314 = vsel %vm3282, %v3243, %v3059
        %v3315 = vsel %vm3283, %v3244, %v3060
        %v3316 = vsel %vm3284, %v3245, %v3061
        %v3317 = vsel %vm3285, %v3246, %v3062
        %v3318 = vsel %vm3286, %v3247, %v3063
        %v3319 = vsel %vm3287, %v3248, %v3064
        %v3320 = vsel %vm3288, %v3249, %v3065
        %vm3321 = vcmp.eq.f32.partialorder %v3210, %v3220
        %vm3322 = vcmp.eq.f32.partialorder %v3211, %v3223
        %vm3323 = vcmp.eq.f32.partialorder %v3212, %v3226
        %vm3324 = vcmp.eq.f32.partialorder %v3213, %v3229
        %vm3325 = vcmp.eq.f32.partialorder %v3214, %v3232
        %vm3326 = vcmp.eq.f32.partialorder %v3215, %v3235
        %vm3327 = vcmp.eq.f32.partialorder %v3216, %v3238
        %vm3328 = vcmp.eq.f32.partialorder %v3217, %v3241
        %v3329 = vsel %vm3321, %v1787, 8
        %v3330 = vsel %vm3322, %v1787, 8
        %v3331 = vsel %vm3323, %v1787, 8
        %v3332 = vsel %vm3324, %v1787, 8
        %v3333 = vsel %vm3325, %v1787, 8
        %v3334 = vsel %vm3326, %v1787, 8
        %v3335 = vsel %vm3327, %v1787, 8
        %v3336 = vsel %vm3328, %v1787, 8
        %v3337 = vsel %vm2212, %v3329, 2147483647
        %v3338 = vand.u32 %v3337, 65535
        %v3339 = vshra.s32 %v3337, 16
        %v3340 = vcvt.s32.f32 %v3338
        %v3341 = vcvt.s32.f32 %v3339
        %3342 = vmin.xlane.f32.xlu0 %v3341
        %v3343 = vpop.xlane.xlu0 %3342
        %vm3344 = vcmp.eq.f32.partialorder %v3341, %v3343
        %v3345 = vsel %vm3344, %v3340, inf
        %3346 = vmin.xlane.f32.xlu0 %v3345
        %v3347 = vpop.xlane.xlu0 %3346
        %v3348 = vcvt.f32.s32 %v3347
        %v3349 = vcvt.f32.s32 %v3343
        %v3350 = vshll.u32 %v3349, 16
        %v3351 = vadd.s32 %v3350, %v3348
        %v3352 = vsel %vm2212, %v3330, 2147483647
        %v3353 = vand.u32 %v3352, 65535
        %v3354 = vshra.s32 %v3352, 16
        %v3355 = vcvt.s32.f32 %v3353
        %v3356 = vcvt.s32.f32 %v3354
        %3357 = vmin.xlane.f32.xlu0 %v3356
        %v3358 = vpop.xlane.xlu0 %3357
        %vm3359 = vcmp.eq.f32.partialorder %v3356, %v3358
        %v3360 = vsel %vm3359, %v3355, inf
        %3361 = vmin.xlane.f32.xlu0 %v3360
        %v3362 = vpop.xlane.xlu0 %3361
        %v3363 = vcvt.f32.s32 %v3362
        %v3364 = vcvt.f32.s32 %v3358
        %v3365 = vshll.u32 %v3364, 16
        %v3366 = vadd.s32 %v3365, %v3363
        %v3367 = vsel %vm2212, %v3331, 2147483647
        %v3368 = vand.u32 %v3367, 65535
        %v3369 = vshra.s32 %v3367, 16
        %v3370 = vcvt.s32.f32 %v3368
        %v3371 = vcvt.s32.f32 %v3369
        %3372 = vmin.xlane.f32.xlu0 %v3371
        %v3373 = vpop.xlane.xlu0 %3372
        %vm3374 = vcmp.eq.f32.partialorder %v3371, %v3373
        %v3375 = vsel %vm3374, %v3370, inf
        %3376 = vmin.xlane.f32.xlu0 %v3375
        %v3377 = vpop.xlane.xlu0 %3376
        %v3378 = vcvt.f32.s32 %v3377
        %v3379 = vcvt.f32.s32 %v3373
        %v3380 = vshll.u32 %v3379, 16
        %v3381 = vadd.s32 %v3380, %v3378
        %v3382 = vsel %vm2212, %v3332, 2147483647
        %v3383 = vand.u32 %v3382, 65535
        %v3384 = vshra.s32 %v3382, 16
        %v3385 = vcvt.s32.f32 %v3383
        %v3386 = vcvt.s32.f32 %v3384
        %3387 = vmin.xlane.f32.xlu0 %v3386
        %v3388 = vpop.xlane.xlu0 %3387
        %vm3389 = vcmp.eq.f32.partialorder %v3386, %v3388
        %v3390 = vsel %vm3389, %v3385, inf
        %3391 = vmin.xlane.f32.xlu0 %v3390
        %v3392 = vpop.xlane.xlu0 %3391
        %v3393 = vcvt.f32.s32 %v3392
        %v3394 = vcvt.f32.s32 %v3388
        %v3395 = vshll.u32 %v3394, 16
        %v3396 = vadd.s32 %v3395, %v3393
        %v3397 = vsel %vm2212, %v3333, 2147483647
        %v3398 = vand.u32 %v3397, 65535
        %v3399 = vshra.s32 %v3397, 16
        %v3400 = vcvt.s32.f32 %v3398
        %v3401 = vcvt.s32.f32 %v3399
        %3402 = vmin.xlane.f32.xlu0 %v3401
        %v3403 = vpop.xlane.xlu0 %3402
        %vm3404 = vcmp.eq.f32.partialorder %v3401, %v3403
        %v3405 = vsel %vm3404, %v3400, inf
        %3406 = vmin.xlane.f32.xlu0 %v3405
        %v3407 = vpop.xlane.xlu0 %3406
        %v3408 = vcvt.f32.s32 %v3407
        %v3409 = vcvt.f32.s32 %v3403
        %v3410 = vshll.u32 %v3409, 16
        %v3411 = vadd.s32 %v3410, %v3408
        %v3412 = vsel %vm2212, %v3334, 2147483647
        %v3413 = vand.u32 %v3412, 65535
        %v3414 = vshra.s32 %v3412, 16
        %v3415 = vcvt.s32.f32 %v3413
        %v3416 = vcvt.s32.f32 %v3414
        %3417 = vmin.xlane.f32.xlu0 %v3416
        %v3418 = vpop.xlane.xlu0 %3417
        %vm3419 = vcmp.eq.f32.partialorder %v3416, %v3418
        %v3420 = vsel %vm3419, %v3415, inf
        %3421 = vmin.xlane.f32.xlu0 %v3420
        %v3422 = vpop.xlane.xlu0 %3421
        %v3423 = vcvt.f32.s32 %v3422
        %v3424 = vcvt.f32.s32 %v3418
        %v3425 = vshll.u32 %v3424, 16
        %v3426 = vadd.s32 %v3425, %v3423
        %v3427 = vsel %vm2212, %v3335, 2147483647
        %v3428 = vand.u32 %v3427, 65535
        %v3429 = vshra.s32 %v3427, 16
        %v3430 = vcvt.s32.f32 %v3428
        %v3431 = vcvt.s32.f32 %v3429
        %3432 = vmin.xlane.f32.xlu0 %v3431
        %v3433 = vpop.xlane.xlu0 %3432
        %vm3434 = vcmp.eq.f32.partialorder %v3431, %v3433
        %v3435 = vsel %vm3434, %v3430, inf
        %3436 = vmin.xlane.f32.xlu0 %v3435
        %v3437 = vpop.xlane.xlu0 %3436
        %v3438 = vcvt.f32.s32 %v3437
        %v3439 = vcvt.f32.s32 %v3433
        %v3440 = vshll.u32 %v3439, 16
        %v3441 = vadd.s32 %v3440, %v3438
        %v3442 = vsel %vm2212, %v3336, 2147483647
        %v3443 = vand.u32 %v3442, 65535
        %v3444 = vshra.s32 %v3442, 16
        %v3445 = vcvt.s32.f32 %v3443
        %v3446 = vcvt.s32.f32 %v3444
        %3447 = vmin.xlane.f32.xlu0 %v3446
        %v3448 = vpop.xlane.xlu0 %3447
        %vm3449 = vcmp.eq.f32.partialorder %v3446, %v3448
        %v3450 = vsel %vm3449, %v3445, inf
        %3451 = vmin.xlane.f32.xlu0 %v3450
        %v3452 = vpop.xlane.xlu0 %3451
        %v3453 = vcvt.f32.s32 %v3452
        %v3454 = vcvt.f32.s32 %v3448
        %v3455 = vshll.u32 %v3454, 16
        %v3456 = vadd.s32 %v3455, %v3453
        %vm3457 = vcmp.eq.s32.totalorder %v1787, %v3351
        %vm3458 = vcmp.eq.s32.totalorder %v1787, %v3366
        %vm3459 = vcmp.eq.s32.totalorder %v1787, %v3381
        %vm3460 = vcmp.eq.s32.totalorder %v1787, %v3396
        %vm3461 = vcmp.eq.s32.totalorder %v1787, %v3411
        %vm3462 = vcmp.eq.s32.totalorder %v1787, %v3426
        %vm3463 = vcmp.eq.s32.totalorder %v1787, %v3441
        %vm3464 = vcmp.eq.s32.totalorder %v1787, %v3456
        %v3465 = vsel %vm3457, -1e+30, %v3210
        %v3466 = vsel %vm3458, -1e+30, %v3211
        %v3467 = vsel %vm3459, -1e+30, %v3212
        %v3468 = vsel %vm3460, -1e+30, %v3213
        %v3469 = vsel %vm3461, -1e+30, %v3214
        %v3470 = vsel %vm3462, -1e+30, %v3215
        %v3471 = vsel %vm3463, -1e+30, %v3216
        %v3472 = vsel %vm3464, -1e+30, %v3217
        %v3473 = vsel %vm2212, %v3465, -inf
        %3474 = vmax.xlane.f32.xlu0 %v3473
        %v3475 = vpop.xlane.xlu0 %3474
        %v3476 = vsel %vm2212, %v3466, -inf
        %3477 = vmax.xlane.f32.xlu0 %v3476
        %v3478 = vpop.xlane.xlu0 %3477
        %v3479 = vsel %vm2212, %v3467, -inf
        %3480 = vmax.xlane.f32.xlu0 %v3479
        %v3481 = vpop.xlane.xlu0 %3480
        %v3482 = vsel %vm2212, %v3468, -inf
        %3483 = vmax.xlane.f32.xlu0 %v3482
        %v3484 = vpop.xlane.xlu0 %3483
        %v3485 = vsel %vm2212, %v3469, -inf
        %3486 = vmax.xlane.f32.xlu0 %v3485
        %v3487 = vpop.xlane.xlu0 %3486
        %v3488 = vsel %vm2212, %v3470, -inf
        %3489 = vmax.xlane.f32.xlu0 %v3488
        %v3490 = vpop.xlane.xlu0 %3489
        %v3491 = vsel %vm2212, %v3471, -inf
        %3492 = vmax.xlane.f32.xlu0 %v3491
        %v3493 = vpop.xlane.xlu0 %3492
        %v3494 = vsel %vm2212, %v3472, -inf
        %3495 = vmax.xlane.f32.xlu0 %v3494
        %v3496 = vpop.xlane.xlu0 %3495
        %v3497 = vadd.f32 %v3242, %v3475
        %v3498 = vadd.f32 %v3243, %v3478
        %v3499 = vadd.f32 %v3244, %v3481
        %v3500 = vadd.f32 %v3245, %v3484
        %v3501 = vadd.f32 %v3246, %v3487
        %v3502 = vadd.f32 %v3247, %v3490
        %v3503 = vadd.f32 %v3248, %v3493
        %v3504 = vadd.f32 %v3249, %v3496
        %v3505 = vsub.f32 %v3497, 1.0
        %v3506 = vsub.f32 %v3498, 1.0
        %v3507 = vsub.f32 %v3499, 1.0
        %v3508 = vsub.f32 %v3500, 1.0
        %v3509 = vsub.f32 %v3501, 1.0
        %v3510 = vsub.f32 %v3502, 1.0
        %v3511 = vsub.f32 %v3503, 1.0
        %v3512 = vsub.f32 %v3504, 1.0
        %v3513 = vrcp.pop 6.0
        %v3514 = vmul.f32 6.0, %v3513
        %v3515 = vsub.f32 1.0, %v3514
        %v3516 = vmul.f32 %v3513, %v3515
        %v3517 = vadd.f32 %v3513, %v3516
        %vm3518 = vweird.f32 %v3513
        %v3519 = vsel %vm3518, %v3513, %v3517
        %v3520 = vmul.f32 %v3505, %v3519
        %v3521 = vmul.f32 %v3506, %v3519
        %v3522 = vmul.f32 %v3507, %v3519
        %v3523 = vmul.f32 %v3508, %v3519
        %v3524 = vmul.f32 %v3509, %v3519
        %v3525 = vmul.f32 %v3510, %v3519
        %v3526 = vmul.f32 %v3511, %v3519
        %v3527 = vmul.f32 %v3512, %v3519
        %v3528 = vsub.f32 %v3475, %v3520
        %v3529 = vsub.f32 %v3478, %v3521
        %v3530 = vsub.f32 %v3481, %v3522
        %v3531 = vsub.f32 %v3484, %v3523
        %v3532 = vsub.f32 %v3487, %v3524
        %v3533 = vsub.f32 %v3490, %v3525
        %v3534 = vsub.f32 %v3493, %v3526
        %v3535 = vsub.f32 %v3496, %v3527
        %vm3536 = vcmp.gt.f32.partialorder %v3528, 0.0
        %vm3537 = vcmp.gt.f32.partialorder %v3529, 0.0
        %vm3538 = vcmp.gt.f32.partialorder %v3530, 0.0
        %vm3539 = vcmp.gt.f32.partialorder %v3531, 0.0
        %vm3540 = vcmp.gt.f32.partialorder %v3532, 0.0
        %vm3541 = vcmp.gt.f32.partialorder %v3533, 0.0
        %vm3542 = vcmp.gt.f32.partialorder %v3534, 0.0
        %vm3543 = vcmp.gt.f32.partialorder %v3535, 0.0
        %v3544 = vsel %vm3536, 1, 0
        %v3545 = vsel %vm3537, 1, 0
        %v3546 = vsel %vm3538, 1, 0
        %v3547 = vsel %vm3539, 1, 0
        %v3548 = vsel %vm3540, 1, 0
        %v3549 = vsel %vm3541, 1, 0
        %v3550 = vsel %vm3542, 1, 0
        %v3551 = vsel %vm3543, 1, 0
        %v3552 = vcvt.s32.f32 %v3544
        %v3553 = vcvt.s32.f32 %v3545
        %v3554 = vcvt.s32.f32 %v3546
        %v3555 = vcvt.s32.f32 %v3547
        %v3556 = vcvt.s32.f32 %v3548
        %v3557 = vcvt.s32.f32 %v3549
        %v3558 = vcvt.s32.f32 %v3550
        %v3559 = vcvt.s32.f32 %v3551
        %v3560 = vadd.f32 %v3305, %v3552
        %v3561 = vadd.f32 %v3306, %v3553
        %v3562 = vadd.f32 %v3307, %v3554
        %v3563 = vadd.f32 %v3308, %v3555
        %v3564 = vadd.f32 %v3309, %v3556
        %v3565 = vadd.f32 %v3310, %v3557
        %v3566 = vadd.f32 %v3311, %v3558
        %v3567 = vadd.f32 %v3312, %v3559
        %v3568 = vsel %vm3536, %v3497, %v3313
        %v3569 = vsel %vm3537, %v3498, %v3314
        %v3570 = vsel %vm3538, %v3499, %v3315
        %v3571 = vsel %vm3539, %v3500, %v3316
        %v3572 = vsel %vm3540, %v3501, %v3317
        %v3573 = vsel %vm3541, %v3502, %v3318
        %v3574 = vsel %vm3542, %v3503, %v3319
        %v3575 = vsel %vm3543, %v3504, %v3320
        %vm3576 = vcmp.eq.f32.partialorder %v3465, %v3475
        %vm3577 = vcmp.eq.f32.partialorder %v3466, %v3478
        %vm3578 = vcmp.eq.f32.partialorder %v3467, %v3481
        %vm3579 = vcmp.eq.f32.partialorder %v3468, %v3484
        %vm3580 = vcmp.eq.f32.partialorder %v3469, %v3487
        %vm3581 = vcmp.eq.f32.partialorder %v3470, %v3490
        %vm3582 = vcmp.eq.f32.partialorder %v3471, %v3493
        %vm3583 = vcmp.eq.f32.partialorder %v3472, %v3496
        %v3584 = vsel %vm3576, %v1787, 8
        %v3585 = vsel %vm3577, %v1787, 8
        %v3586 = vsel %vm3578, %v1787, 8
        %v3587 = vsel %vm3579, %v1787, 8
        %v3588 = vsel %vm3580, %v1787, 8
        %v3589 = vsel %vm3581, %v1787, 8
        %v3590 = vsel %vm3582, %v1787, 8
        %v3591 = vsel %vm3583, %v1787, 8
        %v3592 = vsel %vm2212, %v3584, 2147483647
        %v3593 = vand.u32 %v3592, 65535
        %v3594 = vshra.s32 %v3592, 16
        %v3595 = vcvt.s32.f32 %v3593
        %v3596 = vcvt.s32.f32 %v3594
        %3597 = vmin.xlane.f32.xlu0 %v3596
        %v3598 = vpop.xlane.xlu0 %3597
        %vm3599 = vcmp.eq.f32.partialorder %v3596, %v3598
        %v3600 = vsel %vm3599, %v3595, inf
        %3601 = vmin.xlane.f32.xlu0 %v3600
        %v3602 = vpop.xlane.xlu0 %3601
        %v3603 = vcvt.f32.s32 %v3602
        %v3604 = vcvt.f32.s32 %v3598
        %v3605 = vshll.u32 %v3604, 16
        %v3606 = vadd.s32 %v3605, %v3603
        %v3607 = vsel %vm2212, %v3585, 2147483647
        %v3608 = vand.u32 %v3607, 65535
        %v3609 = vshra.s32 %v3607, 16
        %v3610 = vcvt.s32.f32 %v3608
        %v3611 = vcvt.s32.f32 %v3609
        %3612 = vmin.xlane.f32.xlu0 %v3611
        %v3613 = vpop.xlane.xlu0 %3612
        %vm3614 = vcmp.eq.f32.partialorder %v3611, %v3613
        %v3615 = vsel %vm3614, %v3610, inf
        %3616 = vmin.xlane.f32.xlu0 %v3615
        %v3617 = vpop.xlane.xlu0 %3616
        %v3618 = vcvt.f32.s32 %v3617
        %v3619 = vcvt.f32.s32 %v3613
        %v3620 = vshll.u32 %v3619, 16
        %v3621 = vadd.s32 %v3620, %v3618
        %v3622 = vsel %vm2212, %v3586, 2147483647
        %v3623 = vand.u32 %v3622, 65535
        %v3624 = vshra.s32 %v3622, 16
        %v3625 = vcvt.s32.f32 %v3623
        %v3626 = vcvt.s32.f32 %v3624
        %3627 = vmin.xlane.f32.xlu0 %v3626
        %v3628 = vpop.xlane.xlu0 %3627
        %vm3629 = vcmp.eq.f32.partialorder %v3626, %v3628
        %v3630 = vsel %vm3629, %v3625, inf
        %3631 = vmin.xlane.f32.xlu0 %v3630
        %v3632 = vpop.xlane.xlu0 %3631
        %v3633 = vcvt.f32.s32 %v3632
        %v3634 = vcvt.f32.s32 %v3628
        %v3635 = vshll.u32 %v3634, 16
        %v3636 = vadd.s32 %v3635, %v3633
        %v3637 = vsel %vm2212, %v3587, 2147483647
        %v3638 = vand.u32 %v3637, 65535
        %v3639 = vshra.s32 %v3637, 16
        %v3640 = vcvt.s32.f32 %v3638
        %v3641 = vcvt.s32.f32 %v3639
        %3642 = vmin.xlane.f32.xlu0 %v3641
        %v3643 = vpop.xlane.xlu0 %3642
        %vm3644 = vcmp.eq.f32.partialorder %v3641, %v3643
        %v3645 = vsel %vm3644, %v3640, inf
        %3646 = vmin.xlane.f32.xlu0 %v3645
        %v3647 = vpop.xlane.xlu0 %3646
        %v3648 = vcvt.f32.s32 %v3647
        %v3649 = vcvt.f32.s32 %v3643
        %v3650 = vshll.u32 %v3649, 16
        %v3651 = vadd.s32 %v3650, %v3648
        %v3652 = vsel %vm2212, %v3588, 2147483647
        %v3653 = vand.u32 %v3652, 65535
        %v3654 = vshra.s32 %v3652, 16
        %v3655 = vcvt.s32.f32 %v3653
        %v3656 = vcvt.s32.f32 %v3654
        %3657 = vmin.xlane.f32.xlu0 %v3656
        %v3658 = vpop.xlane.xlu0 %3657
        %vm3659 = vcmp.eq.f32.partialorder %v3656, %v3658
        %v3660 = vsel %vm3659, %v3655, inf
        %3661 = vmin.xlane.f32.xlu0 %v3660
        %v3662 = vpop.xlane.xlu0 %3661
        %v3663 = vcvt.f32.s32 %v3662
        %v3664 = vcvt.f32.s32 %v3658
        %v3665 = vshll.u32 %v3664, 16
        %v3666 = vadd.s32 %v3665, %v3663
        %v3667 = vsel %vm2212, %v3589, 2147483647
        %v3668 = vand.u32 %v3667, 65535
        %v3669 = vshra.s32 %v3667, 16
        %v3670 = vcvt.s32.f32 %v3668
        %v3671 = vcvt.s32.f32 %v3669
        %3672 = vmin.xlane.f32.xlu0 %v3671
        %v3673 = vpop.xlane.xlu0 %3672
        %vm3674 = vcmp.eq.f32.partialorder %v3671, %v3673
        %v3675 = vsel %vm3674, %v3670, inf
        %3676 = vmin.xlane.f32.xlu0 %v3675
        %v3677 = vpop.xlane.xlu0 %3676
        %v3678 = vcvt.f32.s32 %v3677
        %v3679 = vcvt.f32.s32 %v3673
        %v3680 = vshll.u32 %v3679, 16
        %v3681 = vadd.s32 %v3680, %v3678
        %v3682 = vsel %vm2212, %v3590, 2147483647
        %v3683 = vand.u32 %v3682, 65535
        %v3684 = vshra.s32 %v3682, 16
        %v3685 = vcvt.s32.f32 %v3683
        %v3686 = vcvt.s32.f32 %v3684
        %3687 = vmin.xlane.f32.xlu0 %v3686
        %v3688 = vpop.xlane.xlu0 %3687
        %vm3689 = vcmp.eq.f32.partialorder %v3686, %v3688
        %v3690 = vsel %vm3689, %v3685, inf
        %3691 = vmin.xlane.f32.xlu0 %v3690
        %v3692 = vpop.xlane.xlu0 %3691
        %v3693 = vcvt.f32.s32 %v3692
        %v3694 = vcvt.f32.s32 %v3688
        %v3695 = vshll.u32 %v3694, 16
        %v3696 = vadd.s32 %v3695, %v3693
        %v3697 = vsel %vm2212, %v3591, 2147483647
        %v3698 = vand.u32 %v3697, 65535
        %v3699 = vshra.s32 %v3697, 16
        %v3700 = vcvt.s32.f32 %v3698
        %v3701 = vcvt.s32.f32 %v3699
        %3702 = vmin.xlane.f32.xlu0 %v3701
        %v3703 = vpop.xlane.xlu0 %3702
        %vm3704 = vcmp.eq.f32.partialorder %v3701, %v3703
        %v3705 = vsel %vm3704, %v3700, inf
        %3706 = vmin.xlane.f32.xlu0 %v3705
        %v3707 = vpop.xlane.xlu0 %3706
        %v3708 = vcvt.f32.s32 %v3707
        %v3709 = vcvt.f32.s32 %v3703
        %v3710 = vshll.u32 %v3709, 16
        %v3711 = vadd.s32 %v3710, %v3708
        %vm3712 = vcmp.eq.s32.totalorder %v1787, %v3606
        %vm3713 = vcmp.eq.s32.totalorder %v1787, %v3621
        %vm3714 = vcmp.eq.s32.totalorder %v1787, %v3636
        %vm3715 = vcmp.eq.s32.totalorder %v1787, %v3651
        %vm3716 = vcmp.eq.s32.totalorder %v1787, %v3666
        %vm3717 = vcmp.eq.s32.totalorder %v1787, %v3681
        %vm3718 = vcmp.eq.s32.totalorder %v1787, %v3696
        %vm3719 = vcmp.eq.s32.totalorder %v1787, %v3711
        %v3720 = vsel %vm3712, -1e+30, %v3465
        %v3721 = vsel %vm3713, -1e+30, %v3466
        %v3722 = vsel %vm3714, -1e+30, %v3467
        %v3723 = vsel %vm3715, -1e+30, %v3468
        %v3724 = vsel %vm3716, -1e+30, %v3469
        %v3725 = vsel %vm3717, -1e+30, %v3470
        %v3726 = vsel %vm3718, -1e+30, %v3471
        %v3727 = vsel %vm3719, -1e+30, %v3472
        %v3728 = vsel %vm2212, %v3720, -inf
        %3729 = vmax.xlane.f32.xlu0 %v3728
        %v3730 = vpop.xlane.xlu0 %3729
        %v3731 = vsel %vm2212, %v3721, -inf
        %3732 = vmax.xlane.f32.xlu0 %v3731
        %v3733 = vpop.xlane.xlu0 %3732
        %v3734 = vsel %vm2212, %v3722, -inf
        %3735 = vmax.xlane.f32.xlu0 %v3734
        %v3736 = vpop.xlane.xlu0 %3735
        %v3737 = vsel %vm2212, %v3723, -inf
        %3738 = vmax.xlane.f32.xlu0 %v3737
        %v3739 = vpop.xlane.xlu0 %3738
        %v3740 = vsel %vm2212, %v3724, -inf
        %3741 = vmax.xlane.f32.xlu0 %v3740
        %v3742 = vpop.xlane.xlu0 %3741
        %v3743 = vsel %vm2212, %v3725, -inf
        %3744 = vmax.xlane.f32.xlu0 %v3743
        %v3745 = vpop.xlane.xlu0 %3744
        %v3746 = vsel %vm2212, %v3726, -inf
        %3747 = vmax.xlane.f32.xlu0 %v3746
        %v3748 = vpop.xlane.xlu0 %3747
        %v3749 = vsel %vm2212, %v3727, -inf
        %3750 = vmax.xlane.f32.xlu0 %v3749
        %v3751 = vpop.xlane.xlu0 %3750
        %v3752 = vadd.f32 %v3497, %v3730
        %v3753 = vadd.f32 %v3498, %v3733
        %v3754 = vadd.f32 %v3499, %v3736
        %v3755 = vadd.f32 %v3500, %v3739
        %v3756 = vadd.f32 %v3501, %v3742
        %v3757 = vadd.f32 %v3502, %v3745
        %v3758 = vadd.f32 %v3503, %v3748
        %v3759 = vadd.f32 %v3504, %v3751
        %v3760 = vsub.f32 %v3752, 1.0
        %v3761 = vsub.f32 %v3753, 1.0
        %v3762 = vsub.f32 %v3754, 1.0
        %v3763 = vsub.f32 %v3755, 1.0
        %v3764 = vsub.f32 %v3756, 1.0
        %v3765 = vsub.f32 %v3757, 1.0
        %v3766 = vsub.f32 %v3758, 1.0
        %v3767 = vsub.f32 %v3759, 1.0
        %v3768 = vrcp.pop 7.0
        %v3769 = vmul.f32 7.0, %v3768
        %v3770 = vsub.f32 1.0, %v3769
        %v3771 = vmul.f32 %v3768, %v3770
        %v3772 = vadd.f32 %v3768, %v3771
        %vm3773 = vweird.f32 %v3768
        %v3774 = vsel %vm3773, %v3768, %v3772
        %v3775 = vmul.f32 %v3760, %v3774
        %v3776 = vmul.f32 %v3761, %v3774
        %v3777 = vmul.f32 %v3762, %v3774
        %v3778 = vmul.f32 %v3763, %v3774
        %v3779 = vmul.f32 %v3764, %v3774
        %v3780 = vmul.f32 %v3765, %v3774
        %v3781 = vmul.f32 %v3766, %v3774
        %v3782 = vmul.f32 %v3767, %v3774
        %v3783 = vsub.f32 %v3730, %v3775
        %v3784 = vsub.f32 %v3733, %v3776
        %v3785 = vsub.f32 %v3736, %v3777
        %v3786 = vsub.f32 %v3739, %v3778
        %v3787 = vsub.f32 %v3742, %v3779
        %v3788 = vsub.f32 %v3745, %v3780
        %v3789 = vsub.f32 %v3748, %v3781
        %v3790 = vsub.f32 %v3751, %v3782
        %vm3791 = vcmp.gt.f32.partialorder %v3783, 0.0
        %vm3792 = vcmp.gt.f32.partialorder %v3784, 0.0
        %vm3793 = vcmp.gt.f32.partialorder %v3785, 0.0
        %vm3794 = vcmp.gt.f32.partialorder %v3786, 0.0
        %vm3795 = vcmp.gt.f32.partialorder %v3787, 0.0
        %vm3796 = vcmp.gt.f32.partialorder %v3788, 0.0
        %vm3797 = vcmp.gt.f32.partialorder %v3789, 0.0
        %vm3798 = vcmp.gt.f32.partialorder %v3790, 0.0
        %v3799 = vsel %vm3791, 1, 0
        %v3800 = vsel %vm3792, 1, 0
        %v3801 = vsel %vm3793, 1, 0
        %v3802 = vsel %vm3794, 1, 0
        %v3803 = vsel %vm3795, 1, 0
        %v3804 = vsel %vm3796, 1, 0
        %v3805 = vsel %vm3797, 1, 0
        %v3806 = vsel %vm3798, 1, 0
        %v3807 = vcvt.s32.f32 %v3799
        %v3808 = vcvt.s32.f32 %v3800
        %v3809 = vcvt.s32.f32 %v3801
        %v3810 = vcvt.s32.f32 %v3802
        %v3811 = vcvt.s32.f32 %v3803
        %v3812 = vcvt.s32.f32 %v3804
        %v3813 = vcvt.s32.f32 %v3805
        %v3814 = vcvt.s32.f32 %v3806
        %v3815 = vadd.f32 %v3560, %v3807
        %v3816 = vadd.f32 %v3561, %v3808
        %v3817 = vadd.f32 %v3562, %v3809
        %v3818 = vadd.f32 %v3563, %v3810
        %v3819 = vadd.f32 %v3564, %v3811
        %v3820 = vadd.f32 %v3565, %v3812
        %v3821 = vadd.f32 %v3566, %v3813
        %v3822 = vadd.f32 %v3567, %v3814
        %v3823 = vsel %vm3791, %v3752, %v3568
        %v3824 = vsel %vm3792, %v3753, %v3569
        %v3825 = vsel %vm3793, %v3754, %v3570
        %v3826 = vsel %vm3794, %v3755, %v3571
        %v3827 = vsel %vm3795, %v3756, %v3572
        %v3828 = vsel %vm3796, %v3757, %v3573
        %v3829 = vsel %vm3797, %v3758, %v3574
        %v3830 = vsel %vm3798, %v3759, %v3575
        %vm3831 = vcmp.eq.f32.partialorder %v3720, %v3730
        %vm3832 = vcmp.eq.f32.partialorder %v3721, %v3733
        %vm3833 = vcmp.eq.f32.partialorder %v3722, %v3736
        %vm3834 = vcmp.eq.f32.partialorder %v3723, %v3739
        %vm3835 = vcmp.eq.f32.partialorder %v3724, %v3742
        %vm3836 = vcmp.eq.f32.partialorder %v3725, %v3745
        %vm3837 = vcmp.eq.f32.partialorder %v3726, %v3748
        %vm3838 = vcmp.eq.f32.partialorder %v3727, %v3751
        %v3839 = vsel %vm3831, %v1787, 8
        %v3840 = vsel %vm3832, %v1787, 8
        %v3841 = vsel %vm3833, %v1787, 8
        %v3842 = vsel %vm3834, %v1787, 8
        %v3843 = vsel %vm3835, %v1787, 8
        %v3844 = vsel %vm3836, %v1787, 8
        %v3845 = vsel %vm3837, %v1787, 8
        %v3846 = vsel %vm3838, %v1787, 8
        %v3847 = vsel %vm2212, %v3839, 2147483647
        %v3848 = vand.u32 %v3847, 65535
        %v3849 = vshra.s32 %v3847, 16
        %v3850 = vcvt.s32.f32 %v3848
        %v3851 = vcvt.s32.f32 %v3849
        %3852 = vmin.xlane.f32.xlu0 %v3851
        %v3853 = vpop.xlane.xlu0 %3852
        %vm3854 = vcmp.eq.f32.partialorder %v3851, %v3853
        %v3855 = vsel %vm3854, %v3850, inf
        %3856 = vmin.xlane.f32.xlu0 %v3855
        %v3857 = vpop.xlane.xlu0 %3856
        %v3858 = vcvt.f32.s32 %v3857
        %v3859 = vcvt.f32.s32 %v3853
        %v3860 = vshll.u32 %v3859, 16
        %v3861 = vadd.s32 %v3860, %v3858
        %v3862 = vsel %vm2212, %v3840, 2147483647
        %v3863 = vand.u32 %v3862, 65535
        %v3864 = vshra.s32 %v3862, 16
        %v3865 = vcvt.s32.f32 %v3863
        %v3866 = vcvt.s32.f32 %v3864
        %3867 = vmin.xlane.f32.xlu0 %v3866
        %v3868 = vpop.xlane.xlu0 %3867
        %vm3869 = vcmp.eq.f32.partialorder %v3866, %v3868
        %v3870 = vsel %vm3869, %v3865, inf
        %3871 = vmin.xlane.f32.xlu0 %v3870
        %v3872 = vpop.xlane.xlu0 %3871
        %v3873 = vcvt.f32.s32 %v3872
        %v3874 = vcvt.f32.s32 %v3868
        %v3875 = vshll.u32 %v3874, 16
        %v3876 = vadd.s32 %v3875, %v3873
        %v3877 = vsel %vm2212, %v3841, 2147483647
        %v3878 = vand.u32 %v3877, 65535
        %v3879 = vshra.s32 %v3877, 16
        %v3880 = vcvt.s32.f32 %v3878
        %v3881 = vcvt.s32.f32 %v3879
        %3882 = vmin.xlane.f32.xlu0 %v3881
        %v3883 = vpop.xlane.xlu0 %3882
        %vm3884 = vcmp.eq.f32.partialorder %v3881, %v3883
        %v3885 = vsel %vm3884, %v3880, inf
        %3886 = vmin.xlane.f32.xlu0 %v3885
        %v3887 = vpop.xlane.xlu0 %3886
        %v3888 = vcvt.f32.s32 %v3887
        %v3889 = vcvt.f32.s32 %v3883
        %v3890 = vshll.u32 %v3889, 16
        %v3891 = vadd.s32 %v3890, %v3888
        %v3892 = vsel %vm2212, %v3842, 2147483647
        %v3893 = vand.u32 %v3892, 65535
        %v3894 = vshra.s32 %v3892, 16
        %v3895 = vcvt.s32.f32 %v3893
        %v3896 = vcvt.s32.f32 %v3894
        %3897 = vmin.xlane.f32.xlu0 %v3896
        %v3898 = vpop.xlane.xlu0 %3897
        %vm3899 = vcmp.eq.f32.partialorder %v3896, %v3898
        %v3900 = vsel %vm3899, %v3895, inf
        %3901 = vmin.xlane.f32.xlu0 %v3900
        %v3902 = vpop.xlane.xlu0 %3901
        %v3903 = vcvt.f32.s32 %v3902
        %v3904 = vcvt.f32.s32 %v3898
        %v3905 = vshll.u32 %v3904, 16
        %v3906 = vadd.s32 %v3905, %v3903
        %v3907 = vsel %vm2212, %v3843, 2147483647
        %v3908 = vand.u32 %v3907, 65535
        %v3909 = vshra.s32 %v3907, 16
        %v3910 = vcvt.s32.f32 %v3908
        %v3911 = vcvt.s32.f32 %v3909
        %3912 = vmin.xlane.f32.xlu0 %v3911
        %v3913 = vpop.xlane.xlu0 %3912
        %vm3914 = vcmp.eq.f32.partialorder %v3911, %v3913
        %v3915 = vsel %vm3914, %v3910, inf
        %3916 = vmin.xlane.f32.xlu0 %v3915
        %v3917 = vpop.xlane.xlu0 %3916
        %v3918 = vcvt.f32.s32 %v3917
        %v3919 = vcvt.f32.s32 %v3913
        %v3920 = vshll.u32 %v3919, 16
        %v3921 = vadd.s32 %v3920, %v3918
        %v3922 = vsel %vm2212, %v3844, 2147483647
        %v3923 = vand.u32 %v3922, 65535
        %v3924 = vshra.s32 %v3922, 16
        %v3925 = vcvt.s32.f32 %v3923
        %v3926 = vcvt.s32.f32 %v3924
        %3927 = vmin.xlane.f32.xlu0 %v3926
        %v3928 = vpop.xlane.xlu0 %3927
        %vm3929 = vcmp.eq.f32.partialorder %v3926, %v3928
        %v3930 = vsel %vm3929, %v3925, inf
        %3931 = vmin.xlane.f32.xlu0 %v3930
        %v3932 = vpop.xlane.xlu0 %3931
        %v3933 = vcvt.f32.s32 %v3932
        %v3934 = vcvt.f32.s32 %v3928
        %v3935 = vshll.u32 %v3934, 16
        %v3936 = vadd.s32 %v3935, %v3933
        %v3937 = vsel %vm2212, %v3845, 2147483647
        %v3938 = vand.u32 %v3937, 65535
        %v3939 = vshra.s32 %v3937, 16
        %v3940 = vcvt.s32.f32 %v3938
        %v3941 = vcvt.s32.f32 %v3939
        %3942 = vmin.xlane.f32.xlu0 %v3941
        %v3943 = vpop.xlane.xlu0 %3942
        %vm3944 = vcmp.eq.f32.partialorder %v3941, %v3943
        %v3945 = vsel %vm3944, %v3940, inf
        %3946 = vmin.xlane.f32.xlu0 %v3945
        %v3947 = vpop.xlane.xlu0 %3946
        %v3948 = vcvt.f32.s32 %v3947
        %v3949 = vcvt.f32.s32 %v3943
        %v3950 = vshll.u32 %v3949, 16
        %v3951 = vadd.s32 %v3950, %v3948
        %v3952 = vsel %vm2212, %v3846, 2147483647
        %v3953 = vand.u32 %v3952, 65535
        %v3954 = vshra.s32 %v3952, 16
        %v3955 = vcvt.s32.f32 %v3953
        %v3956 = vcvt.s32.f32 %v3954
        %3957 = vmin.xlane.f32.xlu0 %v3956
        %v3958 = vpop.xlane.xlu0 %3957
        %vm3959 = vcmp.eq.f32.partialorder %v3956, %v3958
        %v3960 = vsel %vm3959, %v3955, inf
        %3961 = vmin.xlane.f32.xlu0 %v3960
        %v3962 = vpop.xlane.xlu0 %3961
        %v3963 = vcvt.f32.s32 %v3962
        %v3964 = vcvt.f32.s32 %v3958
        %v3965 = vshll.u32 %v3964, 16
        %v3966 = vadd.s32 %v3965, %v3963
        %vm3967 = vcmp.eq.s32.totalorder %v1787, %v3861
        %vm3968 = vcmp.eq.s32.totalorder %v1787, %v3876
        %vm3969 = vcmp.eq.s32.totalorder %v1787, %v3891
        %vm3970 = vcmp.eq.s32.totalorder %v1787, %v3906
        %vm3971 = vcmp.eq.s32.totalorder %v1787, %v3921
        %vm3972 = vcmp.eq.s32.totalorder %v1787, %v3936
        %vm3973 = vcmp.eq.s32.totalorder %v1787, %v3951
        %vm3974 = vcmp.eq.s32.totalorder %v1787, %v3966
        %v3975 = vsel %vm3967, -1e+30, %v3720
        %v3976 = vsel %vm3968, -1e+30, %v3721
        %v3977 = vsel %vm3969, -1e+30, %v3722
        %v3978 = vsel %vm3970, -1e+30, %v3723
        %v3979 = vsel %vm3971, -1e+30, %v3724
        %v3980 = vsel %vm3972, -1e+30, %v3725
        %v3981 = vsel %vm3973, -1e+30, %v3726
        %v3982 = vsel %vm3974, -1e+30, %v3727
        %v3983 = vsel %vm2212, %v3975, -inf
        %3984 = vmax.xlane.f32.xlu0 %v3983
        %v3985 = vpop.xlane.xlu0 %3984
        %v3986 = vsel %vm2212, %v3976, -inf
        %3987 = vmax.xlane.f32.xlu0 %v3986
        %v3988 = vpop.xlane.xlu0 %3987
        %v3989 = vsel %vm2212, %v3977, -inf
        %3990 = vmax.xlane.f32.xlu0 %v3989
        %v3991 = vpop.xlane.xlu0 %3990
        %v3992 = vsel %vm2212, %v3978, -inf
        %3993 = vmax.xlane.f32.xlu0 %v3992
        %v3994 = vpop.xlane.xlu0 %3993
        %v3995 = vsel %vm2212, %v3979, -inf
        %3996 = vmax.xlane.f32.xlu0 %v3995
        %v3997 = vpop.xlane.xlu0 %3996
        %v3998 = vsel %vm2212, %v3980, -inf
        %3999 = vmax.xlane.f32.xlu0 %v3998
        %v4000 = vpop.xlane.xlu0 %3999
        %v4001 = vsel %vm2212, %v3981, -inf
        %4002 = vmax.xlane.f32.xlu0 %v4001
        %v4003 = vpop.xlane.xlu0 %4002
        %v4004 = vsel %vm2212, %v3982, -inf
        %4005 = vmax.xlane.f32.xlu0 %v4004
        %v4006 = vpop.xlane.xlu0 %4005
        %v4007 = vadd.f32 %v3752, %v3985
        %v4008 = vadd.f32 %v3753, %v3988
        %v4009 = vadd.f32 %v3754, %v3991
        %v4010 = vadd.f32 %v3755, %v3994
        %v4011 = vadd.f32 %v3756, %v3997
        %v4012 = vadd.f32 %v3757, %v4000
        %v4013 = vadd.f32 %v3758, %v4003
        %v4014 = vadd.f32 %v3759, %v4006
        %v4015 = vsub.f32 %v4007, 1.0
        %v4016 = vsub.f32 %v4008, 1.0
        %v4017 = vsub.f32 %v4009, 1.0
        %v4018 = vsub.f32 %v4010, 1.0
        %v4019 = vsub.f32 %v4011, 1.0
        %v4020 = vsub.f32 %v4012, 1.0
        %v4021 = vsub.f32 %v4013, 1.0
        %v4022 = vsub.f32 %v4014, 1.0
        %v4023 = vrcp.pop 8.0
        %v4024 = vmul.f32 8.0, %v4023
        %v4025 = vsub.f32 1.0, %v4024
        %v4026 = vmul.f32 %v4023, %v4025
        %v4027 = vadd.f32 %v4023, %v4026
        %vm4028 = vweird.f32 %v4023
        %v4029 = vsel %vm4028, %v4023, %v4027
        %v4030 = vmul.f32 %v4015, %v4029
        %v4031 = vmul.f32 %v4016, %v4029
        %v4032 = vmul.f32 %v4017, %v4029
        %v4033 = vmul.f32 %v4018, %v4029
        %v4034 = vmul.f32 %v4019, %v4029
        %v4035 = vmul.f32 %v4020, %v4029
        %v4036 = vmul.f32 %v4021, %v4029
        %v4037 = vmul.f32 %v4022, %v4029
        %v4038 = vsub.f32 %v3985, %v4030
        %v4039 = vsub.f32 %v3988, %v4031
        %v4040 = vsub.f32 %v3991, %v4032
        %v4041 = vsub.f32 %v3994, %v4033
        %v4042 = vsub.f32 %v3997, %v4034
        %v4043 = vsub.f32 %v4000, %v4035
        %v4044 = vsub.f32 %v4003, %v4036
        %v4045 = vsub.f32 %v4006, %v4037
        %vm4046 = vcmp.gt.f32.partialorder %v4038, 0.0
        %vm4047 = vcmp.gt.f32.partialorder %v4039, 0.0
        %vm4048 = vcmp.gt.f32.partialorder %v4040, 0.0
        %vm4049 = vcmp.gt.f32.partialorder %v4041, 0.0
        %vm4050 = vcmp.gt.f32.partialorder %v4042, 0.0
        %vm4051 = vcmp.gt.f32.partialorder %v4043, 0.0
        %vm4052 = vcmp.gt.f32.partialorder %v4044, 0.0
        %vm4053 = vcmp.gt.f32.partialorder %v4045, 0.0
        %v4054 = vsel %vm4046, 1, 0
        %v4055 = vsel %vm4047, 1, 0
        %v4056 = vsel %vm4048, 1, 0
        %v4057 = vsel %vm4049, 1, 0
        %v4058 = vsel %vm4050, 1, 0
        %v4059 = vsel %vm4051, 1, 0
        %v4060 = vsel %vm4052, 1, 0
        %v4061 = vsel %vm4053, 1, 0
        %v4062 = vcvt.s32.f32 %v4054
        %v4063 = vcvt.s32.f32 %v4055
        %v4064 = vcvt.s32.f32 %v4056
        %v4065 = vcvt.s32.f32 %v4057
        %v4066 = vcvt.s32.f32 %v4058
        %v4067 = vcvt.s32.f32 %v4059
        %v4068 = vcvt.s32.f32 %v4060
        %v4069 = vcvt.s32.f32 %v4061
        %v4070 = vadd.f32 %v3815, %v4062
        %v4071 = vadd.f32 %v3816, %v4063
        %v4072 = vadd.f32 %v3817, %v4064
        %v4073 = vadd.f32 %v3818, %v4065
        %v4074 = vadd.f32 %v3819, %v4066
        %v4075 = vadd.f32 %v3820, %v4067
        %v4076 = vadd.f32 %v3821, %v4068
        %v4077 = vadd.f32 %v3822, %v4069
        %v4078 = vsel %vm4046, %v4007, %v3823
        %v4079 = vsel %vm4047, %v4008, %v3824
        %v4080 = vsel %vm4048, %v4009, %v3825
        %v4081 = vsel %vm4049, %v4010, %v3826
        %v4082 = vsel %vm4050, %v4011, %v3827
        %v4083 = vsel %vm4051, %v4012, %v3828
        %v4084 = vsel %vm4052, %v4013, %v3829
        %v4085 = vsel %vm4053, %v4014, %v3830
        %v4086 = vsub.f32 %v4078, 2.0
        %v4087 = vsub.f32 %v4079, 2.0
        %v4088 = vsub.f32 %v4080, 2.0
        %v4089 = vsub.f32 %v4081, 2.0
        %v4090 = vsub.f32 %v4082, 2.0
        %v4091 = vsub.f32 %v4083, 2.0
        %v4092 = vsub.f32 %v4084, 2.0
        %v4093 = vsub.f32 %v4085, 2.0
        %v4094 = vrcp.pop %v4070
        %v4095 = vmul.f32 %v4070, %v4094
        %v4096 = vsub.f32 1.0, %v4095
        %v4097 = vmul.f32 %v4094, %v4096
        %v4098 = vadd.f32 %v4094, %v4097
        %vm4099 = vweird.f32 %v4070
        %vm4100 = vweird.f32 %v4094
        %vm4101 = vmor %vm4099, %vm4100
        %v4102 = vsel %vm4101, %v4094, %v4098
        %v4103 = vand.u32 2147483647, %v4070
        %vm4104 = vcmp.eq.f32.partialorder %v4103, 8.507059e+37
        %v4105 = vand.u32 %v4070, 2147483648
        %v4106 = vor.u32 1.1754944e-38, %v4105
        %v4107 = vsel %vm4104, %v4106, %v4102
        %v4108 = vmul.f32 %v4086, %v4107
        %v4109 = vrcp.pop %v4071
        %v4110 = vmul.f32 %v4071, %v4109
        %v4111 = vsub.f32 1.0, %v4110
        %v4112 = vmul.f32 %v4109, %v4111
        %v4113 = vadd.f32 %v4109, %v4112
        %vm4114 = vweird.f32 %v4071
        %vm4115 = vweird.f32 %v4109
        %vm4116 = vmor %vm4114, %vm4115
        %v4117 = vsel %vm4116, %v4109, %v4113
        %v4118 = vand.u32 2147483647, %v4071
        %vm4119 = vcmp.eq.f32.partialorder %v4118, 8.507059e+37
        %v4120 = vand.u32 %v4071, 2147483648
        %v4121 = vor.u32 1.1754944e-38, %v4120
        %v4122 = vsel %vm4119, %v4121, %v4117
        %v4123 = vmul.f32 %v4087, %v4122
        %v4124 = vrcp.pop %v4072
        %v4125 = vmul.f32 %v4072, %v4124
        %v4126 = vsub.f32 1.0, %v4125
        %v4127 = vmul.f32 %v4124, %v4126
        %v4128 = vadd.f32 %v4124, %v4127
        %vm4129 = vweird.f32 %v4072
        %vm4130 = vweird.f32 %v4124
        %vm4131 = vmor %vm4129, %vm4130
        %v4132 = vsel %vm4131, %v4124, %v4128
        %v4133 = vand.u32 2147483647, %v4072
        %vm4134 = vcmp.eq.f32.partialorder %v4133, 8.507059e+37
        %v4135 = vand.u32 %v4072, 2147483648
        %v4136 = vor.u32 1.1754944e-38, %v4135
        %v4137 = vsel %vm4134, %v4136, %v4132
        %v4138 = vmul.f32 %v4088, %v4137
        %v4139 = vrcp.pop %v4073
        %v4140 = vmul.f32 %v4073, %v4139
        %v4141 = vsub.f32 1.0, %v4140
        %v4142 = vmul.f32 %v4139, %v4141
        %v4143 = vadd.f32 %v4139, %v4142
        %vm4144 = vweird.f32 %v4073
        %vm4145 = vweird.f32 %v4139
        %vm4146 = vmor %vm4144, %vm4145
        %v4147 = vsel %vm4146, %v4139, %v4143
        %v4148 = vand.u32 2147483647, %v4073
        %vm4149 = vcmp.eq.f32.partialorder %v4148, 8.507059e+37
        %v4150 = vand.u32 %v4073, 2147483648
        %v4151 = vor.u32 1.1754944e-38, %v4150
        %v4152 = vsel %vm4149, %v4151, %v4147
        %v4153 = vmul.f32 %v4089, %v4152
        %v4154 = vrcp.pop %v4074
        %v4155 = vmul.f32 %v4074, %v4154
        %v4156 = vsub.f32 1.0, %v4155
        %v4157 = vmul.f32 %v4154, %v4156
        %v4158 = vadd.f32 %v4154, %v4157
        %vm4159 = vweird.f32 %v4074
        %vm4160 = vweird.f32 %v4154
        %vm4161 = vmor %vm4159, %vm4160
        %v4162 = vsel %vm4161, %v4154, %v4158
        %v4163 = vand.u32 2147483647, %v4074
        %vm4164 = vcmp.eq.f32.partialorder %v4163, 8.507059e+37
        %v4165 = vand.u32 %v4074, 2147483648
        %v4166 = vor.u32 1.1754944e-38, %v4165
        %v4167 = vsel %vm4164, %v4166, %v4162
        %v4168 = vmul.f32 %v4090, %v4167
        %v4169 = vrcp.pop %v4075
        %v4170 = vmul.f32 %v4075, %v4169
        %v4171 = vsub.f32 1.0, %v4170
        %v4172 = vmul.f32 %v4169, %v4171
        %v4173 = vadd.f32 %v4169, %v4172
        %vm4174 = vweird.f32 %v4075
        %vm4175 = vweird.f32 %v4169
        %vm4176 = vmor %vm4174, %vm4175
        %v4177 = vsel %vm4176, %v4169, %v4173
        %v4178 = vand.u32 2147483647, %v4075
        %vm4179 = vcmp.eq.f32.partialorder %v4178, 8.507059e+37
        %v4180 = vand.u32 %v4075, 2147483648
        %v4181 = vor.u32 1.1754944e-38, %v4180
        %v4182 = vsel %vm4179, %v4181, %v4177
        %v4183 = vmul.f32 %v4091, %v4182
        %v4184 = vrcp.pop %v4076
        %v4185 = vmul.f32 %v4076, %v4184
        %v4186 = vsub.f32 1.0, %v4185
        %v4187 = vmul.f32 %v4184, %v4186
        %v4188 = vadd.f32 %v4184, %v4187
        %vm4189 = vweird.f32 %v4076
        %vm4190 = vweird.f32 %v4184
        %vm4191 = vmor %vm4189, %vm4190
        %v4192 = vsel %vm4191, %v4184, %v4188
        %v4193 = vand.u32 2147483647, %v4076
        %vm4194 = vcmp.eq.f32.partialorder %v4193, 8.507059e+37
        %v4195 = vand.u32 %v4076, 2147483648
        %v4196 = vor.u32 1.1754944e-38, %v4195
        %v4197 = vsel %vm4194, %v4196, %v4192
        %v4198 = vmul.f32 %v4092, %v4197
        %v4199 = vrcp.pop %v4077
        %v4200 = vmul.f32 %v4077, %v4199
        %v4201 = vsub.f32 1.0, %v4200
        %v4202 = vmul.f32 %v4199, %v4201
        %v4203 = vadd.f32 %v4199, %v4202
        %vm4204 = vweird.f32 %v4077
        %vm4205 = vweird.f32 %v4199
        %vm4206 = vmor %vm4204, %vm4205
        %v4207 = vsel %vm4206, %v4199, %v4203
        %v4208 = vand.u32 2147483647, %v4077
        %vm4209 = vcmp.eq.f32.partialorder %v4208, 8.507059e+37
        %v4210 = vand.u32 %v4077, 2147483648
        %v4211 = vor.u32 1.1754944e-38, %v4210
        %v4212 = vsel %vm4209, %v4211, %v4207
        %v4213 = vmul.f32 %v4093, %v4212
        %v4214 = vsub.f32 %v2204, %v4108
        %v4215 = vsub.f32 %v2205, %v4123
        %v4216 = vsub.f32 %v2206, %v4138
        %v4217 = vsub.f32 %v2207, %v4153
        %v4218 = vsub.f32 %v2208, %v4168
        %v4219 = vsub.f32 %v2209, %v4183
        %v4220 = vsub.f32 %v2210, %v4198
        %v4221 = vsub.f32 %v2211, %v4213
        %v4222 = vmax.f32 %v4214, 0.0
        %v4223 = vmax.f32 %v4215, 0.0
        %v4224 = vmax.f32 %v4216, 0.0
        %v4225 = vmax.f32 %v4217, 0.0
        %v4226 = vmax.f32 %v4218, 0.0
        %v4227 = vmax.f32 %v4219, 0.0
        %v4228 = vmax.f32 %v4220, 0.0
        %v4229 = vmax.f32 %v4221, 0.0
        %v4230 = vsel %vm2212, %v4222, 0.0
        %4231 = vadd.xlane.f32.xlu0 %v4230
        %v4232 = vpop.xlane.xlu0 %4231
        %v4233 = vsel %vm2212, %v4223, 0.0
        %4234 = vadd.xlane.f32.xlu0 %v4233
        %v4235 = vpop.xlane.xlu0 %4234
        %v4236 = vsel %vm2212, %v4224, 0.0
        %4237 = vadd.xlane.f32.xlu0 %v4236
        %v4238 = vpop.xlane.xlu0 %4237
        %v4239 = vsel %vm2212, %v4225, 0.0
        %4240 = vadd.xlane.f32.xlu0 %v4239
        %v4241 = vpop.xlane.xlu0 %4240
        %v4242 = vsel %vm2212, %v4226, 0.0
        %4243 = vadd.xlane.f32.xlu0 %v4242
        %v4244 = vpop.xlane.xlu0 %4243
        %v4245 = vsel %vm2212, %v4227, 0.0
        %4246 = vadd.xlane.f32.xlu0 %v4245
        %v4247 = vpop.xlane.xlu0 %4246
        %v4248 = vsel %vm2212, %v4228, 0.0
        %4249 = vadd.xlane.f32.xlu0 %v4248
        %v4250 = vpop.xlane.xlu0 %4249
        %v4251 = vsel %vm2212, %v4229, 0.0
        %4252 = vadd.xlane.f32.xlu0 %v4251
        %v4253 = vpop.xlane.xlu0 %4252
        %v4254 = vmax.f32 %v4232, 1e-12
        %v4255 = vmax.f32 %v4235, 1e-12
        %v4256 = vmax.f32 %v4238, 1e-12
        %v4257 = vmax.f32 %v4241, 1e-12
        %v4258 = vmax.f32 %v4244, 1e-12
        %v4259 = vmax.f32 %v4247, 1e-12
        %v4260 = vmax.f32 %v4250, 1e-12
        %v4261 = vmax.f32 %v4253, 1e-12
        %v4262 = vrcp.pop %v4254
        %v4263 = vmul.f32 %v4254, %v4262
        %v4264 = vsub.f32 1.0, %v4263
        %v4265 = vmul.f32 %v4262, %v4264
        %v4266 = vadd.f32 %v4262, %v4265
        %vm4267 = vweird.f32 %v4254
        %vm4268 = vweird.f32 %v4262
        %vm4269 = vmor %vm4267, %vm4268
        %v4270 = vsel %vm4269, %v4262, %v4266
        %v4271 = vand.u32 2147483647, %v4254
        %vm4272 = vcmp.eq.f32.partialorder %v4271, 8.507059e+37
        %v4273 = vand.u32 %v4254, 2147483648
        %v4274 = vor.u32 1.1754944e-38, %v4273
        %v4275 = vsel %vm4272, %v4274, %v4270
        %v4276 = vmul.f32 %v4222, %v4275
        %v4277 = vrcp.pop %v4255
        %v4278 = vmul.f32 %v4255, %v4277
        %v4279 = vsub.f32 1.0, %v4278
        %v4280 = vmul.f32 %v4277, %v4279
        %v4281 = vadd.f32 %v4277, %v4280
        %vm4282 = vweird.f32 %v4255
        %vm4283 = vweird.f32 %v4277
        %vm4284 = vmor %vm4282, %vm4283
        %v4285 = vsel %vm4284, %v4277, %v4281
        %v4286 = vand.u32 2147483647, %v4255
        %vm4287 = vcmp.eq.f32.partialorder %v4286, 8.507059e+37
        %v4288 = vand.u32 %v4255, 2147483648
        %v4289 = vor.u32 1.1754944e-38, %v4288
        %v4290 = vsel %vm4287, %v4289, %v4285
        %v4291 = vmul.f32 %v4223, %v4290
        %v4292 = vrcp.pop %v4256
        %v4293 = vmul.f32 %v4256, %v4292
        %v4294 = vsub.f32 1.0, %v4293
        %v4295 = vmul.f32 %v4292, %v4294
        %v4296 = vadd.f32 %v4292, %v4295
        %vm4297 = vweird.f32 %v4256
        %vm4298 = vweird.f32 %v4292
        %vm4299 = vmor %vm4297, %vm4298
        %v4300 = vsel %vm4299, %v4292, %v4296
        %v4301 = vand.u32 2147483647, %v4256
        %vm4302 = vcmp.eq.f32.partialorder %v4301, 8.507059e+37
        %v4303 = vand.u32 %v4256, 2147483648
        %v4304 = vor.u32 1.1754944e-38, %v4303
        %v4305 = vsel %vm4302, %v4304, %v4300
        %v4306 = vmul.f32 %v4224, %v4305
        %v4307 = vrcp.pop %v4257
        %v4308 = vmul.f32 %v4257, %v4307
        %v4309 = vsub.f32 1.0, %v4308
        %v4310 = vmul.f32 %v4307, %v4309
        %v4311 = vadd.f32 %v4307, %v4310
        %vm4312 = vweird.f32 %v4257
        %vm4313 = vweird.f32 %v4307
        %vm4314 = vmor %vm4312, %vm4313
        %v4315 = vsel %vm4314, %v4307, %v4311
        %v4316 = vand.u32 2147483647, %v4257
        %vm4317 = vcmp.eq.f32.partialorder %v4316, 8.507059e+37
        %v4318 = vand.u32 %v4257, 2147483648
        %v4319 = vor.u32 1.1754944e-38, %v4318
        %v4320 = vsel %vm4317, %v4319, %v4315
        %v4321 = vmul.f32 %v4225, %v4320
        %v4322 = vrcp.pop %v4258
        %v4323 = vmul.f32 %v4258, %v4322
        %v4324 = vsub.f32 1.0, %v4323
        %v4325 = vmul.f32 %v4322, %v4324
        %v4326 = vadd.f32 %v4322, %v4325
        %vm4327 = vweird.f32 %v4258
        %vm4328 = vweird.f32 %v4322
        %vm4329 = vmor %vm4327, %vm4328
        %v4330 = vsel %vm4329, %v4322, %v4326
        %v4331 = vand.u32 2147483647, %v4258
        %vm4332 = vcmp.eq.f32.partialorder %v4331, 8.507059e+37
        %v4333 = vand.u32 %v4258, 2147483648
        %v4334 = vor.u32 1.1754944e-38, %v4333
        %v4335 = vsel %vm4332, %v4334, %v4330
        %v4336 = vmul.f32 %v4226, %v4335
        %v4337 = vrcp.pop %v4259
        %v4338 = vmul.f32 %v4259, %v4337
        %v4339 = vsub.f32 1.0, %v4338
        %v4340 = vmul.f32 %v4337, %v4339
        %v4341 = vadd.f32 %v4337, %v4340
        %vm4342 = vweird.f32 %v4259
        %vm4343 = vweird.f32 %v4337
        %vm4344 = vmor %vm4342, %vm4343
        %v4345 = vsel %vm4344, %v4337, %v4341
        %v4346 = vand.u32 2147483647, %v4259
        %vm4347 = vcmp.eq.f32.partialorder %v4346, 8.507059e+37
        %v4348 = vand.u32 %v4259, 2147483648
        %v4349 = vor.u32 1.1754944e-38, %v4348
        %v4350 = vsel %vm4347, %v4349, %v4345
        %v4351 = vmul.f32 %v4227, %v4350
        %v4352 = vrcp.pop %v4260
        %v4353 = vmul.f32 %v4260, %v4352
        %v4354 = vsub.f32 1.0, %v4353
        %v4355 = vmul.f32 %v4352, %v4354
        %v4356 = vadd.f32 %v4352, %v4355
        %vm4357 = vweird.f32 %v4260
        %vm4358 = vweird.f32 %v4352
        %vm4359 = vmor %vm4357, %vm4358
        %v4360 = vsel %vm4359, %v4352, %v4356
        %v4361 = vand.u32 2147483647, %v4260
        %vm4362 = vcmp.eq.f32.partialorder %v4361, 8.507059e+37
        %v4363 = vand.u32 %v4260, 2147483648
        %v4364 = vor.u32 1.1754944e-38, %v4363
        %v4365 = vsel %vm4362, %v4364, %v4360
        %v4366 = vmul.f32 %v4228, %v4365
        %v4367 = vrcp.pop %v4261
        %v4368 = vmul.f32 %v4261, %v4367
        %v4369 = vsub.f32 1.0, %v4368
        %v4370 = vmul.f32 %v4367, %v4369
        %v4371 = vadd.f32 %v4367, %v4370
        %vm4372 = vweird.f32 %v4261
        %vm4373 = vweird.f32 %v4367
        %vm4374 = vmor %vm4372, %vm4373
        %v4375 = vsel %vm4374, %v4367, %v4371
        %v4376 = vand.u32 2147483647, %v4261
        %vm4377 = vcmp.eq.f32.partialorder %v4376, 8.507059e+37
        %v4378 = vand.u32 %v4261, 2147483648
        %v4379 = vor.u32 1.1754944e-38, %v4378
        %v4380 = vsel %vm4377, %v4379, %v4375
        %v4381 = vmul.f32 %v4229, %v4380
        %4383 = vset.pattern.permute.xlu0 0
        %4384 = vperm.xlu0 %4383, %v4276
        %v4385 = vpop.permute.xlu0 %4384
        %4388 = vset.pattern.permute.xlu0 0
        %4389 = vperm.xlu0 %4388, %v4291
        %v4390 = vpop.permute.xlu0 %4389
        %4393 = vset.pattern.permute.xlu0 0
        %4394 = vperm.xlu0 %4393, %v4306
        %v4395 = vpop.permute.xlu0 %4394
        %4398 = vset.pattern.permute.xlu0 0
        %4399 = vperm.xlu0 %4398, %v4321
        %v4400 = vpop.permute.xlu0 %4399
        %4403 = vset.pattern.permute.xlu0 0
        %4404 = vperm.xlu0 %4403, %v4336
        %v4405 = vpop.permute.xlu0 %4404
        %4408 = vset.pattern.permute.xlu0 0
        %4409 = vperm.xlu0 %4408, %v4351
        %v4410 = vpop.permute.xlu0 %4409
        %4413 = vset.pattern.permute.xlu0 0
        %4414 = vperm.xlu0 %4413, %v4366
        %v4415 = vpop.permute.xlu0 %4414
        %4418 = vset.pattern.permute.xlu0 0
        %4419 = vperm.xlu0 %4418, %v4381
        %v4420 = vpop.permute.xlu0 %4419
        %v4422 = vmul.f32 %v4385, %v763
        %v4423 = vmul.f32 %v4390, %v763
        %v4424 = vmul.f32 %v4395, %v763
        %v4425 = vmul.f32 %v4400, %v763
        %v4426 = vmul.f32 %v4405, %v763
        %v4427 = vmul.f32 %v4410, %v763
        %v4428 = vmul.f32 %v4415, %v763
        %v4429 = vmul.f32 %v4420, %v763
        %v4430 = vadd.f32 %v4422, 0.0
        %v4431 = vadd.f32 %v4423, 0.0
        %v4432 = vadd.f32 %v4424, 0.0
        %v4433 = vadd.f32 %v4425, 0.0
        %v4434 = vadd.f32 %v4426, 0.0
        %v4435 = vadd.f32 %v4427, 0.0
        %v4436 = vadd.f32 %v4428, 0.0
        %v4437 = vadd.f32 %v4429, 0.0
        %4438 = vset.pattern.permute.xlu0 1
        %4439 = vperm.xlu0 %4438, %v4276
        %v4440 = vpop.permute.xlu0 %4439
        %4442 = vset.pattern.permute.xlu0 1
        %4443 = vperm.xlu0 %4442, %v4291
        %v4444 = vpop.permute.xlu0 %4443
        %4446 = vset.pattern.permute.xlu0 1
        %4447 = vperm.xlu0 %4446, %v4306
        %v4448 = vpop.permute.xlu0 %4447
        %4450 = vset.pattern.permute.xlu0 1
        %4451 = vperm.xlu0 %4450, %v4321
        %v4452 = vpop.permute.xlu0 %4451
        %4454 = vset.pattern.permute.xlu0 1
        %4455 = vperm.xlu0 %4454, %v4336
        %v4456 = vpop.permute.xlu0 %4455
        %4458 = vset.pattern.permute.xlu0 1
        %4459 = vperm.xlu0 %4458, %v4351
        %v4460 = vpop.permute.xlu0 %4459
        %4462 = vset.pattern.permute.xlu0 1
        %4463 = vperm.xlu0 %4462, %v4366
        %v4464 = vpop.permute.xlu0 %4463
        %4466 = vset.pattern.permute.xlu0 1
        %4467 = vperm.xlu0 %4466, %v4381
        %v4468 = vpop.permute.xlu0 %4467
        %v4470 = vmul.f32 %v4440, %v909
        %v4471 = vmul.f32 %v4444, %v909
        %v4472 = vmul.f32 %v4448, %v909
        %v4473 = vmul.f32 %v4452, %v909
        %v4474 = vmul.f32 %v4456, %v909
        %v4475 = vmul.f32 %v4460, %v909
        %v4476 = vmul.f32 %v4464, %v909
        %v4477 = vmul.f32 %v4468, %v909
        %v4478 = vadd.f32 %v4430, %v4470
        %v4479 = vadd.f32 %v4431, %v4471
        %v4480 = vadd.f32 %v4432, %v4472
        %v4481 = vadd.f32 %v4433, %v4473
        %v4482 = vadd.f32 %v4434, %v4474
        %v4483 = vadd.f32 %v4435, %v4475
        %v4484 = vadd.f32 %v4436, %v4476
        %v4485 = vadd.f32 %v4437, %v4477
        %4486 = vset.pattern.permute.xlu0 2
        %4487 = vperm.xlu0 %4486, %v4276
        %v4488 = vpop.permute.xlu0 %4487
        %4490 = vset.pattern.permute.xlu0 2
        %4491 = vperm.xlu0 %4490, %v4291
        %v4492 = vpop.permute.xlu0 %4491
        %4494 = vset.pattern.permute.xlu0 2
        %4495 = vperm.xlu0 %4494, %v4306
        %v4496 = vpop.permute.xlu0 %4495
        %4498 = vset.pattern.permute.xlu0 2
        %4499 = vperm.xlu0 %4498, %v4321
        %v4500 = vpop.permute.xlu0 %4499
        %4502 = vset.pattern.permute.xlu0 2
        %4503 = vperm.xlu0 %4502, %v4336
        %v4504 = vpop.permute.xlu0 %4503
        %4506 = vset.pattern.permute.xlu0 2
        %4507 = vperm.xlu0 %4506, %v4351
        %v4508 = vpop.permute.xlu0 %4507
        %4510 = vset.pattern.permute.xlu0 2
        %4511 = vperm.xlu0 %4510, %v4366
        %v4512 = vpop.permute.xlu0 %4511
        %4514 = vset.pattern.permute.xlu0 2
        %4515 = vperm.xlu0 %4514, %v4381
        %v4516 = vpop.permute.xlu0 %4515
        %v4518 = vmul.f32 %v4488, %v1055
        %v4519 = vmul.f32 %v4492, %v1055
        %v4520 = vmul.f32 %v4496, %v1055
        %v4521 = vmul.f32 %v4500, %v1055
        %v4522 = vmul.f32 %v4504, %v1055
        %v4523 = vmul.f32 %v4508, %v1055
        %v4524 = vmul.f32 %v4512, %v1055
        %v4525 = vmul.f32 %v4516, %v1055
        %v4526 = vadd.f32 %v4478, %v4518
        %v4527 = vadd.f32 %v4479, %v4519
        %v4528 = vadd.f32 %v4480, %v4520
        %v4529 = vadd.f32 %v4481, %v4521
        %v4530 = vadd.f32 %v4482, %v4522
        %v4531 = vadd.f32 %v4483, %v4523
        %v4532 = vadd.f32 %v4484, %v4524
        %v4533 = vadd.f32 %v4485, %v4525
        %4534 = vset.pattern.permute.xlu0 3
        %4535 = vperm.xlu0 %4534, %v4276
        %v4536 = vpop.permute.xlu0 %4535
        %4538 = vset.pattern.permute.xlu0 3
        %4539 = vperm.xlu0 %4538, %v4291
        %v4540 = vpop.permute.xlu0 %4539
        %4542 = vset.pattern.permute.xlu0 3
        %4543 = vperm.xlu0 %4542, %v4306
        %v4544 = vpop.permute.xlu0 %4543
        %4546 = vset.pattern.permute.xlu0 3
        %4547 = vperm.xlu0 %4546, %v4321
        %v4548 = vpop.permute.xlu0 %4547
        %4550 = vset.pattern.permute.xlu0 3
        %4551 = vperm.xlu0 %4550, %v4336
        %v4552 = vpop.permute.xlu0 %4551
        %4554 = vset.pattern.permute.xlu0 3
        %4555 = vperm.xlu0 %4554, %v4351
        %v4556 = vpop.permute.xlu0 %4555
        %4558 = vset.pattern.permute.xlu0 3
        %4559 = vperm.xlu0 %4558, %v4366
        %v4560 = vpop.permute.xlu0 %4559
        %4562 = vset.pattern.permute.xlu0 3
        %4563 = vperm.xlu0 %4562, %v4381
        %v4564 = vpop.permute.xlu0 %4563
        %v4566 = vmul.f32 %v4536, %v1201
        %v4567 = vmul.f32 %v4540, %v1201
        %v4568 = vmul.f32 %v4544, %v1201
        %v4569 = vmul.f32 %v4548, %v1201
        %v4570 = vmul.f32 %v4552, %v1201
        %v4571 = vmul.f32 %v4556, %v1201
        %v4572 = vmul.f32 %v4560, %v1201
        %v4573 = vmul.f32 %v4564, %v1201
        %v4574 = vadd.f32 %v4526, %v4566
        %v4575 = vadd.f32 %v4527, %v4567
        %v4576 = vadd.f32 %v4528, %v4568
        %v4577 = vadd.f32 %v4529, %v4569
        %v4578 = vadd.f32 %v4530, %v4570
        %v4579 = vadd.f32 %v4531, %v4571
        %v4580 = vadd.f32 %v4532, %v4572
        %v4581 = vadd.f32 %v4533, %v4573
        %4582 = vset.pattern.permute.xlu0 4
        %4583 = vperm.xlu0 %4582, %v4276
        %v4584 = vpop.permute.xlu0 %4583
        %4586 = vset.pattern.permute.xlu0 4
        %4587 = vperm.xlu0 %4586, %v4291
        %v4588 = vpop.permute.xlu0 %4587
        %4590 = vset.pattern.permute.xlu0 4
        %4591 = vperm.xlu0 %4590, %v4306
        %v4592 = vpop.permute.xlu0 %4591
        %4594 = vset.pattern.permute.xlu0 4
        %4595 = vperm.xlu0 %4594, %v4321
        %v4596 = vpop.permute.xlu0 %4595
        %4598 = vset.pattern.permute.xlu0 4
        %4599 = vperm.xlu0 %4598, %v4336
        %v4600 = vpop.permute.xlu0 %4599
        %4602 = vset.pattern.permute.xlu0 4
        %4603 = vperm.xlu0 %4602, %v4351
        %v4604 = vpop.permute.xlu0 %4603
        %4606 = vset.pattern.permute.xlu0 4
        %4607 = vperm.xlu0 %4606, %v4366
        %v4608 = vpop.permute.xlu0 %4607
        %4610 = vset.pattern.permute.xlu0 4
        %4611 = vperm.xlu0 %4610, %v4381
        %v4612 = vpop.permute.xlu0 %4611
        %v4614 = vmul.f32 %v4584, %v1347
        %v4615 = vmul.f32 %v4588, %v1347
        %v4616 = vmul.f32 %v4592, %v1347
        %v4617 = vmul.f32 %v4596, %v1347
        %v4618 = vmul.f32 %v4600, %v1347
        %v4619 = vmul.f32 %v4604, %v1347
        %v4620 = vmul.f32 %v4608, %v1347
        %v4621 = vmul.f32 %v4612, %v1347
        %v4622 = vadd.f32 %v4574, %v4614
        %v4623 = vadd.f32 %v4575, %v4615
        %v4624 = vadd.f32 %v4576, %v4616
        %v4625 = vadd.f32 %v4577, %v4617
        %v4626 = vadd.f32 %v4578, %v4618
        %v4627 = vadd.f32 %v4579, %v4619
        %v4628 = vadd.f32 %v4580, %v4620
        %v4629 = vadd.f32 %v4581, %v4621
        %4630 = vset.pattern.permute.xlu0 5
        %4631 = vperm.xlu0 %4630, %v4276
        %v4632 = vpop.permute.xlu0 %4631
        %4634 = vset.pattern.permute.xlu0 5
        %4635 = vperm.xlu0 %4634, %v4291
        %v4636 = vpop.permute.xlu0 %4635
        %4638 = vset.pattern.permute.xlu0 5
        %4639 = vperm.xlu0 %4638, %v4306
        %v4640 = vpop.permute.xlu0 %4639
        %4642 = vset.pattern.permute.xlu0 5
        %4643 = vperm.xlu0 %4642, %v4321
        %v4644 = vpop.permute.xlu0 %4643
        %4646 = vset.pattern.permute.xlu0 5
        %4647 = vperm.xlu0 %4646, %v4336
        %v4648 = vpop.permute.xlu0 %4647
        %4650 = vset.pattern.permute.xlu0 5
        %4651 = vperm.xlu0 %4650, %v4351
        %v4652 = vpop.permute.xlu0 %4651
        %4654 = vset.pattern.permute.xlu0 5
        %4655 = vperm.xlu0 %4654, %v4366
        %v4656 = vpop.permute.xlu0 %4655
        %4658 = vset.pattern.permute.xlu0 5
        %4659 = vperm.xlu0 %4658, %v4381
        %v4660 = vpop.permute.xlu0 %4659
        %v4662 = vmul.f32 %v4632, %v1493
        %v4663 = vmul.f32 %v4636, %v1493
        %v4664 = vmul.f32 %v4640, %v1493
        %v4665 = vmul.f32 %v4644, %v1493
        %v4666 = vmul.f32 %v4648, %v1493
        %v4667 = vmul.f32 %v4652, %v1493
        %v4668 = vmul.f32 %v4656, %v1493
        %v4669 = vmul.f32 %v4660, %v1493
        %v4670 = vadd.f32 %v4622, %v4662
        %v4671 = vadd.f32 %v4623, %v4663
        %v4672 = vadd.f32 %v4624, %v4664
        %v4673 = vadd.f32 %v4625, %v4665
        %v4674 = vadd.f32 %v4626, %v4666
        %v4675 = vadd.f32 %v4627, %v4667
        %v4676 = vadd.f32 %v4628, %v4668
        %v4677 = vadd.f32 %v4629, %v4669
        %4678 = vset.pattern.permute.xlu0 6
        %4679 = vperm.xlu0 %4678, %v4276
        %v4680 = vpop.permute.xlu0 %4679
        %4682 = vset.pattern.permute.xlu0 6
        %4683 = vperm.xlu0 %4682, %v4291
        %v4684 = vpop.permute.xlu0 %4683
        %4686 = vset.pattern.permute.xlu0 6
        %4687 = vperm.xlu0 %4686, %v4306
        %v4688 = vpop.permute.xlu0 %4687
        %4690 = vset.pattern.permute.xlu0 6
        %4691 = vperm.xlu0 %4690, %v4321
        %v4692 = vpop.permute.xlu0 %4691
        %4694 = vset.pattern.permute.xlu0 6
        %4695 = vperm.xlu0 %4694, %v4336
        %v4696 = vpop.permute.xlu0 %4695
        %4698 = vset.pattern.permute.xlu0 6
        %4699 = vperm.xlu0 %4698, %v4351
        %v4700 = vpop.permute.xlu0 %4699
        %4702 = vset.pattern.permute.xlu0 6
        %4703 = vperm.xlu0 %4702, %v4366
        %v4704 = vpop.permute.xlu0 %4703
        %4706 = vset.pattern.permute.xlu0 6
        %4707 = vperm.xlu0 %4706, %v4381
        %v4708 = vpop.permute.xlu0 %4707
        %v4710 = vmul.f32 %v4680, %v1639
        %v4711 = vmul.f32 %v4684, %v1639
        %v4712 = vmul.f32 %v4688, %v1639
        %v4713 = vmul.f32 %v4692, %v1639
        %v4714 = vmul.f32 %v4696, %v1639
        %v4715 = vmul.f32 %v4700, %v1639
        %v4716 = vmul.f32 %v4704, %v1639
        %v4717 = vmul.f32 %v4708, %v1639
        %v4718 = vadd.f32 %v4670, %v4710
        %v4719 = vadd.f32 %v4671, %v4711
        %v4720 = vadd.f32 %v4672, %v4712
        %v4721 = vadd.f32 %v4673, %v4713
        %v4722 = vadd.f32 %v4674, %v4714
        %v4723 = vadd.f32 %v4675, %v4715
        %v4724 = vadd.f32 %v4676, %v4716
        %v4725 = vadd.f32 %v4677, %v4717
        %4726 = vset.pattern.permute.xlu0 7
        %4727 = vperm.xlu0 %4726, %v4276
        %v4728 = vpop.permute.xlu0 %4727
        %4730 = vset.pattern.permute.xlu0 7
        %4731 = vperm.xlu0 %4730, %v4291
        %v4732 = vpop.permute.xlu0 %4731
        %4734 = vset.pattern.permute.xlu0 7
        %4735 = vperm.xlu0 %4734, %v4306
        %v4736 = vpop.permute.xlu0 %4735
        %4738 = vset.pattern.permute.xlu0 7
        %4739 = vperm.xlu0 %4738, %v4321
        %v4740 = vpop.permute.xlu0 %4739
        %4742 = vset.pattern.permute.xlu0 7
        %4743 = vperm.xlu0 %4742, %v4336
        %v4744 = vpop.permute.xlu0 %4743
        %4746 = vset.pattern.permute.xlu0 7
        %4747 = vperm.xlu0 %4746, %v4351
        %v4748 = vpop.permute.xlu0 %4747
        %4750 = vset.pattern.permute.xlu0 7
        %4751 = vperm.xlu0 %4750, %v4366
        %v4752 = vpop.permute.xlu0 %4751
        %4754 = vset.pattern.permute.xlu0 7
        %4755 = vperm.xlu0 %4754, %v4381
        %v4756 = vpop.permute.xlu0 %4755
        %v4758 = vmul.f32 %v4728, %v1785
        %v4759 = vmul.f32 %v4732, %v1785
        %v4760 = vmul.f32 %v4736, %v1785
        %v4761 = vmul.f32 %v4740, %v1785
        %v4762 = vmul.f32 %v4744, %v1785
        %v4763 = vmul.f32 %v4748, %v1785
        %v4764 = vmul.f32 %v4752, %v1785
        %v4765 = vmul.f32 %v4756, %v1785
        %v4766 = vadd.f32 %v4718, %v4758
        %v4767 = vadd.f32 %v4719, %v4759
        %v4768 = vadd.f32 %v4720, %v4760
        %v4769 = vadd.f32 %v4721, %v4761
        %v4770 = vadd.f32 %v4722, %v4762
        %v4771 = vadd.f32 %v4723, %v4763
        %v4772 = vadd.f32 %v4724, %v4764
        %v4773 = vadd.f32 %v4725, %v4765
        %v4774 = vld [vmem:[%s3] sm:$0xff]
        %v4775 = vld [vmem:[%s3 + $0x8] sm:$0xff]
        %v4776 = vld [vmem:[%s3 + $0x10] sm:$0xff]
        %v4777 = vld [vmem:[%s3 + $0x18] sm:$0xff]
        %v4778 = vld [vmem:[%s4] sm:$0x1]
        %v4780 = vperm.slane %v4778, 0
        %4782 = vmatpush.msra.mxu0 0.0
        %4783 = vmatpush.msra.mxu0 0.0
        %4784 = vmatpush.msra.mxu0 0.0
        %4785 = vmatpush.msra.mxu0 0.0
        %4786 = vmatpush.msra.mxu0 0.0
        %4787 = vmatpush.msra.mxu0 0.0
        %4788 = vmatpush.msra.mxu0 0.0
        %4789 = vmatpush.msra.mxu0 0.0
        %4790 = vmatpush.msra.mxu0 0.0
        %4791 = vmatpush.msra.mxu0 0.0
        %4792 = vmatpush.msra.mxu0 0.0
        %4793 = vmatpush.msra.mxu0 0.0
        %4794 = vmatpush.msra.mxu0 %v4777
        %4795 = vmatpush.msra.mxu0 %v4776
        %4796 = vmatpush.msra.mxu0 %v4775
        %4797 = vmatpush.msra.mxu0 %v4774
        %4798 = vmatmul.f32.gmra.mxu0 %v540
        %v4799 = vpop.f32.mrf.mxu0
        %v4800 = vadd.f32 %v4780, %v4799
        %4801 = vmatmul.f32.gmra.mxu0 %v543
        %v4802 = vpop.f32.mrf.mxu0
        %v4803 = vadd.f32 %v4780, %v4802
        %4804 = vmatmul.f32.gmra.mxu0 %v546
        %v4805 = vpop.f32.mrf.mxu0
        %v4806 = vadd.f32 %v4780, %v4805
        %4807 = vmatmul.f32.gmra.mxu0 %v549
        %v4808 = vpop.f32.mrf.mxu0
        %v4809 = vadd.f32 %v4780, %v4808
        %4810 = vmatmul.f32.gmra.mxu0 %v552
        %v4811 = vpop.f32.mrf.mxu0
        %v4812 = vadd.f32 %v4780, %v4811
        %4813 = vmatmul.f32.gmra.mxu0 %v555
        %v4814 = vpop.f32.mrf.mxu0
        %v4815 = vadd.f32 %v4780, %v4814
        %4816 = vmatmul.f32.gmra.mxu0 %v558
        %v4817 = vpop.f32.mrf.mxu0
        %v4818 = vadd.f32 %v4780, %v4817
        %4819 = vmatmul.f32.gmra.mxu0 %v561
        %v4820 = vpop.f32.mrf.mxu0
        %v4821 = vadd.f32 %v4780, %v4820
        %4822 = vdwg.mxu0
        %4831 = vrot.lane.b32.xlu0 %v4800, 96
        %v4832 = vpop.permute.xlu0 %4831
        %4833 = vrot.lane.b32.xlu0 %v4803, 96
        %v4834 = vpop.permute.xlu0 %4833
        %4835 = vrot.lane.b32.xlu0 %v4806, 96
        %v4836 = vpop.permute.xlu0 %4835
        %4837 = vrot.lane.b32.xlu0 %v4809, 96
        %v4838 = vpop.permute.xlu0 %4837
        %4839 = vrot.lane.b32.xlu0 %v4812, 96
        %v4840 = vpop.permute.xlu0 %4839
        %4841 = vrot.lane.b32.xlu0 %v4815, 96
        %v4842 = vpop.permute.xlu0 %4841
        %4843 = vrot.lane.b32.xlu0 %v4818, 96
        %v4844 = vpop.permute.xlu0 %4843
        %4845 = vrot.lane.b32.xlu0 %v4821, 96
        %v4846 = vpop.permute.xlu0 %4845
        %v4855 = vadd.f32 %v4766, %v4832
        %v4856 = vadd.f32 %v4767, %v4834
        %v4857 = vadd.f32 %v4768, %v4836
        %v4858 = vadd.f32 %v4769, %v4838
        %v4859 = vadd.f32 %v4770, %v4840
        %v4860 = vadd.f32 %v4771, %v4842
        %v4861 = vadd.f32 %v4772, %v4844
        %v4862 = vadd.f32 %v4773, %v4846
        %v4863 = vld [vmem:[%s11] sm:$0xff]
        %v4864 = vld [vmem:[%s11 + $0x8] sm:$0xff]
        %v4865 = vld [vmem:[%s11 + $0x10] sm:$0xff]
        %v4866 = vld [vmem:[%s11 + $0x18] sm:$0xff]
        %v4867 = vld [vmem:[%s12] sm:$0x1]
        %v4869 = vperm.slane %v4867, 0
        %4879 = vrot.lane.b32.xlu0 %v4855, 32
        %v4880 = vpop.permute.xlu0 %4879
        %4881 = vrot.lane.b32.xlu0 %v4856, 32
        %v4882 = vpop.permute.xlu0 %4881
        %4883 = vrot.lane.b32.xlu0 %v4857, 32
        %v4884 = vpop.permute.xlu0 %4883
        %4885 = vrot.lane.b32.xlu0 %v4858, 32
        %v4886 = vpop.permute.xlu0 %4885
        %4887 = vrot.lane.b32.xlu0 %v4859, 32
        %v4888 = vpop.permute.xlu0 %4887
        %4889 = vrot.lane.b32.xlu0 %v4860, 32
        %v4890 = vpop.permute.xlu0 %4889
        %4891 = vrot.lane.b32.xlu0 %v4861, 32
        %v4892 = vpop.permute.xlu0 %4891
        %4893 = vrot.lane.b32.xlu0 %v4862, 32
        %v4894 = vpop.permute.xlu0 %4893
        %v4895 = vsel %vm538, %v4880, 0
        %v4897 = vsel %vm538, %v4882, 0
        %v4899 = vsel %vm538, %v4884, 0
        %v4901 = vsel %vm538, %v4886, 0
        %v4903 = vsel %vm538, %v4888, 0
        %v4905 = vsel %vm538, %v4890, 0
        %v4907 = vsel %vm538, %v4892, 0
        %v4909 = vsel %vm538, %v4894, 0
        %4911 = vmatpush.msra.mxu0 0.0
        %4912 = vmatpush.msra.mxu0 0.0
        %4913 = vmatpush.msra.mxu0 0.0
        %4914 = vmatpush.msra.mxu0 0.0
        %4915 = vmatpush.msra.mxu0 0.0
        %4916 = vmatpush.msra.mxu0 0.0
        %4917 = vmatpush.msra.mxu0 0.0
        %4918 = vmatpush.msra.mxu0 0.0
        %4919 = vmatpush.msra.mxu0 0.0
        %4920 = vmatpush.msra.mxu0 0.0
        %4921 = vmatpush.msra.mxu0 0.0
        %4922 = vmatpush.msra.mxu0 0.0
        %4923 = vmatpush.msra.mxu0 %v4866
        %4924 = vmatpush.msra.mxu0 %v4865
        %4925 = vmatpush.msra.mxu0 %v4864
        %4926 = vmatpush.msra.mxu0 %v4863
        %4927 = vmatmul.f32.gmra.mxu0 %v4895
        %v4928 = vpop.f32.mrf.mxu0
        %v4929 = vadd.f32 %v4869, %v4928
        %4930 = vmatmul.f32.gmra.mxu0 %v4897
        %v4931 = vpop.f32.mrf.mxu0
        %v4932 = vadd.f32 %v4869, %v4931
        %4933 = vmatmul.f32.gmra.mxu0 %v4899
        %v4934 = vpop.f32.mrf.mxu0
        %v4935 = vadd.f32 %v4869, %v4934
        %4936 = vmatmul.f32.gmra.mxu0 %v4901
        %v4937 = vpop.f32.mrf.mxu0
        %v4938 = vadd.f32 %v4869, %v4937
        %4939 = vmatmul.f32.gmra.mxu0 %v4903
        %v4940 = vpop.f32.mrf.mxu0
        %v4941 = vadd.f32 %v4869, %v4940
        %4942 = vmatmul.f32.gmra.mxu0 %v4905
        %v4943 = vpop.f32.mrf.mxu0
        %v4944 = vadd.f32 %v4869, %v4943
        %4945 = vmatmul.f32.gmra.mxu0 %v4907
        %v4946 = vpop.f32.mrf.mxu0
        %v4947 = vadd.f32 %v4869, %v4946
        %4948 = vmatmul.f32.gmra.mxu0 %v4909
        %v4949 = vpop.f32.mrf.mxu0
        %v4950 = vadd.f32 %v4869, %v4949
        %4951 = vdwg.mxu0
        %4952 = vst [vmem:[%s434] sm:$0xff] %v4929
        %4953 = vst [vmem:[%s434 + $0x8] sm:$0xff] %v4932
        %4954 = vst [vmem:[%s434 + $0x10] sm:$0xff] %v4935
        %4955 = vst [vmem:[%s434 + $0x18] sm:$0xff] %v4938
        %4956 = vst [vmem:[%s434 + $0x20] sm:$0xff] %v4941
        %4957 = vst [vmem:[%s434 + $0x28] sm:$0xff] %v4944
        %4958 = vst [vmem:[%s434 + $0x30] sm:$0xff] %v4947
        %4959 = vst [vmem:[%s434 + $0x38] sm:$0xff] %v4950
        %s4960 = sand.u32 %s313, 1
        %s4961 = scalar_lea.sflag [#allocation3], %s4960
        %s4962 = sand.u32 %s313, 1
        %s4963 = smul.addr %s4962, 64
        %s4964 = scalar_lea.vmem [#allocation2], %s4963
        // Predicated region
        $region73: #{tpu_custom_call.1} parent=71 // pred_check
          %p4965 = pneg %p323
        $region74: #{tpu_custom_call.1} parent=71 // pred_check_branch
          %4967 = sbr.rel (%p4965) target = $region76
        $region75: #{tpu_custom_call.1} parent=71 // pred_region
          %s4968 = smul.u32 8, %s27
          %4970 = vsyncadd %s4961, 0
          %s4971 = smul.addr %s4968, 8
          %s4972 = scalar_lea.hbm %s13, %s4971
          %s4973 = sshll.u32 %s4964, 4
          %s4974 = int_to_ptr.vmem [resolvable:$true] %s4973
          %s4975 = sshll.u32 %s4972, 4
          %s4976 = int_to_ptr.hbm [resolvable:$true] %s4975
          %4981 = dma.vmem_to_hbm [thread:$0]  %s4974, 1024, %s4976, %s4961, 128, 128, 8
        $region76: #{tpu_custom_call.1} parent=71 // pred_fallthru
          _
      $region72: #{tpu_custom_call.1} parent=5 // pred_fallthru
        _
      %p4982 = scmp.le.s32.totalorder 2, %s22
      // Predicated region
      $region77: #{tpu_custom_call.1} parent=5 // pred_check
        %p4983 = pneg %p4982
      $region78: #{tpu_custom_call.1} parent=5 // pred_check_branch
        %4985 = sbr.rel (%p4983) target = $region80
      $region79: #{tpu_custom_call.1} parent=5 // pred_region
        %s4986 = ssub.s32 %s22, 2
        // Predicated region
        $region81: #{tpu_custom_call.1} parent=79 // pred_check
          %p4987 = pneg %p329
        $region82: #{tpu_custom_call.1} parent=79 // pred_check_branch
          %4989 = sbr.rel (%p4987) target = $region84
        $region83: #{tpu_custom_call.1} parent=79 // pred_region
          %s4990 = sand.u32 %s314, 1
          %s4991 = scalar_lea.sflag [#allocation3], %s4990
          %s4992 = sand.u32 %s314, 1
          %s4993 = smul.addr %s4992, 64
          %s4994 = scalar_lea.vmem [#allocation2], %s4993
          %4996 = dma.done %s4991, 1024
        $region84: #{tpu_custom_call.1} parent=79 // pred_fallthru
          _
      $region80: #{tpu_custom_call.1} parent=5 // pred_fallthru
        _
    $region6: #{tpu_custom_call.1} parent=1 // loop_footer
      %s26 = sadd.s32 1, %s22
    $region7: #{tpu_custom_call.1} parent=1 // loop_footer_branch
      %21 = sbr.rel target = $region3
    $region8: #{tpu_custom_call.1} parent=1 // loop_exit
      _
    %4997 = vsyncpa [#allocation3], 1
    %s4998 = scalar_lea.sflag [#allocation3], 1
    %4999 = vsyncpa %s4998, 1

</llo_original>
